<compile_context>
chip_gen: v5e
topology: v5e:2x2
jax: 0.10.0
libtpu: 0.0.40
codegen_flags: <defaults>
</compile_context>

<pallas_src>
import functools
import numpy as np

import jax
import jax.numpy as jnp
from jax.experimental import pallas as pl
from jax.experimental.pallas import tpu as pltpu

# ---------------- scaled-down dims ----------------
C0, C1, C2, C3, C4 = 16, 32, 64, 128, 256
MID1, MID2, MID3, MID4 = 8, 16, 32, 64
NUM_CLASSES = 81
NUM_CLASSES_PAD = 128          # lane-dense reg head; padded cols masked in the CE
EMBED_DIM = 128
MASK_DIMS = 32
FINAL_DIM = 128

# Explicit VMEM budget: blocks here are <=~2 MiB, safe on v5e/v6e (128 MiB) and
# v7x (64 MiB physical / 32 MiB default scoped).
VMEM_LIMIT = 32 * 1024 * 1024


def _cparams(*sem):
    return pltpu.CompilerParams(dimension_semantics=sem,
                                vmem_limit_bytes=VMEM_LIMIT)


# ======================= tiling helpers =======================

def _pick_tm(m):
    """Split M into two 16-aligned blocks: both v7x TensorCores get work, and on
    single-TC v5e/v6e the blocks stay large (one extra ~0.35us grid step only).
    Ragged tails are handled by Pallas block masking."""
    if m < 32:
        return m
    half = (m + 1) // 2
    return min(((half + 15) // 16) * 16, 4096)


def _pick_cell_block(bc):
    """Batch CVM cells into (at most) two grid steps: bblk = BC/2 when it divides,
    largest divisor otherwise."""
    if bc < 2:
        return max(bc, 1)
    for d in range(bc // 2, 0, -1):
        if bc % d == 0:
            return d
    return 1


# ======================= Pallas kernels =======================

def _matmul_kernel(x_ref, w_ref, b_ref, *rest, relu_cols, has_residual):
    # bf16 operands -> MXU fast path; f32 accumulation; bias/residual/ReLU epilogue.
    if has_residual:
        r_ref, o_ref = rest
    else:
        (o_ref,) = rest
    acc = jnp.dot(x_ref[...], w_ref[...], preferred_element_type=jnp.float32)
    acc = acc + b_ref[...]
    if has_residual:
        acc = acc + r_ref[...].astype(jnp.float32)
    if relu_cols:
        n = acc.shape[-1]
        if relu_cols >= n:
            acc = jnp.maximum(acc, 0.0)
        else:
            # partial ReLU (fused c1|ds conv: ReLU only on the c1 columns)
            col = jax.lax.broadcasted_iota(jnp.int32, acc.shape, 1)
            acc = jnp.where(col < relu_cols, jnp.maximum(acc, 0.0), acc)
    o_ref[...] = acc.astype(o_ref.dtype)


def pallas_matmul(x, w, b=None, relu=False, relu_cols=None, residual=None,
                  out_dtype=jnp.float32):
    """x:(M,K) @ w:(K,N) + b [+ residual], optional (partial) ReLU, out in
    `out_dtype` (bf16 for backbone activations, f32 for heads)."""
    M, K = x.shape
    _, N = w.shape
    x = x.astype(jnp.bfloat16)
    w = w.astype(jnp.bfloat16)
    if b is None:
        b = jnp.zeros((N,), jnp.float32)
    b2 = b.reshape(1, N).astype(jnp.float32)
    if relu:
        relu_cols = N
    tm = _pick_tm(M)
    in_specs = [pl.BlockSpec((tm, K), lambda i: (i, 0)),
                pl.BlockSpec((K, N), lambda i: (0, 0)),
                pl.BlockSpec((1, N), lambda i: (0, 0))]
    args = [x, w, b2]
    if residual is not None:
        in_specs.append(pl.BlockSpec((tm, N), lambda i: (i, 0)))
        args.append(residual)
    return pl.pallas_call(
        functools.partial(_matmul_kernel, relu_cols=relu_cols,
                          has_residual=residual is not None),
        out_shape=jax.ShapeDtypeStruct((M, N), out_dtype),
        grid=(pl.cdiv(M, tm),),
        in_specs=in_specs,
        out_specs=pl.BlockSpec((tm, N), lambda i: (i, 0)),
        compiler_params=_cparams("parallel"),
    )(*args)


def _cvm_attn_kernel(theta_ref, phi_ref, g_ref, cells_ref, ww_ref, wb_ref, o_ref):
    # One grid step processes `bblk` cells, fully batched (no per-cell unroll).
    #   theta:(bblk,HW,CI) phi/g:(bblk,HWP,CI) bf16, cells:(bblk,HW,C) bf16,
    #   ww:(CI,C) bf16, wb:(1,C) f32  ->  o:(bblk,HW,C)
    bblk, hw, ci = theta_ref.shape
    c = cells_ref.shape[-1]
    # theta @ phi^T contracting the channel (lane) dim: no transposed phi in HBM.
    f = jnp.einsum('bqc,bkc->bqk', theta_ref[...], phi_ref[...],
                   preferred_element_type=jnp.float32)
    m = jnp.max(f, axis=-1, keepdims=True)
    e = jnp.exp(f - m)
    s = jnp.sum(e, axis=-1, keepdims=True)
    attn = (e / s).astype(jnp.bfloat16)            # exact softmax (no approx recip)
    y = jnp.einsum('bqk,bkc->bqc', attn, g_ref[...],
                   preferred_element_type=jnp.float32)            # (bblk, HW, CI)
    # W projection (zero-initialised, still executed) + bias + residual, fused.
    # Batched against a VMEM-broadcast weight to avoid an in-kernel sublane-
    # collapsing reshape of y.
    wwb = jnp.broadcast_to(ww_ref[...][None], (bblk, ci, c))
    wy = jnp.einsum('bqc,bcd->bqd', y.astype(jnp.bfloat16), wwb,
                    preferred_element_type=jnp.float32)           # (bblk, HW, C)
    o_ref[...] = (wy + wb_ref[...] + cells_ref[...].astype(jnp.float32)
                  ).astype(o_ref.dtype)


def pallas_cvm_attention(theta, phi, g, cells, w_w, w_b, out_dtype):
    BC, HW, CI = theta.shape
    HWP = phi.shape[1]
    C = cells.shape[-1]
    bblk = _pick_cell_block(BC)
    wb2 = w_b.reshape(1, C).astype(jnp.float32)
    return pl.pallas_call(
        _cvm_attn_kernel,
        out_shape=jax.ShapeDtypeStruct((BC, HW, C), out_dtype),
        grid=(BC // bblk,),
        in_specs=[pl.BlockSpec((bblk, HW, CI), lambda i: (i, 0, 0)),
                  pl.BlockSpec((bblk, HWP, CI), lambda i: (i, 0, 0)),
                  pl.BlockSpec((bblk, HWP, CI), lambda i: (i, 0, 0)),
                  pl.BlockSpec((bblk, HW, C), lambda i: (i, 0, 0)),
                  pl.BlockSpec((CI, C), lambda i: (0, 0)),
                  pl.BlockSpec((1, C), lambda i: (0, 0))],
        out_specs=pl.BlockSpec((bblk, HW, C), lambda i: (i, 0, 0)),
        compiler_params=_cparams("parallel"),
    )(theta.astype(jnp.bfloat16), phi.astype(jnp.bfloat16), g.astype(jnp.bfloat16),
      cells.astype(jnp.bfloat16), w_w.astype(jnp.bfloat16), wb2)


def _tail_kernel(roi_ref, mask_ref, regw_ref, regb_ref, onehot_ref, embed_ref,
                 dw1_ref, dw2_ref, db_ref,
                 pooled_ref, logits_ref, loss_ref, feats_ref, *, num_classes):
    # Fused tail: mask add + AvgPool2d(7)+Flatten + reg head + CE + obj_downsample.
    # mask is pre-padded to C4, so the add is a plain full-lane-width add.
    pooled = jnp.mean(roi_ref[...] + mask_ref[...], axis=1)                 # (R, C4)
    pooled_ref[...] = pooled
    # regularizing_predictor: 128-wide padded head (lane dense store).
    logits = jnp.dot(pooled, regw_ref[...],
                     preferred_element_type=jnp.float32) + regb_ref[...]    # (R, 128)
    logits_ref[...] = logits
    # cross entropy (mean) over the real `num_classes` columns only.
    col = jax.lax.broadcasted_iota(jnp.int32, logits.shape, 1)
    masked = jnp.where(col < num_classes, logits, -1e30)
    m = jnp.max(masked, axis=-1, keepdims=True)
    lse = jnp.log(jnp.sum(jnp.exp(masked - m), axis=-1, keepdims=True)) + m
    picked = jnp.sum(onehot_ref[...] * logits, axis=-1, keepdims=True)
    loss_ref[...] = jnp.mean(lse - picked, keepdims=True)                   # (1, 1)
    # obj_downsample: Linear(C4+EMBED -> FINAL)+ReLU, concat avoided by weight split.
    feats = (jnp.dot(pooled, dw1_ref[...], preferred_element_type=jnp.float32)
             + jnp.dot(embed_ref[...], dw2_ref[...], preferred_element_type=jnp.float32)
             + db_ref[...])
    feats_ref[...] = jnp.maximum(feats, 0.0)


def pallas_tail(roi, mask_padded, reg_w, reg_b, onehot, obj_embed, down_w, down_b):
    R, P, C = roi.shape
    regw_p = jnp.pad(reg_w, ((0, 0), (0, NUM_CLASSES_PAD - reg_w.shape[1])))
    regb_p = jnp.pad(reg_b, (0, NUM_CLASSES_PAD - reg_b.shape[0])).reshape(1, -1)
    dw1, dw2 = down_w[:C], down_w[C:]
    db2 = down_b.reshape(1, -1)
    pooled, logits, loss, feats = pl.pallas_call(
        functools.partial(_tail_kernel, num_classes=NUM_CLASSES),
        out_shape=(jax.ShapeDtypeStruct((R, C), jnp.float32),
                   jax.ShapeDtypeStruct((R, NUM_CLASSES_PAD), jnp.float32),
                   jax.ShapeDtypeStruct((1, 1), jnp.float32),
                   jax.ShapeDtypeStruct((R, FINAL_DIM), jnp.float32)),
        grid=(1,),
        in_specs=[pl.BlockSpec((R, P, C), lambda i: (0, 0, 0)),
                  pl.BlockSpec((R, P, C), lambda i: (0, 0, 0)),
                  pl.BlockSpec((C, NUM_CLASSES_PAD), lambda i: (0, 0)),
                  pl.BlockSpec((1, NUM_CLASSES_PAD), lambda i: (0, 0)),
                  pl.BlockSpec((R, NUM_CLASSES_PAD), lambda i: (0, 0)),
                  pl.BlockSpec((R, EMBED_DIM), lambda i: (0, 0)),
                  pl.BlockSpec((C, FINAL_DIM), lambda i: (0, 0)),
                  pl.BlockSpec((EMBED_DIM, FINAL_DIM), lambda i: (0, 0)),
                  pl.BlockSpec((1, FINAL_DIM), lambda i: (0, 0))],
        out_specs=(pl.BlockSpec((R, C), lambda i: (0, 0)),
                   pl.BlockSpec((R, NUM_CLASSES_PAD), lambda i: (0, 0)),
                   pl.BlockSpec((1, 1), lambda i: (0, 0)),
                   pl.BlockSpec((R, FINAL_DIM), lambda i: (0, 0))),
        compiler_params=_cparams("arbitrary"),
    )(roi.astype(jnp.float32), mask_padded.astype(jnp.float32),
      regw_p.astype(jnp.float32), regb_p.astype(jnp.float32),
      onehot.astype(jnp.float32), obj_embed.astype(jnp.float32),
      dw1.astype(jnp.float32), dw2.astype(jnp.float32), db2.astype(jnp.float32))
    return pooled, logits[:, :NUM_CLASSES], loss.reshape(1), feats


# ======================= JAX glue =======================

def _im2col(x, k, stride, pad):
    N, H, W, C = x.shape
    xp = jnp.pad(x, ((0, 0), (pad, pad), (pad, pad), (0, 0)))
    Ho = (H + 2 * pad - k) // stride + 1
    Wo = (W + 2 * pad - k) // stride + 1
    cols = []
    for i in range(k):
        for j in range(k):
            cols.append(xp[:, i:i + stride * Ho:stride, j:j + stride * Wo:stride, :])
    return jnp.concatenate(cols, axis=-1), Ho, Wo


def conv2d_nhwc(x, w, b, k, stride, pad, relu=False, relu_cols=None,
                residual=None, out_dtype=jnp.bfloat16):
    """Square-kernel conv via im2col + Pallas matmul.  w:(k*k*Cin, Cout)."""
    xb = x.astype(jnp.bfloat16)          # bf16 before im2col: halve HBM traffic
    if k == 1 and stride == 1 and pad == 0:
        cols, Ho, Wo = xb, x.shape[1], x.shape[2]
    else:
        cols, Ho, Wo = _im2col(xb, k, stride, pad)
    N = x.shape[0]
    res_flat = None if residual is None else residual.reshape(-1, residual.shape[-1])
    out = pallas_matmul(cols.reshape(N * Ho * Wo, -1), w, b, relu=relu,
                        relu_cols=relu_cols, residual=res_flat, out_dtype=out_dtype)
    return out.reshape(N, Ho, Wo, -1)


def maxpool_nhwc(x, k, stride, pad):
    init = jnp.array(-jnp.inf, dtype=x.dtype)
    return jax.lax.reduce_window(
        x, init, jax.lax.max,
        window_dimensions=(1, k, k, 1),
        window_strides=(1, stride, stride, 1),
        padding=((0, 0), (pad, pad), (pad, pad), (0, 0)))


def maxpool2x2_nhwc(x):
    b, h, w, c = x.shape
    return x.reshape(b, h // 2, 2, w // 2, 2, c).max(axis=(2, 4))


def bottleneck(x, p, stride):
    # 1x1(stride)+ReLU -> 3x3(s=1)+ReLU -> 1x1 (+residual, ReLU fused in epilogue),
    # plus 1x1(stride) downsample; frozen eval-mode BNs folded.  c1 and ds read the
    # same x, so they are fused into ONE matmul (ReLU only on the c1 columns).
    cmid = p['c1_w'].shape[1]
    w01 = jnp.concatenate([p['c1_w'], p['ds_w']], axis=1)
    b01 = jnp.concatenate([p['c1_b'], p['ds_b']], axis=0)
    fused = conv2d_nhwc(x, w01, b01, 1, stride, 0, relu_cols=cmid,
                        out_dtype=jnp.bfloat16)
    h = conv2d_nhwc(fused[..., :cmid], p['c2_w'], p['c2_b'], 3, 1, 1, relu=True,
                    out_dtype=jnp.bfloat16)
    # residual add + final ReLU fused into the c3 matmul epilogue (no XLA pass).
    return conv2d_nhwc(h, p['c3_w'], p['c3_b'], 1, 1, 0, relu=True,
                       residual=fused[..., cmid:], out_dtype=jnp.bfloat16)


def cvm(cells, p, out_dtype):
    """_Context_voted_module (dimension=2, sub_sample=True, bn_layer=False)."""
    BC, h, w, C = cells.shape
    ci = p['theta_w'].shape[1]
    flat = cells.reshape(BC * h * w, C)
    # theta / phi / g projections fused into ONE matmul (lane-dense 3*ci, bf16 out).
    proj_w = jnp.concatenate([p['theta_w'], p['phi_w'], p['g_w']], axis=1)
    proj_b = jnp.concatenate([p['theta_b'], p['phi_b'], p['g_b']], axis=0)
    proj = pallas_matmul(flat, proj_w, proj_b,
                         out_dtype=jnp.bfloat16).reshape(BC, h, w, 3 * ci)
    hwp = (h // 2) * (w // 2)
    theta = proj[..., :ci].reshape(BC, h * w, ci)
    phi = maxpool2x2_nhwc(proj[..., ci:2 * ci]).reshape(BC, hwp, ci)
    g = maxpool2x2_nhwc(proj[..., 2 * ci:]).reshape(BC, hwp, ci)
    # attention + W (zero-init 1x1 conv, still executed) + residual, one kernel.
    z = pallas_cvm_attention(theta, phi, g, cells.reshape(BC, h * w, C),
                             p['W_w'], p['W_b'], out_dtype)
    return z.reshape(BC, h, w, C)


def region_cvm(x, p, grid, out_dtype=jnp.bfloat16):
    """RegionCVM: chunk spatially into grid cells, apply CVM per cell, re-stitch."""
    B, H, W, C = x.shape
    ch = -(-H // grid[0])
    cw = -(-W // grid[1])
    nh, nw = H // ch, W // cw
    assert nh * ch == H and nw * cw == W  # uniform cells in this configuration
    cells = (x.reshape(B, nh, ch, nw, cw, C)
              .transpose(0, 1, 3, 2, 4, 5)
              .reshape(B * nh * nw, ch, cw, C))
    out = cvm(cells, p, out_dtype)
    return (out.reshape(B, nh, nw, ch, cw, C)
               .transpose(0, 1, 3, 2, 4, 5)
               .reshape(B, H, W, C))


def roi_align_nhwc(feat, rois, out_size=7, scale=1.0 / 16):
    # TODO(synk): RoIAlign(sampling_ratio=0) adaptive multi-sample averaging is
    # approximated with a single bilinear sample at each bin center (aligned=False).
    B, H, W, C = feat.shape
    R = rois.shape[0]
    bidx = rois[:, 0].astype(jnp.int32)
    x1, y1 = rois[:, 1] * scale, rois[:, 2] * scale
    x2, y2 = rois[:, 3] * scale, rois[:, 4] * scale
    rw = jnp.maximum(x2 - x1, 1.0)
    rh = jnp.maximum(y2 - y1, 1.0)
    bw, bh = rw / out_size, rh / out_size
    ctr = jnp.arange(out_size, dtype=jnp.float32) + 0.5
    sx = x1[:, None] + ctr[None, :] * bw[:, None]
    sy = y1[:, None] + ctr[None, :] * bh[:, None]
    SX = jnp.clip(jnp.broadcast_to(sx[:, None, :], (R, out_size, out_size)), 0.0, W - 1.0)
    SY = jnp.clip(jnp.broadcast_to(sy[:, :, None], (R, out_size, out_size)), 0.0, H - 1.0)
    x0 = jnp.floor(SX).astype(jnp.int32)
    y0 = jnp.floor(SY).astype(jnp.int32)
    x1i = jnp.minimum(x0 + 1, W - 1)
    y1i = jnp.minimum(y0 + 1, H - 1)
    wx = (SX - x0.astype(jnp.float32))[..., None]
    wy = (SY - y0.astype(jnp.float32))[..., None]
    b = bidx[:, None, None]
    v00, v01 = feat[b, y0, x0], feat[b, y0, x1i]
    v10, v11 = feat[b, y1i, x0], feat[b, y1i, x1i]
    return (1 - wy) * ((1 - wx) * v00 + wx * v01) + wy * ((1 - wx) * v10 + wx * v11)


def pad_sequence_jax(seq, lengths):
    out = jnp.zeros((len(lengths), max(lengths)) + seq.shape[1:], seq.dtype)
    start = 0
    for i, d in enumerate(lengths):
        if d > 0:
            out = out.at[i, :d].set(seq[start:start + d])
        start += d
    return out


# ======================= parameters =======================

def init_params(key):
    cnt = [0]

    def nk():
        cnt[0] += 1
        return jax.random.fold_in(key, cnt[0])

    def he(shape):
        return jax.random.normal(nk(), shape, jnp.float32) * np.sqrt(2.0 / shape[0])

    def zeros(n):
        return jnp.zeros((n,), jnp.float32)

    def bneck(cin, cmid, cout):
        return {'c1_w': he((cin, cmid)), 'c1_b': zeros(cmid),
                'c2_w': he((9 * cmid, cmid)), 'c2_b': zeros(cmid),
                'c3_w': he((cmid, cout)), 'c3_b': zeros(cout),
                'ds_w': he((cin, cout)), 'ds_b': zeros(cout)}

    def cvm_p(c):
        ci = c // 2
        return {'theta_w': he((c, ci)), 'theta_b': zeros(ci),
                'phi_w': he((c, ci)), 'phi_b': zeros(ci),
                'g_w': he((c, ci)), 'g_b': zeros(ci),
                # W initialised to zero, faithful to nn.init.constant_(W, 0)
                'W_w': jnp.zeros((ci, c), jnp.float32), 'W_b': zeros(c)}

    return {
        'conv1_w': he((7 * 7 * 3, C0)), 'conv1_b': zeros(C0),
        'layer1': bneck(C0, MID1, C1),
        'layer2': bneck(C1, MID2, C2),
        'layer3': bneck(C2, MID3, C3),
        'layer4': bneck(C3, MID4, C4),
        'cvm2': cvm_p(C2), 'cvm3': cvm_p(C3), 'cvm4': cvm_p(C4),
        'mask_w': he((9, MASK_DIMS)), 'mask_b': zeros(MASK_DIMS),
        'embed': jax.random.normal(nk(), (NUM_CLASSES, EMBED_DIM), jnp.float32),
        'reg_w': he((C4, NUM_CLASSES)), 'reg_b': zeros(NUM_CLASSES),
        'down_w': he((C4 + EMBED_DIM, FINAL_DIM)), 'down_b': zeros(FINAL_DIM),
    }


# ======================= forward =======================

def simple_detector_forward(params, images, boxes, box_mask, classes, segms):
    # -------- host-side, data-dependent ROI bookkeeping done UP-FRONT so no
    # device->host sync lands in the middle of the device pipeline --------
    box_mask_np = np.asarray(jax.device_get(box_mask))
    b_np, o_np = np.nonzero(box_mask_np)
    R = int(b_np.shape[0])
    assert R > 0
    lengths = [int(v) for v in box_mask_np.sum(axis=1)]
    b_idx = jnp.asarray(b_np, jnp.int32)
    o_idx = jnp.asarray(o_np, jnp.int32)

    x = jnp.transpose(images, (0, 2, 3, 1)).astype(jnp.float32)      # NCHW -> NHWC

    # pre_backbone: conv1 (+folded bn1) + relu + maxpool + layer1
    x = conv2d_nhwc(x, params['conv1_w'], params['conv1_b'], 7, 2, 3, relu=True)
    x = maxpool_nhwc(x, 3, 2, 1)
    x = bottleneck(x, params['layer1'], stride=1)
    # layer2 / cvm_2 (grid 6x6), layer3 / cvm_3 (grid 4x4), layer4 / cvm_4 (grid 1x1)
    x = bottleneck(x, params['layer2'], stride=2)
    x = region_cvm(x, params['cvm2'], (6, 6))
    x = bottleneck(x, params['layer3'], stride=2)
    x = region_cvm(x, params['cvm3'], (4, 4))
    x = bottleneck(x, params['layer4'], stride=1)
    img_feats = region_cvm(x, params['cvm4'], (1, 1),
                           out_dtype=jnp.float32)                    # (B, Hf, Wf, C4)

    rois = jnp.concatenate(
        [b_idx[:, None].astype(boxes.dtype), boxes[b_idx, o_idx]], axis=1)
    roi_res = roi_align_nhwc(img_feats, rois, out_size=7, scale=1.0 / 16)  # (R,7,7,C4)

    # mask_upsample: Conv2d(1, 32, k=3, s=2, p=1) on (segms - 0.5); zero-padded to
    # C4 so the add (fused into the tail kernel) is full lane width.
    segms_indexed = segms[b_idx, o_idx][..., None] - 0.5                   # (R,14,14,1)
    mask_feat = conv2d_nhwc(segms_indexed, params['mask_w'], params['mask_b'],
                            3, 2, 1, out_dtype=jnp.float32)                # (R,7,7,32)
    mask_padded = jnp.pad(mask_feat, ((0, 0), (0, 0), (0, 0), (0, C4 - MASK_DIMS)))

    obj_labels = classes[b_idx, o_idx].astype(jnp.int32)
    onehot = jax.nn.one_hot(obj_labels, NUM_CLASSES_PAD, dtype=jnp.float32)
    obj_embed = params['embed'][obj_labels]                                # (R, 128)

    # fused tail: avgpool+flatten, reg head, cross-entropy, obj_downsample.
    # TODO(synk): Dropout(p=0.1) treated as eval-mode identity.
    post_roialign, obj_logits, cnn_regularization, roi_aligned_feats = pallas_tail(
        roi_res.reshape(R, 49, C4), mask_padded.reshape(R, 49, C4),
        params['reg_w'], params['reg_b'], onehot, obj_embed,
        params['down_w'], params['down_b'])

    obj_reps = pad_sequence_jax(roi_aligned_feats, lengths)

    return {'obj_reps_raw': post_roialign,
            'obj_reps': obj_reps,
            'obj_logits': obj_logits,
            'obj_labels': obj_labels,
            'cnn_regularization_loss': cnn_regularization}


# ======================= main =======================

if __name__ == "__main__":
    key = jax.random.PRNGKey(0)
    params = init_params(key)

    kimg, kbox, kcls, ksgm = jax.random.split(jax.random.fold_in(key, 999), 4)
    B, MAX_OBJ = 2, 4
    images = jax.random.normal(kimg, (B, 3, 96, 96), jnp.float32)
    box_mask = jnp.array([[1, 1, 1, 0], [1, 1, 0, 0]], jnp.int32)
    kb1, kb2, kb3, kb4 = jax.random.split(kbox, 4)
    x1 = jax.random.uniform(kb1, (B, MAX_OBJ), minval=0.0, maxval=48.0)
    y1 = jax.random.uniform(kb2, (B, MAX_OBJ), minval=0.0, maxval=48.0)
    bw = jax.random.uniform(kb3, (B, MAX_OBJ), minval=16.0, maxval=44.0)
    bh = jax.random.uniform(kb4, (B, MAX_OBJ), minval=16.0, maxval=44.0)
    boxes = jnp.stack([x1, y1, jnp.minimum(x1 + bw, 95.0), jnp.minimum(y1 + bh, 95.0)], -1)
    classes = jax.random.randint(kcls, (B, MAX_OBJ), 0, NUM_CLASSES)
    segms = jax.random.uniform(ksgm, (B, MAX_OBJ, 14, 14), jnp.float32)

    out = simple_detector_forward(params, images, boxes, box_mask, classes, segms)
    jax.block_until_ready(out)
    assert out['obj_reps'].shape == (B, 3, FINAL_DIM)
    assert out['obj_logits'].shape == (5, NUM_CLASSES)
    assert out['cnn_regularization_loss'].shape == (1,)
    print("KERNEL_OK")
</pallas_src>

<mosaic_0001>
module attributes {stable_mosaic.version = 11 : i64} {
  func.func @_matmul_kernel(%arg0: i32, %arg1: memref<2304x147xbf16, #tpu.memory_space<vmem>>, %arg2: memref<147x16xbf16, #tpu.memory_space<vmem>>, %arg3: memref<1x16xf32, #tpu.memory_space<vmem>>, %arg4: memref<2304x16xbf16, #tpu.memory_space<vmem>>) attributes {dimension_semantics = [#tpu.dimension_semantics<parallel>], iteration_bounds = array<i64: 2>, scalar_prefetch = 0 : i64, scratch_operands = 0 : i64, tpu.core_type = #tpu.core_type<tc>, window_params = [{transform_indices = @transform_0, window_bounds = array<i64: 2304, 147>}, {pipeline_mode = #tpu.pipeline_mode<synchronous>, transform_indices = @transform_1, window_bounds = array<i64: 147, 16>}, {pipeline_mode = #tpu.pipeline_mode<synchronous>, transform_indices = @transform_2, window_bounds = array<i64: 1, 16>}, {transform_indices = @transform_3, window_bounds = array<i64: 2304, 16>}]} {
    %c0 = arith.constant 0 : index
    %c0_0 = arith.constant 0 : index
    %0 = vector.load %arg1[%c0, %c0_0] : memref<2304x147xbf16, #tpu.memory_space<vmem>>, vector<2304x147xbf16>
    %c0_1 = arith.constant 0 : index
    %c0_2 = arith.constant 0 : index
    %1 = vector.load %arg2[%c0_1, %c0_2] : memref<147x16xbf16, #tpu.memory_space<vmem>>, vector<147x16xbf16>
    %cst = arith.constant dense<0.000000e+00> : vector<2304x16xf32>
    %2 = tpu.matmul %0, %1, %cst {dimension_numbers = #tpu.dot_dimension_numbers<[1], [0], [0], [1], [0, 0, 1, 1], [], []>} : vector<2304x147xbf16>, vector<147x16xbf16>, vector<2304x16xf32> -> vector<2304x16xf32>
    %c0_3 = arith.constant 0 : index
    %c0_4 = arith.constant 0 : index
    %3 = vector.load %arg3[%c0_3, %c0_4] : memref<1x16xf32, #tpu.memory_space<vmem>>, vector<1x16xf32>
    %4 = vector.broadcast %3 : vector<1x16xf32> to vector<2304x16xf32>
    %5 = arith.addf %2, %4 : vector<2304x16xf32>
    %cst_5 = arith.constant 0.000000e+00 : f32
    %6 = vector.broadcast %cst_5 : f32 to vector<2304x16xf32>
    %7 = arith.maximumf %5, %6 : vector<2304x16xf32>
    %8 = arith.truncf %7 : vector<2304x16xf32> to vector<2304x16xbf16>
    %c0_6 = arith.constant 0 : index
    %c0_7 = arith.constant 0 : index
    %9 = vector.load %arg4[%c0_6, %c0_7] : memref<2304x16xbf16, #tpu.memory_space<vmem>>, vector<2304x16xbf16>
    tpu.vector_store %arg4[%c0_6, %c0_7], %8 {strides = array<i32>} : memref<2304x16xbf16, #tpu.memory_space<vmem>>, vector<2304x16xbf16>,
    return
  }
  func.func @transform_0(%arg0: i32) -> (i32, i32) {
    %c0_i32 = arith.constant 0 : i32
    %c0_i32_0 = arith.constant 0 : i32
    return %arg0, %c0_i32 : i32, i32
  }
  func.func @transform_1(%arg0: i32) -> (i32, i32) {
    %c0_i32 = arith.constant 0 : i32
    %c0_i32_0 = arith.constant 0 : i32
    %c0_i32_1 = arith.constant 0 : i32
    return %c0_i32, %c0_i32_0 : i32, i32
  }
  func.func @transform_2(%arg0: i32) -> (i32, i32) {
    %c0_i32 = arith.constant 0 : i32
    %c0_i32_0 = arith.constant 0 : i32
    %c0_i32_1 = arith.constant 0 : i32
    return %c0_i32, %c0_i32_0 : i32, i32
  }
  func.func @transform_3(%arg0: i32) -> (i32, i32) {
    %c0_i32 = arith.constant 0 : i32
    %c0_i32_0 = arith.constant 0 : i32
    return %arg0, %c0_i32 : i32, i32
  }
}

</mosaic_0001>

<llo_original>
// kernel: tpu_custom_call.1
$region0: #{tpu_custom_call.1}
  #allocation0 [shape = 'u32[]', space=smem, size = 0x4, offset = 0x4, fixed_abs, tag = 'smem constant byte address 0x4 - core index']
  #allocation1 [shape = 'u32[72,128]{1,0:T(1,128)}', space=vmem, size = 0x9000, scoped, tag = 'internal scratch']
  %s0 = inlined_call_operand.vmem [shape: bf16[4608,147], index: 0, kind: input, shape index: {}]
  %s1 = inlined_call_operand.vmem [shape: bf16[147,16], index: 1, kind: input, shape index: {}]
  %s2 = inlined_call_operand.vmem [shape: f32[1,16], index: 2, kind: input, shape index: {}]
  %s3 = inlined_call_operand.vmem [shape: bf16[4608,16], index: 3, kind: output, shape index: {}]
  %s4 = sld [smem:[#allocation0]]
  $region45: #{tpu_custom_call.1} parent=0
    _
  %s6 = ssub.s32 1, %s4
  %s7 = scalar_select 0, %s6, %s4
  loop: start=0, step=1, limit=4
  $region2: #{tpu_custom_call.1} parent=0 // loop_pre_header
    _
  $region3: #{tpu_custom_call.1} parent=0 // loop_header
    %s9 = sphi 0, %s13
    %p10 = scmp.ge.s32.totalorder %s9, 4
    %s19 = sphi 0, %s21
    %s22 = sphi 0, %s19
    %s23 = sphi 0, %s22
    %s39 = sphi 0, %s23
    %s43 = sphi 0, %s43
    %s45 = sphi 0, %s43
    %s46 = sphi 0, %s45
    %s60 = sphi 0, %s46
    %s64 = sphi 0, %s64
    %s66 = sphi 0, %s64
    %s67 = sphi 0, %s66
    %s81 = sphi 0, %s67
    %s87 = sphi 0, %s89
    %s90 = sphi 0, %s87
    %s91 = sphi 0, %s90
    %s107 = sphi 0, %s91
  $region4: #{tpu_custom_call.1} parent=0 // loop_header_branch
    %12 = sbr.rel (%p10) target = $region8
  $region5: #{tpu_custom_call.1} parent=0 // loop_body
    %s14 = ssub.s32 %s9, 1
    %s15 = ssub.s32 %s9, 2
    %s16 = sadd.s32 %s9, 1
    %s17 = ssub.s32 %s9, %s16
    %p18 = scmp.eq.s32.totalorder %s17, 0
    %s20 = sadd.s32 %s19, 1
    %s21 = scalar_select %p18, %s19, %s20
    %p24 = pneg %p18
    %p25 = scmp.eq.s32.totalorder %s9, 1
    %p26 = por %p24, %p25
    %p27 = scmp.ne.s32.totalorder %s19, %s22
    %p28 = scmp.eq.s32.totalorder %s9, 0
    %p29 = por %p27, %p28
    %p30 = scmp.ne.s32.totalorder %s19, %s22
    %p31 = scmp.eq.s32.totalorder %s14, 1
    %p32 = por %p30, %p31
    %p33 = scmp.ne.s32.totalorder %s22, %s23
    %p34 = scmp.eq.s32.totalorder %s14, 0
    %p35 = por %p33, %p34
    %p36 = scmp.ne.s32.totalorder %s22, %s23
    %p37 = scmp.eq.s32.totalorder %s15, 1
    %p38 = por %p36, %p37
    %p40 = scmp.ne.s32.totalorder %s23, %s39
    %p41 = scmp.eq.s32.totalorder %s15, 0
    %p42 = por %p40, %p41
    %s44 = sadd.s32 %s43, 1
    %p47 = scmp.eq.s32.totalorder %s9, 1
    %p48 = scmp.ne.s32.totalorder %s43, %s45
    %p49 = scmp.eq.s32.totalorder %s9, 0
    %p50 = por %p48, %p49
    %p51 = scmp.ne.s32.totalorder %s43, %s45
    %p52 = scmp.eq.s32.totalorder %s14, 1
    %p53 = por %p51, %p52
    %p54 = scmp.ne.s32.totalorder %s45, %s46
    %p55 = scmp.eq.s32.totalorder %s14, 0
    %p56 = por %p54, %p55
    %p57 = scmp.ne.s32.totalorder %s45, %s46
    %p58 = scmp.eq.s32.totalorder %s15, 1
    %p59 = por %p57, %p58
    %p61 = scmp.ne.s32.totalorder %s46, %s60
    %p62 = scmp.eq.s32.totalorder %s15, 0
    %p63 = por %p61, %p62
    %s65 = sadd.s32 %s64, 1
    %p68 = scmp.eq.s32.totalorder %s9, 1
    %p69 = scmp.ne.s32.totalorder %s64, %s66
    %p70 = scmp.eq.s32.totalorder %s9, 0
    %p71 = por %p69, %p70
    %p72 = scmp.ne.s32.totalorder %s64, %s66
    %p73 = scmp.eq.s32.totalorder %s14, 1
    %p74 = por %p72, %p73
    %p75 = scmp.ne.s32.totalorder %s66, %s67
    %p76 = scmp.eq.s32.totalorder %s14, 0
    %p77 = por %p75, %p76
    %p78 = scmp.ne.s32.totalorder %s66, %s67
    %p79 = scmp.eq.s32.totalorder %s15, 1
    %p80 = por %p78, %p79
    %p82 = scmp.ne.s32.totalorder %s67, %s81
    %p83 = scmp.eq.s32.totalorder %s15, 0
    %p84 = por %p82, %p83
    %s85 = ssub.s32 %s9, %s16
    %p86 = scmp.eq.s32.totalorder %s85, 0
    %s88 = sadd.s32 %s87, 1
    %s89 = scalar_select %p86, %s87, %s88
    %p92 = pneg %p86
    %p93 = scmp.eq.s32.totalorder %s9, 1
    %p94 = por %p92, %p93
    %p95 = scmp.ne.s32.totalorder %s87, %s90
    %p96 = scmp.eq.s32.totalorder %s9, 0
    %p97 = por %p95, %p96
    %p98 = scmp.ne.s32.totalorder %s87, %s90
    %p99 = scmp.eq.s32.totalorder %s14, 1
    %p100 = por %p98, %p99
    %p101 = scmp.ne.s32.totalorder %s90, %s91
    %p102 = scmp.eq.s32.totalorder %s14, 0
    %p103 = por %p101, %p102
    %p104 = scmp.ne.s32.totalorder %s90, %s91
    %p105 = scmp.eq.s32.totalorder %s15, 1
    %p106 = por %p104, %p105
    %p108 = scmp.ne.s32.totalorder %s91, %s107
    %p109 = scmp.eq.s32.totalorder %s15, 0
    %p110 = por %p108, %p109
    %p111 = scmp.le.s32.totalorder 1, %s9
    %p112 = scmp.lt.s32.totalorder %s9, 3
    %p113 = pnand %p111, %p112
    %p114 = pneg %p113
    // Predicated region
    $region9: #{tpu_custom_call.1} parent=5 // pred_check
      _
    $region10: #{tpu_custom_call.1} parent=5 // pred_check_branch
      %116 = sbr.rel (%p113) target = $region12
    $region11: #{tpu_custom_call.1} parent=5 // pred_region
      %s117 = ssub.s32 %s9, 1
      // Predicated region
      $region13: #{tpu_custom_call.1} parent=11 // pred_check
        %p118 = pneg %p56
      $region14: #{tpu_custom_call.1} parent=11 // pred_check_branch
        %120 = sbr.rel (%p118) target = $region16
      $region15: #{tpu_custom_call.1} parent=11 // pred_region
        _
      $region16: #{tpu_custom_call.1} parent=11 // pred_fallthru
        _
      // Predicated region
      $region17: #{tpu_custom_call.1} parent=11 // pred_check
        %p121 = pneg %p77
      $region18: #{tpu_custom_call.1} parent=11 // pred_check_branch
        %123 = sbr.rel (%p121) target = $region20
      $region19: #{tpu_custom_call.1} parent=11 // pred_region
        _
      $region20: #{tpu_custom_call.1} parent=11 // pred_fallthru
        _
    $region12: #{tpu_custom_call.1} parent=5 // pred_fallthru
      _
    %p124 = scmp.lt.s32.totalorder %s9, 2
    // Predicated region
    $region21: #{tpu_custom_call.1} parent=5 // pred_check
      %p125 = pneg %p124
    $region22: #{tpu_custom_call.1} parent=5 // pred_check_branch
      %127 = sbr.rel (%p125) target = $region24
    $region23: #{tpu_custom_call.1} parent=5 // pred_region
      // Predicated region
      $region25: #{tpu_custom_call.1} parent=23 // pred_check
        %p128 = pneg %p29
      $region26: #{tpu_custom_call.1} parent=23 // pred_check_branch
        %130 = sbr.rel (%p128) target = $region28
      $region27: #{tpu_custom_call.1} parent=23 // pred_region
        %s131 = smul.u32 288, %s9
        %p132 = scmp.lt.s32.totalorder %s131, 575
        %s133 = scalar_select %p132, %s131, 575
        %s134 = smul.addr %s133, 2
        %s135 = smul.addr %s134, 4
        %s136 = scalar_lea.vmem %s0, %s135
        %s137 = smul.u32 288, %s9
      $region28: #{tpu_custom_call.1} parent=23 // pred_fallthru
        _
    $region24: #{tpu_custom_call.1} parent=5 // pred_fallthru
      _
    %p138 = scmp.le.s32.totalorder 1, %s9
    %p139 = scmp.lt.s32.totalorder %s9, 3
    %p140 = pnand %p138, %p139
    %p141 = pneg %p140
    // Predicated region
    $region29: #{tpu_custom_call.1} parent=5 // pred_check
      _
    $region30: #{tpu_custom_call.1} parent=5 // pred_check_branch
      %143 = sbr.rel (%p140) target = $region32
    $region31: #{tpu_custom_call.1} parent=5 // pred_region
      %s144 = ssub.s32 %s9, 1
      %s145 = smul.u32 288, %s14
      %p146 = scmp.lt.s32.totalorder %s145, 575
      %s147 = scalar_select %p146, %s145, 575
      %s148 = smul.addr %s147, 2
      %s149 = smul.addr %s148, 4
      %s150 = scalar_lea.vmem %s0, %s149
      %p151 = pneg %p35
      %p152 = pneg %p32
      %p153 = pneg %p56
      %p154 = pneg %p53
      %p155 = pneg %p77
      %p156 = pneg %p74
      %p157 = pneg %p103
      %p158 = pneg %p100
      %s159 = smul.u32 288, %s14
      %p160 = scmp.lt.s32.totalorder %s159, 575
      %s161 = scalar_select %p160, %s159, 575
      %s162 = smul.addr %s161, 4
      %s163 = scalar_lea.vmem %s3, %s162
      %s164 = smul.u32 288, %s14
      %p165 = scmp.lt.s32.totalorder %s164, 575
      %s166 = scalar_select %p165, %s164, 575
      %s167 = smul.addr %s166, 2
      %s168 = smul.addr %s167, 4
      %s169 = scalar_lea.vmem %s0, %s168
      %s170 = smul.u32 288, %s14
      %s171 = smul.u32 288, %s14
      %p172 = scmp.lt.s32.totalorder %s171, 575
      %s173 = scalar_select %p172, %s171, 575
      %s174 = smul.addr %s173, 4
      %s175 = scalar_lea.vmem %s3, %s174
      %s176 = smul.u32 288, %s14
      %v178 = vld [vmem:[%s169] sm:$0xff]
      %v179 = vld [vmem:[%s169 + $0x8] sm:$0xff]
      %v180 = vld [vmem:[%s169 + $0x10] sm:$0xff]
      %v181 = vld [vmem:[%s169 + $0x18] sm:$0xff]
      %v182 = vld [vmem:[%s169 + $0x20] sm:$0xff]
      %v183 = vld [vmem:[%s169 + $0x28] sm:$0xff]
      %v184 = vld [vmem:[%s169 + $0x30] sm:$0xff]
      %v185 = vld [vmem:[%s169 + $0x38] sm:$0xff]
      %v186 = vld [vmem:[%s169 + $0x40] sm:$0xff]
      %v187 = vld [vmem:[%s169 + $0x48] sm:$0xff]
      %v188 = vld [vmem:[%s169 + $0x50] sm:$0xff]
      %v189 = vld [vmem:[%s169 + $0x58] sm:$0xff]
      %v190 = vld [vmem:[%s169 + $0x60] sm:$0xff]
      %v191 = vld [vmem:[%s169 + $0x68] sm:$0xff]
      %v192 = vld [vmem:[%s169 + $0x70] sm:$0xff]
      %v193 = vld [vmem:[%s169 + $0x78] sm:$0xff]
      %v194 = vld [vmem:[%s169 + $0x80] sm:$0xff]
      %v195 = vld [vmem:[%s169 + $0x88] sm:$0xff]
      %v196 = vld [vmem:[%s169 + $0x90] sm:$0xff]
      %v197 = vld [vmem:[%s169 + $0x98] sm:$0xff]
      %v198 = vld [vmem:[%s169 + $0xa0] sm:$0xff]
      %v199 = vld [vmem:[%s169 + $0xa8] sm:$0xff]
      %v200 = vld [vmem:[%s169 + $0xb0] sm:$0xff]
      %v201 = vld [vmem:[%s169 + $0xb8] sm:$0xff]
      %v202 = vld [vmem:[%s169 + $0xc0] sm:$0xff]
      %v203 = vld [vmem:[%s169 + $0xc8] sm:$0xff]
      %v204 = vld [vmem:[%s169 + $0xd0] sm:$0xff]
      %v205 = vld [vmem:[%s169 + $0xd8] sm:$0xff]
      %v206 = vld [vmem:[%s169 + $0xe0] sm:$0xff]
      %v207 = vld [vmem:[%s169 + $0xe8] sm:$0xff]
      %v208 = vld [vmem:[%s169 + $0xf0] sm:$0xff]
      %v209 = vld [vmem:[%s169 + $0xf8] sm:$0xff]
      %v210 = vld [vmem:[%s169 + $0x100] sm:$0xff]
      %v211 = vld [vmem:[%s169 + $0x108] sm:$0xff]
      %v212 = vld [vmem:[%s169 + $0x110] sm:$0xff]
      %v213 = vld [vmem:[%s169 + $0x118] sm:$0xff]
      %v214 = vld [vmem:[%s169 + $0x120] sm:$0xff]
      %v215 = vld [vmem:[%s169 + $0x128] sm:$0xff]
      %v216 = vld [vmem:[%s169 + $0x130] sm:$0xff]
      %v217 = vld [vmem:[%s169 + $0x138] sm:$0xff]
      %v218 = vld [vmem:[%s169 + $0x140] sm:$0xff]
      %v219 = vld [vmem:[%s169 + $0x148] sm:$0xff]
      %v220 = vld [vmem:[%s169 + $0x150] sm:$0xff]
      %v221 = vld [vmem:[%s169 + $0x158] sm:$0xff]
      %v222 = vld [vmem:[%s169 + $0x160] sm:$0xff]
      %v223 = vld [vmem:[%s169 + $0x168] sm:$0xff]
      %v224 = vld [vmem:[%s169 + $0x170] sm:$0xff]
      %v225 = vld [vmem:[%s169 + $0x178] sm:$0xff]
      %v226 = vld [vmem:[%s169 + $0x180] sm:$0xff]
      %v227 = vld [vmem:[%s169 + $0x188] sm:$0xff]
      %v228 = vld [vmem:[%s169 + $0x190] sm:$0xff]
      %v229 = vld [vmem:[%s169 + $0x198] sm:$0xff]
      %v230 = vld [vmem:[%s169 + $0x1a0] sm:$0xff]
      %v231 = vld [vmem:[%s169 + $0x1a8] sm:$0xff]
      %v232 = vld [vmem:[%s169 + $0x1b0] sm:$0xff]
      %v233 = vld [vmem:[%s169 + $0x1b8] sm:$0xff]
      %v234 = vld [vmem:[%s169 + $0x1c0] sm:$0xff]
      %v235 = vld [vmem:[%s169 + $0x1c8] sm:$0xff]
      %v236 = vld [vmem:[%s169 + $0x1d0] sm:$0xff]
      %v237 = vld [vmem:[%s169 + $0x1d8] sm:$0xff]
      %v238 = vld [vmem:[%s169 + $0x1e0] sm:$0xff]
      %v239 = vld [vmem:[%s169 + $0x1e8] sm:$0xff]
      %v240 = vld [vmem:[%s169 + $0x1f0] sm:$0xff]
      %v241 = vld [vmem:[%s169 + $0x1f8] sm:$0xff]
      %v242 = vld [vmem:[%s169 + $0x200] sm:$0xff]
      %v243 = vld [vmem:[%s169 + $0x208] sm:$0xff]
      %v244 = vld [vmem:[%s169 + $0x210] sm:$0xff]
      %v245 = vld [vmem:[%s169 + $0x218] sm:$0xff]
      %v246 = vld [vmem:[%s169 + $0x220] sm:$0xff]
      %v247 = vld [vmem:[%s169 + $0x228] sm:$0xff]
      %v248 = vld [vmem:[%s169 + $0x230] sm:$0xff]
      %v249 = vld [vmem:[%s169 + $0x238] sm:$0xff]
      %v250 = vld [vmem:[%s169 + $0x240] sm:$0xff]
      %v251 = vld [vmem:[%s169 + $0x248] sm:$0xff]
      %v252 = vld [vmem:[%s169 + $0x250] sm:$0xff]
      %v253 = vld [vmem:[%s169 + $0x258] sm:$0xff]
      %v254 = vld [vmem:[%s169 + $0x260] sm:$0xff]
      %v255 = vld [vmem:[%s169 + $0x268] sm:$0xff]
      %v256 = vld [vmem:[%s169 + $0x270] sm:$0xff]
      %v257 = vld [vmem:[%s169 + $0x278] sm:$0xff]
      %v258 = vld [vmem:[%s169 + $0x280] sm:$0xff]
      %v259 = vld [vmem:[%s169 + $0x288] sm:$0xff]
      %v260 = vld [vmem:[%s169 + $0x290] sm:$0xff]
      %v261 = vld [vmem:[%s169 + $0x298] sm:$0xff]
      %v262 = vld [vmem:[%s169 + $0x2a0] sm:$0xff]
      %v263 = vld [vmem:[%s169 + $0x2a8] sm:$0xff]
      %v264 = vld [vmem:[%s169 + $0x2b0] sm:$0xff]
      %v265 = vld [vmem:[%s169 + $0x2b8] sm:$0xff]
      %v266 = vld [vmem:[%s169 + $0x2c0] sm:$0xff]
      %v267 = vld [vmem:[%s169 + $0x2c8] sm:$0xff]
      %v268 = vld [vmem:[%s169 + $0x2d0] sm:$0xff]
      %v269 = vld [vmem:[%s169 + $0x2d8] sm:$0xff]
      %v270 = vld [vmem:[%s169 + $0x2e0] sm:$0xff]
      %v271 = vld [vmem:[%s169 + $0x2e8] sm:$0xff]
      %v272 = vld [vmem:[%s169 + $0x2f0] sm:$0xff]
      %v273 = vld [vmem:[%s169 + $0x2f8] sm:$0xff]
      %v274 = vld [vmem:[%s169 + $0x300] sm:$0xff]
      %v275 = vld [vmem:[%s169 + $0x308] sm:$0xff]
      %v276 = vld [vmem:[%s169 + $0x310] sm:$0xff]
      %v277 = vld [vmem:[%s169 + $0x318] sm:$0xff]
      %v278 = vld [vmem:[%s169 + $0x320] sm:$0xff]
      %v279 = vld [vmem:[%s169 + $0x328] sm:$0xff]
      %v280 = vld [vmem:[%s169 + $0x330] sm:$0xff]
      %v281 = vld [vmem:[%s169 + $0x338] sm:$0xff]
      %v282 = vld [vmem:[%s169 + $0x340] sm:$0xff]
      %v283 = vld [vmem:[%s169 + $0x348] sm:$0xff]
      %v284 = vld [vmem:[%s169 + $0x350] sm:$0xff]
      %v285 = vld [vmem:[%s169 + $0x358] sm:$0xff]
      %v286 = vld [vmem:[%s169 + $0x360] sm:$0xff]
      %v287 = vld [vmem:[%s169 + $0x368] sm:$0xff]
      %v288 = vld [vmem:[%s169 + $0x370] sm:$0xff]
      %v289 = vld [vmem:[%s169 + $0x378] sm:$0xff]
      %v290 = vld [vmem:[%s169 + $0x380] sm:$0xff]
      %v291 = vld [vmem:[%s169 + $0x388] sm:$0xff]
      %v292 = vld [vmem:[%s169 + $0x390] sm:$0xff]
      %v293 = vld [vmem:[%s169 + $0x398] sm:$0xff]
      %v294 = vld [vmem:[%s169 + $0x3a0] sm:$0xff]
      %v295 = vld [vmem:[%s169 + $0x3a8] sm:$0xff]
      %v296 = vld [vmem:[%s169 + $0x3b0] sm:$0xff]
      %v297 = vld [vmem:[%s169 + $0x3b8] sm:$0xff]
      %v298 = vld [vmem:[%s169 + $0x3c0] sm:$0xff]
      %v299 = vld [vmem:[%s169 + $0x3c8] sm:$0xff]
      %v300 = vld [vmem:[%s169 + $0x3d0] sm:$0xff]
      %v301 = vld [vmem:[%s169 + $0x3d8] sm:$0xff]
      %v302 = vld [vmem:[%s169 + $0x3e0] sm:$0xff]
      %v303 = vld [vmem:[%s169 + $0x3e8] sm:$0xff]
      %v304 = vld [vmem:[%s169 + $0x3f0] sm:$0xff]
      %v305 = vld [vmem:[%s169 + $0x3f8] sm:$0xff]
      %v306 = vld [vmem:[%s169 + $0x400] sm:$0xff]
      %v307 = vld [vmem:[%s169 + $0x408] sm:$0xff]
      %v308 = vld [vmem:[%s169 + $0x410] sm:$0xff]
      %v309 = vld [vmem:[%s169 + $0x418] sm:$0xff]
      %v310 = vld [vmem:[%s169 + $0x420] sm:$0xff]
      %v311 = vld [vmem:[%s169 + $0x428] sm:$0xff]
      %v312 = vld [vmem:[%s169 + $0x430] sm:$0xff]
      %v313 = vld [vmem:[%s169 + $0x438] sm:$0xff]
      %v314 = vld [vmem:[%s169 + $0x440] sm:$0xff]
      %v315 = vld [vmem:[%s169 + $0x448] sm:$0xff]
      %v316 = vld [vmem:[%s169 + $0x450] sm:$0xff]
      %v317 = vld [vmem:[%s169 + $0x458] sm:$0xff]
      %v318 = vld [vmem:[%s169 + $0x460] sm:$0xff]
      %v319 = vld [vmem:[%s169 + $0x468] sm:$0xff]
      %v320 = vld [vmem:[%s169 + $0x470] sm:$0xff]
      %v321 = vld [vmem:[%s169 + $0x478] sm:$0xff]
      %v322 = vld [vmem:[%s169 + $0x480] sm:$0xff]
      %v323 = vld [vmem:[%s169 + $0x488] sm:$0xff]
      %v324 = vld [vmem:[%s169 + $0x490] sm:$0xff]
      %v325 = vld [vmem:[%s169 + $0x498] sm:$0xff]
      %v326 = vld [vmem:[%s169 + $0x4a0] sm:$0xff]
      %v327 = vld [vmem:[%s169 + $0x4a8] sm:$0xff]
      %v328 = vld [vmem:[%s169 + $0x4b0] sm:$0xff]
      %v329 = vld [vmem:[%s169 + $0x4b8] sm:$0xff]
      %v330 = vld [vmem:[%s169 + $0x4c0] sm:$0xff]
      %v331 = vld [vmem:[%s169 + $0x4c8] sm:$0xff]
      %v332 = vld [vmem:[%s169 + $0x4d0] sm:$0xff]
      %v333 = vld [vmem:[%s169 + $0x4d8] sm:$0xff]
      %v334 = vld [vmem:[%s169 + $0x4e0] sm:$0xff]
      %v335 = vld [vmem:[%s169 + $0x4e8] sm:$0xff]
      %v336 = vld [vmem:[%s169 + $0x4f0] sm:$0xff]
      %v337 = vld [vmem:[%s169 + $0x4f8] sm:$0xff]
      %v338 = vld [vmem:[%s169 + $0x500] sm:$0xff]
      %v339 = vld [vmem:[%s169 + $0x508] sm:$0xff]
      %v340 = vld [vmem:[%s169 + $0x510] sm:$0xff]
      %v341 = vld [vmem:[%s169 + $0x518] sm:$0xff]
      %v342 = vld [vmem:[%s169 + $0x520] sm:$0xff]
      %v343 = vld [vmem:[%s169 + $0x528] sm:$0xff]
      %v344 = vld [vmem:[%s169 + $0x530] sm:$0xff]
      %v345 = vld [vmem:[%s169 + $0x538] sm:$0xff]
      %v346 = vld [vmem:[%s169 + $0x540] sm:$0xff]
      %v347 = vld [vmem:[%s169 + $0x548] sm:$0xff]
      %v348 = vld [vmem:[%s169 + $0x550] sm:$0xff]
      %v349 = vld [vmem:[%s169 + $0x558] sm:$0xff]
      %v350 = vld [vmem:[%s169 + $0x560] sm:$0xff]
      %v351 = vld [vmem:[%s169 + $0x568] sm:$0xff]
      %v352 = vld [vmem:[%s169 + $0x570] sm:$0xff]
      %v353 = vld [vmem:[%s169 + $0x578] sm:$0xff]
      %v354 = vld [vmem:[%s169 + $0x580] sm:$0xff]
      %v355 = vld [vmem:[%s169 + $0x588] sm:$0xff]
      %v356 = vld [vmem:[%s169 + $0x590] sm:$0xff]
      %v357 = vld [vmem:[%s169 + $0x598] sm:$0xff]
      %v358 = vld [vmem:[%s169 + $0x5a0] sm:$0xff]
      %v359 = vld [vmem:[%s169 + $0x5a8] sm:$0xff]
      %v360 = vld [vmem:[%s169 + $0x5b0] sm:$0xff]
      %v361 = vld [vmem:[%s169 + $0x5b8] sm:$0xff]
      %v362 = vld [vmem:[%s169 + $0x5c0] sm:$0xff]
      %v363 = vld [vmem:[%s169 + $0x5c8] sm:$0xff]
      %v364 = vld [vmem:[%s169 + $0x5d0] sm:$0xff]
      %v365 = vld [vmem:[%s169 + $0x5d8] sm:$0xff]
      %v366 = vld [vmem:[%s169 + $0x5e0] sm:$0xff]
      %v367 = vld [vmem:[%s169 + $0x5e8] sm:$0xff]
      %v368 = vld [vmem:[%s169 + $0x5f0] sm:$0xff]
      %v369 = vld [vmem:[%s169 + $0x5f8] sm:$0xff]
      %v370 = vld [vmem:[%s169 + $0x600] sm:$0xff]
      %v371 = vld [vmem:[%s169 + $0x608] sm:$0xff]
      %v372 = vld [vmem:[%s169 + $0x610] sm:$0xff]
      %v373 = vld [vmem:[%s169 + $0x618] sm:$0xff]
      %v374 = vld [vmem:[%s169 + $0x620] sm:$0xff]
      %v375 = vld [vmem:[%s169 + $0x628] sm:$0xff]
      %v376 = vld [vmem:[%s169 + $0x630] sm:$0xff]
      %v377 = vld [vmem:[%s169 + $0x638] sm:$0xff]
      %v378 = vld [vmem:[%s169 + $0x640] sm:$0xff]
      %v379 = vld [vmem:[%s169 + $0x648] sm:$0xff]
      %v380 = vld [vmem:[%s169 + $0x650] sm:$0xff]
      %v381 = vld [vmem:[%s169 + $0x658] sm:$0xff]
      %v382 = vld [vmem:[%s169 + $0x660] sm:$0xff]
      %v383 = vld [vmem:[%s169 + $0x668] sm:$0xff]
      %v384 = vld [vmem:[%s169 + $0x670] sm:$0xff]
      %v385 = vld [vmem:[%s169 + $0x678] sm:$0xff]
      %v386 = vld [vmem:[%s169 + $0x680] sm:$0xff]
      %v387 = vld [vmem:[%s169 + $0x688] sm:$0xff]
      %v388 = vld [vmem:[%s169 + $0x690] sm:$0xff]
      %v389 = vld [vmem:[%s169 + $0x698] sm:$0xff]
      %v390 = vld [vmem:[%s169 + $0x6a0] sm:$0xff]
      %v391 = vld [vmem:[%s169 + $0x6a8] sm:$0xff]
      %v392 = vld [vmem:[%s169 + $0x6b0] sm:$0xff]
      %v393 = vld [vmem:[%s169 + $0x6b8] sm:$0xff]
      %v394 = vld [vmem:[%s169 + $0x6c0] sm:$0xff]
      %v395 = vld [vmem:[%s169 + $0x6c8] sm:$0xff]
      %v396 = vld [vmem:[%s169 + $0x6d0] sm:$0xff]
      %v397 = vld [vmem:[%s169 + $0x6d8] sm:$0xff]
      %v398 = vld [vmem:[%s169 + $0x6e0] sm:$0xff]
      %v399 = vld [vmem:[%s169 + $0x6e8] sm:$0xff]
      %v400 = vld [vmem:[%s169 + $0x6f0] sm:$0xff]
      %v401 = vld [vmem:[%s169 + $0x6f8] sm:$0xff]
      %v402 = vld [vmem:[%s169 + $0x700] sm:$0xff]
      %v403 = vld [vmem:[%s169 + $0x708] sm:$0xff]
      %v404 = vld [vmem:[%s169 + $0x710] sm:$0xff]
      %v405 = vld [vmem:[%s169 + $0x718] sm:$0xff]
      %v406 = vld [vmem:[%s169 + $0x720] sm:$0xff]
      %v407 = vld [vmem:[%s169 + $0x728] sm:$0xff]
      %v408 = vld [vmem:[%s169 + $0x730] sm:$0xff]
      %v409 = vld [vmem:[%s169 + $0x738] sm:$0xff]
      %v410 = vld [vmem:[%s169 + $0x740] sm:$0xff]
      %v411 = vld [vmem:[%s169 + $0x748] sm:$0xff]
      %v412 = vld [vmem:[%s169 + $0x750] sm:$0xff]
      %v413 = vld [vmem:[%s169 + $0x758] sm:$0xff]
      %v414 = vld [vmem:[%s169 + $0x760] sm:$0xff]
      %v415 = vld [vmem:[%s169 + $0x768] sm:$0xff]
      %v416 = vld [vmem:[%s169 + $0x770] sm:$0xff]
      %v417 = vld [vmem:[%s169 + $0x778] sm:$0xff]
      %v418 = vld [vmem:[%s169 + $0x780] sm:$0xff]
      %v419 = vld [vmem:[%s169 + $0x788] sm:$0xff]
      %v420 = vld [vmem:[%s169 + $0x790] sm:$0xff]
      %v421 = vld [vmem:[%s169 + $0x798] sm:$0xff]
      %v422 = vld [vmem:[%s169 + $0x7a0] sm:$0xff]
      %v423 = vld [vmem:[%s169 + $0x7a8] sm:$0xff]
      %v424 = vld [vmem:[%s169 + $0x7b0] sm:$0xff]
      %v425 = vld [vmem:[%s169 + $0x7b8] sm:$0xff]
      %v426 = vld [vmem:[%s169 + $0x7c0] sm:$0xff]
      %v427 = vld [vmem:[%s169 + $0x7c8] sm:$0xff]
      %v428 = vld [vmem:[%s169 + $0x7d0] sm:$0xff]
      %v429 = vld [vmem:[%s169 + $0x7d8] sm:$0xff]
      %v430 = vld [vmem:[%s169 + $0x7e0] sm:$0xff]
      %v431 = vld [vmem:[%s169 + $0x7e8] sm:$0xff]
      %v432 = vld [vmem:[%s169 + $0x7f0] sm:$0xff]
      %v433 = vld [vmem:[%s169 + $0x7f8] sm:$0xff]
      %v434 = vld [vmem:[%s169 + $0x800] sm:$0xff]
      %v435 = vld [vmem:[%s169 + $0x808] sm:$0xff]
      %v436 = vld [vmem:[%s169 + $0x810] sm:$0xff]
      %v437 = vld [vmem:[%s169 + $0x818] sm:$0xff]
      %v438 = vld [vmem:[%s169 + $0x820] sm:$0xff]
      %v439 = vld [vmem:[%s169 + $0x828] sm:$0xff]
      %v440 = vld [vmem:[%s169 + $0x830] sm:$0xff]
      %v441 = vld [vmem:[%s169 + $0x838] sm:$0xff]
      %v442 = vld [vmem:[%s169 + $0x840] sm:$0xff]
      %v443 = vld [vmem:[%s169 + $0x848] sm:$0xff]
      %v444 = vld [vmem:[%s169 + $0x850] sm:$0xff]
      %v445 = vld [vmem:[%s169 + $0x858] sm:$0xff]
      %v446 = vld [vmem:[%s169 + $0x860] sm:$0xff]
      %v447 = vld [vmem:[%s169 + $0x868] sm:$0xff]
      %v448 = vld [vmem:[%s169 + $0x870] sm:$0xff]
      %v449 = vld [vmem:[%s169 + $0x878] sm:$0xff]
      %v450 = vld [vmem:[%s169 + $0x880] sm:$0xff]
      %v451 = vld [vmem:[%s169 + $0x888] sm:$0xff]
      %v452 = vld [vmem:[%s169 + $0x890] sm:$0xff]
      %v453 = vld [vmem:[%s169 + $0x898] sm:$0xff]
      %v454 = vld [vmem:[%s169 + $0x8a0] sm:$0xff]
      %v455 = vld [vmem:[%s169 + $0x8a8] sm:$0xff]
      %v456 = vld [vmem:[%s169 + $0x8b0] sm:$0xff]
      %v457 = vld [vmem:[%s169 + $0x8b8] sm:$0xff]
      %v458 = vld [vmem:[%s169 + $0x8c0] sm:$0xff]
      %v459 = vld [vmem:[%s169 + $0x8c8] sm:$0xff]
      %v460 = vld [vmem:[%s169 + $0x8d0] sm:$0xff]
      %v461 = vld [vmem:[%s169 + $0x8d8] sm:$0xff]
      %v462 = vld [vmem:[%s169 + $0x8e0] sm:$0xff]
      %v463 = vld [vmem:[%s169 + $0x8e8] sm:$0xff]
      %v464 = vld [vmem:[%s169 + $0x8f0] sm:$0xff]
      %v465 = vld [vmem:[%s169 + $0x8f8] sm:$0xff]
      %v466 = vld [vmem:[%s1] sm:$0xf]
      %v467 = vld [vmem:[%s1 + $0x4] sm:$0xf]
      %v468 = vld [vmem:[%s1 + $0x8] sm:$0xf]
      %v469 = vld [vmem:[%s1 + $0xc] sm:$0xf]
      %v470 = vld [vmem:[%s1 + $0x10] sm:$0xf]
      %v471 = vld [vmem:[%s1 + $0x14] sm:$0xf]
      %v472 = vld [vmem:[%s1 + $0x18] sm:$0xf]
      %v473 = vld [vmem:[%s1 + $0x1c] sm:$0xf]
      %v474 = vld [vmem:[%s1 + $0x20] sm:$0xf]
      %v475 = vld [vmem:[%s1 + $0x24] sm:$0xf]
      %v476 = vld [vmem:[%s1 + $0x28] sm:$0xf]
      %v477 = vld [vmem:[%s1 + $0x2c] sm:$0xf]
      %v478 = vld [vmem:[%s1 + $0x30] sm:$0xf]
      %v479 = vld [vmem:[%s1 + $0x34] sm:$0xf]
      %v480 = vld [vmem:[%s1 + $0x38] sm:$0xf]
      %v481 = vld [vmem:[%s1 + $0x3c] sm:$0xf]
      %v482 = vld [vmem:[%s1 + $0x40] sm:$0xf]
      %v483 = vld [vmem:[%s1 + $0x44] sm:$0xf]
      %v484 = vld [vmem:[%s1 + $0x48] sm:$0x3]
      %v485 = vld [vmem:[%s2] sm:$0x1]
      %v487 = vperm.slane %v485, 0
      %v777 = vunpack.c.l.b16 %v178
      %v778 = vunpack.c.h.b16 %v178
      %v779 = vunpack.c.l.b16 %v179
      %v780 = vunpack.c.h.b16 %v179
      %v781 = vunpack.c.l.b16 %v180
      %v782 = vunpack.c.h.b16 %v180
      %v783 = vunpack.c.l.b16 %v181
      %v784 = vunpack.c.h.b16 %v181
      %v785 = vunpack.c.l.b16 %v182
      %v786 = vunpack.c.h.b16 %v182
      %v787 = vunpack.c.l.b16 %v183
      %v788 = vunpack.c.h.b16 %v183
      %v789 = vunpack.c.l.b16 %v184
      %v790 = vunpack.c.h.b16 %v184
      %v791 = vunpack.c.l.b16 %v185
      %v792 = vunpack.c.h.b16 %v185
      %v793 = vunpack.c.l.b16 %v186
      %v794 = vunpack.c.h.b16 %v186
      %v795 = vunpack.c.l.b16 %v187
      %v796 = vunpack.c.h.b16 %v187
      %v797 = vunpack.c.l.b16 %v188
      %v798 = vunpack.c.h.b16 %v188
      %v799 = vunpack.c.l.b16 %v189
      %v800 = vunpack.c.h.b16 %v189
      %v801 = vunpack.c.l.b16 %v190
      %v802 = vunpack.c.h.b16 %v190
      %v803 = vunpack.c.l.b16 %v191
      %v804 = vunpack.c.h.b16 %v191
      %v805 = vunpack.c.l.b16 %v192
      %v806 = vunpack.c.h.b16 %v192
      %v807 = vunpack.c.l.b16 %v193
      %v808 = vunpack.c.h.b16 %v193
      %v809 = vunpack.c.l.b16 %v194
      %v810 = vunpack.c.h.b16 %v194
      %v811 = vunpack.c.l.b16 %v195
      %v812 = vunpack.c.h.b16 %v195
      %v813 = vunpack.c.l.b16 %v196
      %v814 = vunpack.c.h.b16 %v196
      %v815 = vunpack.c.l.b16 %v197
      %v816 = vunpack.c.h.b16 %v197
      %v817 = vunpack.c.l.b16 %v198
      %v818 = vunpack.c.h.b16 %v198
      %v819 = vunpack.c.l.b16 %v199
      %v820 = vunpack.c.h.b16 %v199
      %v821 = vunpack.c.l.b16 %v200
      %v822 = vunpack.c.h.b16 %v200
      %v823 = vunpack.c.l.b16 %v201
      %v824 = vunpack.c.h.b16 %v201
      %v825 = vunpack.c.l.b16 %v202
      %v826 = vunpack.c.h.b16 %v202
      %v827 = vunpack.c.l.b16 %v203
      %v828 = vunpack.c.h.b16 %v203
      %v829 = vunpack.c.l.b16 %v204
      %v830 = vunpack.c.h.b16 %v204
      %v831 = vunpack.c.l.b16 %v205
      %v832 = vunpack.c.h.b16 %v205
      %v833 = vunpack.c.l.b16 %v206
      %v834 = vunpack.c.h.b16 %v206
      %v835 = vunpack.c.l.b16 %v207
      %v836 = vunpack.c.h.b16 %v207
      %v837 = vunpack.c.l.b16 %v208
      %v838 = vunpack.c.h.b16 %v208
      %v839 = vunpack.c.l.b16 %v209
      %v840 = vunpack.c.h.b16 %v209
      %v841 = vunpack.c.l.b16 %v210
      %v842 = vunpack.c.h.b16 %v210
      %v843 = vunpack.c.l.b16 %v211
      %v844 = vunpack.c.h.b16 %v211
      %v845 = vunpack.c.l.b16 %v212
      %v846 = vunpack.c.h.b16 %v212
      %v847 = vunpack.c.l.b16 %v213
      %v848 = vunpack.c.h.b16 %v213
      %v849 = vunpack.c.l.b16 %v214
      %v850 = vunpack.c.h.b16 %v214
      %v851 = vunpack.c.l.b16 %v215
      %v852 = vunpack.c.h.b16 %v215
      %v853 = vunpack.c.l.b16 %v216
      %v854 = vunpack.c.h.b16 %v216
      %v855 = vunpack.c.l.b16 %v217
      %v856 = vunpack.c.h.b16 %v217
      %v857 = vunpack.c.l.b16 %v218
      %v858 = vunpack.c.h.b16 %v218
      %v859 = vunpack.c.l.b16 %v219
      %v860 = vunpack.c.h.b16 %v219
      %v861 = vunpack.c.l.b16 %v220
      %v862 = vunpack.c.h.b16 %v220
      %v863 = vunpack.c.l.b16 %v221
      %v864 = vunpack.c.h.b16 %v221
      %v865 = vunpack.c.l.b16 %v222
      %v866 = vunpack.c.h.b16 %v222
      %v867 = vunpack.c.l.b16 %v223
      %v868 = vunpack.c.h.b16 %v223
      %v869 = vunpack.c.l.b16 %v224
      %v870 = vunpack.c.h.b16 %v224
      %v871 = vunpack.c.l.b16 %v225
      %v872 = vunpack.c.h.b16 %v225
      %v873 = vunpack.c.l.b16 %v226
      %v874 = vunpack.c.h.b16 %v226
      %v875 = vunpack.c.l.b16 %v227
      %v876 = vunpack.c.h.b16 %v227
      %v877 = vunpack.c.l.b16 %v228
      %v878 = vunpack.c.h.b16 %v228
      %v879 = vunpack.c.l.b16 %v229
      %v880 = vunpack.c.h.b16 %v229
      %v881 = vunpack.c.l.b16 %v230
      %v882 = vunpack.c.h.b16 %v230
      %v883 = vunpack.c.l.b16 %v231
      %v884 = vunpack.c.h.b16 %v231
      %v885 = vunpack.c.l.b16 %v232
      %v886 = vunpack.c.h.b16 %v232
      %v887 = vunpack.c.l.b16 %v233
      %v888 = vunpack.c.h.b16 %v233
      %v889 = vunpack.c.l.b16 %v234
      %v890 = vunpack.c.h.b16 %v234
      %v891 = vunpack.c.l.b16 %v235
      %v892 = vunpack.c.h.b16 %v235
      %v893 = vunpack.c.l.b16 %v236
      %v894 = vunpack.c.h.b16 %v236
      %v895 = vunpack.c.l.b16 %v237
      %v896 = vunpack.c.h.b16 %v237
      %v897 = vunpack.c.l.b16 %v238
      %v898 = vunpack.c.h.b16 %v238
      %v899 = vunpack.c.l.b16 %v239
      %v900 = vunpack.c.h.b16 %v239
      %v901 = vunpack.c.l.b16 %v240
      %v902 = vunpack.c.h.b16 %v240
      %v903 = vunpack.c.l.b16 %v241
      %v904 = vunpack.c.h.b16 %v241
      %v905 = vunpack.c.l.b16 %v242
      %v906 = vunpack.c.h.b16 %v242
      %v907 = vunpack.c.l.b16 %v243
      %v908 = vunpack.c.h.b16 %v243
      %v909 = vunpack.c.l.b16 %v244
      %v910 = vunpack.c.h.b16 %v244
      %v911 = vunpack.c.l.b16 %v245
      %v912 = vunpack.c.h.b16 %v245
      %v913 = vunpack.c.l.b16 %v246
      %v914 = vunpack.c.h.b16 %v246
      %v915 = vunpack.c.l.b16 %v247
      %v916 = vunpack.c.h.b16 %v247
      %v917 = vunpack.c.l.b16 %v248
      %v918 = vunpack.c.h.b16 %v248
      %v919 = vunpack.c.l.b16 %v249
      %v920 = vunpack.c.h.b16 %v249
      %v921 = vunpack.c.l.b16 %v250
      %v922 = vunpack.c.h.b16 %v250
      %v923 = vunpack.c.l.b16 %v251
      %v924 = vunpack.c.h.b16 %v251
      %v925 = vunpack.c.l.b16 %v252
      %v926 = vunpack.c.h.b16 %v252
      %v927 = vunpack.c.l.b16 %v253
      %v928 = vunpack.c.h.b16 %v253
      %v929 = vunpack.c.l.b16 %v254
      %v930 = vunpack.c.h.b16 %v254
      %v931 = vunpack.c.l.b16 %v255
      %v932 = vunpack.c.h.b16 %v255
      %v933 = vunpack.c.l.b16 %v256
      %v934 = vunpack.c.h.b16 %v256
      %v935 = vunpack.c.l.b16 %v257
      %v936 = vunpack.c.h.b16 %v257
      %v937 = vunpack.c.l.b16 %v258
      %v938 = vunpack.c.h.b16 %v258
      %v939 = vunpack.c.l.b16 %v259
      %v940 = vunpack.c.h.b16 %v259
      %v941 = vunpack.c.l.b16 %v260
      %v942 = vunpack.c.h.b16 %v260
      %v943 = vunpack.c.l.b16 %v261
      %v944 = vunpack.c.h.b16 %v261
      %v945 = vunpack.c.l.b16 %v262
      %v946 = vunpack.c.h.b16 %v262
      %v947 = vunpack.c.l.b16 %v263
      %v948 = vunpack.c.h.b16 %v263
      %v949 = vunpack.c.l.b16 %v264
      %v950 = vunpack.c.h.b16 %v264
      %v951 = vunpack.c.l.b16 %v265
      %v952 = vunpack.c.h.b16 %v265
      %v953 = vunpack.c.l.b16 %v266
      %v954 = vunpack.c.h.b16 %v266
      %v955 = vunpack.c.l.b16 %v267
      %v956 = vunpack.c.h.b16 %v267
      %v957 = vunpack.c.l.b16 %v268
      %v958 = vunpack.c.h.b16 %v268
      %v959 = vunpack.c.l.b16 %v269
      %v960 = vunpack.c.h.b16 %v269
      %v961 = vunpack.c.l.b16 %v270
      %v962 = vunpack.c.h.b16 %v270
      %v963 = vunpack.c.l.b16 %v271
      %v964 = vunpack.c.h.b16 %v271
      %v965 = vunpack.c.l.b16 %v272
      %v966 = vunpack.c.h.b16 %v272
      %v967 = vunpack.c.l.b16 %v273
      %v968 = vunpack.c.h.b16 %v273
      %v969 = vunpack.c.l.b16 %v274
      %v970 = vunpack.c.h.b16 %v274
      %v971 = vunpack.c.l.b16 %v275
      %v972 = vunpack.c.h.b16 %v275
      %v973 = vunpack.c.l.b16 %v276
      %v974 = vunpack.c.h.b16 %v276
      %v975 = vunpack.c.l.b16 %v277
      %v976 = vunpack.c.h.b16 %v277
      %v977 = vunpack.c.l.b16 %v278
      %v978 = vunpack.c.h.b16 %v278
      %v979 = vunpack.c.l.b16 %v279
      %v980 = vunpack.c.h.b16 %v279
      %v981 = vunpack.c.l.b16 %v280
      %v982 = vunpack.c.h.b16 %v280
      %v983 = vunpack.c.l.b16 %v281
      %v984 = vunpack.c.h.b16 %v281
      %v985 = vunpack.c.l.b16 %v282
      %v986 = vunpack.c.h.b16 %v282
      %v987 = vunpack.c.l.b16 %v283
      %v988 = vunpack.c.h.b16 %v283
      %v989 = vunpack.c.l.b16 %v284
      %v990 = vunpack.c.h.b16 %v284
      %v991 = vunpack.c.l.b16 %v285
      %v992 = vunpack.c.h.b16 %v285
      %v993 = vunpack.c.l.b16 %v286
      %v994 = vunpack.c.h.b16 %v286
      %v995 = vunpack.c.l.b16 %v287
      %v996 = vunpack.c.h.b16 %v287
      %v997 = vunpack.c.l.b16 %v288
      %v998 = vunpack.c.h.b16 %v288
      %v999 = vunpack.c.l.b16 %v289
      %v1000 = vunpack.c.h.b16 %v289
      %v1001 = vunpack.c.l.b16 %v290
      %v1002 = vunpack.c.h.b16 %v290
      %v1003 = vunpack.c.l.b16 %v291
      %v1004 = vunpack.c.h.b16 %v291
      %v1005 = vunpack.c.l.b16 %v292
      %v1006 = vunpack.c.h.b16 %v292
      %v1007 = vunpack.c.l.b16 %v293
      %v1008 = vunpack.c.h.b16 %v293
      %v1009 = vunpack.c.l.b16 %v294
      %v1010 = vunpack.c.h.b16 %v294
      %v1011 = vunpack.c.l.b16 %v295
      %v1012 = vunpack.c.h.b16 %v295
      %v1013 = vunpack.c.l.b16 %v296
      %v1014 = vunpack.c.h.b16 %v296
      %v1015 = vunpack.c.l.b16 %v297
      %v1016 = vunpack.c.h.b16 %v297
      %v1017 = vunpack.c.l.b16 %v298
      %v1018 = vunpack.c.h.b16 %v298
      %v1019 = vunpack.c.l.b16 %v299
      %v1020 = vunpack.c.h.b16 %v299
      %v1021 = vunpack.c.l.b16 %v300
      %v1022 = vunpack.c.h.b16 %v300
      %v1023 = vunpack.c.l.b16 %v301
      %v1024 = vunpack.c.h.b16 %v301
      %v1025 = vunpack.c.l.b16 %v302
      %v1026 = vunpack.c.h.b16 %v302
      %v1027 = vunpack.c.l.b16 %v303
      %v1028 = vunpack.c.h.b16 %v303
      %v1029 = vunpack.c.l.b16 %v304
      %v1030 = vunpack.c.h.b16 %v304
      %v1031 = vunpack.c.l.b16 %v305
      %v1032 = vunpack.c.h.b16 %v305
      %v1033 = vunpack.c.l.b16 %v306
      %v1034 = vunpack.c.h.b16 %v306
      %v1035 = vunpack.c.l.b16 %v307
      %v1036 = vunpack.c.h.b16 %v307
      %v1037 = vunpack.c.l.b16 %v308
      %v1038 = vunpack.c.h.b16 %v308
      %v1039 = vunpack.c.l.b16 %v309
      %v1040 = vunpack.c.h.b16 %v309
      %v1041 = vunpack.c.l.b16 %v310
      %v1042 = vunpack.c.h.b16 %v310
      %v1043 = vunpack.c.l.b16 %v311
      %v1044 = vunpack.c.h.b16 %v311
      %v1045 = vunpack.c.l.b16 %v312
      %v1046 = vunpack.c.h.b16 %v312
      %v1047 = vunpack.c.l.b16 %v313
      %v1048 = vunpack.c.h.b16 %v313
      %v1049 = vunpack.c.l.b16 %v314
      %v1050 = vunpack.c.h.b16 %v314
      %v1051 = vunpack.c.l.b16 %v315
      %v1052 = vunpack.c.h.b16 %v315
      %v1053 = vunpack.c.l.b16 %v316
      %v1054 = vunpack.c.h.b16 %v316
      %v1055 = vunpack.c.l.b16 %v317
      %v1056 = vunpack.c.h.b16 %v317
      %v1057 = vunpack.c.l.b16 %v318
      %v1058 = vunpack.c.h.b16 %v318
      %v1059 = vunpack.c.l.b16 %v319
      %v1060 = vunpack.c.h.b16 %v319
      %v1061 = vunpack.c.l.b16 %v320
      %v1062 = vunpack.c.h.b16 %v320
      %v1063 = vunpack.c.l.b16 %v321
      %v1064 = vunpack.c.h.b16 %v321
      %v1065 = vunpack.c.l.b16 %v322
      %v1066 = vunpack.c.h.b16 %v322
      %v1067 = vunpack.c.l.b16 %v323
      %v1068 = vunpack.c.h.b16 %v323
      %v1069 = vunpack.c.l.b16 %v324
      %v1070 = vunpack.c.h.b16 %v324
      %v1071 = vunpack.c.l.b16 %v325
      %v1072 = vunpack.c.h.b16 %v325
      %v1073 = vunpack.c.l.b16 %v326
      %v1074 = vunpack.c.h.b16 %v326
      %v1075 = vunpack.c.l.b16 %v327
      %v1076 = vunpack.c.h.b16 %v327
      %v1077 = vunpack.c.l.b16 %v328
      %v1078 = vunpack.c.h.b16 %v328
      %v1079 = vunpack.c.l.b16 %v329
      %v1080 = vunpack.c.h.b16 %v329
      %v1081 = vunpack.c.l.b16 %v330
      %v1082 = vunpack.c.h.b16 %v330
      %v1083 = vunpack.c.l.b16 %v331
      %v1084 = vunpack.c.h.b16 %v331
      %v1085 = vunpack.c.l.b16 %v332
      %v1086 = vunpack.c.h.b16 %v332
      %v1087 = vunpack.c.l.b16 %v333
      %v1088 = vunpack.c.h.b16 %v333
      %v1089 = vunpack.c.l.b16 %v334
      %v1090 = vunpack.c.h.b16 %v334
      %v1091 = vunpack.c.l.b16 %v335
      %v1092 = vunpack.c.h.b16 %v335
      %v1093 = vunpack.c.l.b16 %v336
      %v1094 = vunpack.c.h.b16 %v336
      %v1095 = vunpack.c.l.b16 %v337
      %v1096 = vunpack.c.h.b16 %v337
      %v1097 = vunpack.c.l.b16 %v338
      %v1098 = vunpack.c.h.b16 %v338
      %v1099 = vunpack.c.l.b16 %v339
      %v1100 = vunpack.c.h.b16 %v339
      %v1101 = vunpack.c.l.b16 %v340
      %v1102 = vunpack.c.h.b16 %v340
      %v1103 = vunpack.c.l.b16 %v341
      %v1104 = vunpack.c.h.b16 %v341
      %v1105 = vunpack.c.l.b16 %v342
      %v1106 = vunpack.c.h.b16 %v342
      %v1107 = vunpack.c.l.b16 %v343
      %v1108 = vunpack.c.h.b16 %v343
      %v1109 = vunpack.c.l.b16 %v344
      %v1110 = vunpack.c.h.b16 %v344
      %v1111 = vunpack.c.l.b16 %v345
      %v1112 = vunpack.c.h.b16 %v345
      %v1113 = vunpack.c.l.b16 %v346
      %v1114 = vunpack.c.h.b16 %v346
      %v1115 = vunpack.c.l.b16 %v347
      %v1116 = vunpack.c.h.b16 %v347
      %v1117 = vunpack.c.l.b16 %v348
      %v1118 = vunpack.c.h.b16 %v348
      %v1119 = vunpack.c.l.b16 %v349
      %v1120 = vunpack.c.h.b16 %v349
      %v1121 = vunpack.c.l.b16 %v350
      %v1122 = vunpack.c.h.b16 %v350
      %v1123 = vunpack.c.l.b16 %v351
      %v1124 = vunpack.c.h.b16 %v351
      %v1125 = vunpack.c.l.b16 %v352
      %v1126 = vunpack.c.h.b16 %v352
      %v1127 = vunpack.c.l.b16 %v353
      %v1128 = vunpack.c.h.b16 %v353
      %v1129 = vunpack.c.l.b16 %v354
      %v1130 = vunpack.c.h.b16 %v354
      %v1131 = vunpack.c.l.b16 %v355
      %v1132 = vunpack.c.h.b16 %v355
      %v1133 = vunpack.c.l.b16 %v356
      %v1134 = vunpack.c.h.b16 %v356
      %v1135 = vunpack.c.l.b16 %v357
      %v1136 = vunpack.c.h.b16 %v357
      %v1137 = vunpack.c.l.b16 %v358
      %v1138 = vunpack.c.h.b16 %v358
      %v1139 = vunpack.c.l.b16 %v359
      %v1140 = vunpack.c.h.b16 %v359
      %v1141 = vunpack.c.l.b16 %v360
      %v1142 = vunpack.c.h.b16 %v360
      %v1143 = vunpack.c.l.b16 %v361
      %v1144 = vunpack.c.h.b16 %v361
      %v1145 = vunpack.c.l.b16 %v362
      %v1146 = vunpack.c.h.b16 %v362
      %v1147 = vunpack.c.l.b16 %v363
      %v1148 = vunpack.c.h.b16 %v363
      %v1149 = vunpack.c.l.b16 %v364
      %v1150 = vunpack.c.h.b16 %v364
      %v1151 = vunpack.c.l.b16 %v365
      %v1152 = vunpack.c.h.b16 %v365
      %v1153 = vunpack.c.l.b16 %v366
      %v1154 = vunpack.c.h.b16 %v366
      %v1155 = vunpack.c.l.b16 %v367
      %v1156 = vunpack.c.h.b16 %v367
      %v1157 = vunpack.c.l.b16 %v368
      %v1158 = vunpack.c.h.b16 %v368
      %v1159 = vunpack.c.l.b16 %v369
      %v1160 = vunpack.c.h.b16 %v369
      %v1161 = vunpack.c.l.b16 %v370
      %v1162 = vunpack.c.h.b16 %v370
      %v1163 = vunpack.c.l.b16 %v371
      %v1164 = vunpack.c.h.b16 %v371
      %v1165 = vunpack.c.l.b16 %v372
      %v1166 = vunpack.c.h.b16 %v372
      %v1167 = vunpack.c.l.b16 %v373
      %v1168 = vunpack.c.h.b16 %v373
      %v1169 = vunpack.c.l.b16 %v374
      %v1170 = vunpack.c.h.b16 %v374
      %v1171 = vunpack.c.l.b16 %v375
      %v1172 = vunpack.c.h.b16 %v375
      %v1173 = vunpack.c.l.b16 %v376
      %v1174 = vunpack.c.h.b16 %v376
      %v1175 = vunpack.c.l.b16 %v377
      %v1176 = vunpack.c.h.b16 %v377
      %v1177 = vunpack.c.l.b16 %v378
      %v1178 = vunpack.c.h.b16 %v378
      %v1179 = vunpack.c.l.b16 %v379
      %v1180 = vunpack.c.h.b16 %v379
      %v1181 = vunpack.c.l.b16 %v380
      %v1182 = vunpack.c.h.b16 %v380
      %v1183 = vunpack.c.l.b16 %v381
      %v1184 = vunpack.c.h.b16 %v381
      %v1185 = vunpack.c.l.b16 %v382
      %v1186 = vunpack.c.h.b16 %v382
      %v1187 = vunpack.c.l.b16 %v383
      %v1188 = vunpack.c.h.b16 %v383
      %v1189 = vunpack.c.l.b16 %v384
      %v1190 = vunpack.c.h.b16 %v384
      %v1191 = vunpack.c.l.b16 %v385
      %v1192 = vunpack.c.h.b16 %v385
      %v1193 = vunpack.c.l.b16 %v386
      %v1194 = vunpack.c.h.b16 %v386
      %v1195 = vunpack.c.l.b16 %v387
      %v1196 = vunpack.c.h.b16 %v387
      %v1197 = vunpack.c.l.b16 %v388
      %v1198 = vunpack.c.h.b16 %v388
      %v1199 = vunpack.c.l.b16 %v389
      %v1200 = vunpack.c.h.b16 %v389
      %v1201 = vunpack.c.l.b16 %v390
      %v1202 = vunpack.c.h.b16 %v390
      %v1203 = vunpack.c.l.b16 %v391
      %v1204 = vunpack.c.h.b16 %v391
      %v1205 = vunpack.c.l.b16 %v392
      %v1206 = vunpack.c.h.b16 %v392
      %v1207 = vunpack.c.l.b16 %v393
      %v1208 = vunpack.c.h.b16 %v393
      %v1209 = vunpack.c.l.b16 %v394
      %v1210 = vunpack.c.h.b16 %v394
      %v1211 = vunpack.c.l.b16 %v395
      %v1212 = vunpack.c.h.b16 %v395
      %v1213 = vunpack.c.l.b16 %v396
      %v1214 = vunpack.c.h.b16 %v396
      %v1215 = vunpack.c.l.b16 %v397
      %v1216 = vunpack.c.h.b16 %v397
      %v1217 = vunpack.c.l.b16 %v398
      %v1218 = vunpack.c.h.b16 %v398
      %v1219 = vunpack.c.l.b16 %v399
      %v1220 = vunpack.c.h.b16 %v399
      %v1221 = vunpack.c.l.b16 %v400
      %v1222 = vunpack.c.h.b16 %v400
      %v1223 = vunpack.c.l.b16 %v401
      %v1224 = vunpack.c.h.b16 %v401
      %v1225 = vunpack.c.l.b16 %v402
      %v1226 = vunpack.c.h.b16 %v402
      %v1227 = vunpack.c.l.b16 %v403
      %v1228 = vunpack.c.h.b16 %v403
      %v1229 = vunpack.c.l.b16 %v404
      %v1230 = vunpack.c.h.b16 %v404
      %v1231 = vunpack.c.l.b16 %v405
      %v1232 = vunpack.c.h.b16 %v405
      %v1233 = vunpack.c.l.b16 %v406
      %v1234 = vunpack.c.h.b16 %v406
      %v1235 = vunpack.c.l.b16 %v407
      %v1236 = vunpack.c.h.b16 %v407
      %v1237 = vunpack.c.l.b16 %v408
      %v1238 = vunpack.c.h.b16 %v408
      %v1239 = vunpack.c.l.b16 %v409
      %v1240 = vunpack.c.h.b16 %v409
      %v1241 = vunpack.c.l.b16 %v410
      %v1242 = vunpack.c.h.b16 %v410
      %v1243 = vunpack.c.l.b16 %v411
      %v1244 = vunpack.c.h.b16 %v411
      %v1245 = vunpack.c.l.b16 %v412
      %v1246 = vunpack.c.h.b16 %v412
      %v1247 = vunpack.c.l.b16 %v413
      %v1248 = vunpack.c.h.b16 %v413
      %v1249 = vunpack.c.l.b16 %v414
      %v1250 = vunpack.c.h.b16 %v414
      %v1251 = vunpack.c.l.b16 %v415
      %v1252 = vunpack.c.h.b16 %v415
      %v1253 = vunpack.c.l.b16 %v416
      %v1254 = vunpack.c.h.b16 %v416
      %v1255 = vunpack.c.l.b16 %v417
      %v1256 = vunpack.c.h.b16 %v417
      %v1257 = vunpack.c.l.b16 %v418
      %v1258 = vunpack.c.h.b16 %v418
      %v1259 = vunpack.c.l.b16 %v419
      %v1260 = vunpack.c.h.b16 %v419
      %v1261 = vunpack.c.l.b16 %v420
      %v1262 = vunpack.c.h.b16 %v420
      %v1263 = vunpack.c.l.b16 %v421
      %v1264 = vunpack.c.h.b16 %v421
      %v1265 = vunpack.c.l.b16 %v422
      %v1266 = vunpack.c.h.b16 %v422
      %v1267 = vunpack.c.l.b16 %v423
      %v1268 = vunpack.c.h.b16 %v423
      %v1269 = vunpack.c.l.b16 %v424
      %v1270 = vunpack.c.h.b16 %v424
      %v1271 = vunpack.c.l.b16 %v425
      %v1272 = vunpack.c.h.b16 %v425
      %v1273 = vunpack.c.l.b16 %v426
      %v1274 = vunpack.c.h.b16 %v426
      %v1275 = vunpack.c.l.b16 %v427
      %v1276 = vunpack.c.h.b16 %v427
      %v1277 = vunpack.c.l.b16 %v428
      %v1278 = vunpack.c.h.b16 %v428
      %v1279 = vunpack.c.l.b16 %v429
      %v1280 = vunpack.c.h.b16 %v429
      %v1281 = vunpack.c.l.b16 %v430
      %v1282 = vunpack.c.h.b16 %v430
      %v1283 = vunpack.c.l.b16 %v431
      %v1284 = vunpack.c.h.b16 %v431
      %v1285 = vunpack.c.l.b16 %v432
      %v1286 = vunpack.c.h.b16 %v432
      %v1287 = vunpack.c.l.b16 %v433
      %v1288 = vunpack.c.h.b16 %v433
      %v1289 = vunpack.c.l.b16 %v434
      %v1290 = vunpack.c.h.b16 %v434
      %v1291 = vunpack.c.l.b16 %v435
      %v1292 = vunpack.c.h.b16 %v435
      %v1293 = vunpack.c.l.b16 %v436
      %v1294 = vunpack.c.h.b16 %v436
      %v1295 = vunpack.c.l.b16 %v437
      %v1296 = vunpack.c.h.b16 %v437
      %v1297 = vunpack.c.l.b16 %v438
      %v1298 = vunpack.c.h.b16 %v438
      %v1299 = vunpack.c.l.b16 %v439
      %v1300 = vunpack.c.h.b16 %v439
      %v1301 = vunpack.c.l.b16 %v440
      %v1302 = vunpack.c.h.b16 %v440
      %v1303 = vunpack.c.l.b16 %v441
      %v1304 = vunpack.c.h.b16 %v441
      %v1305 = vunpack.c.l.b16 %v442
      %v1306 = vunpack.c.h.b16 %v442
      %v1307 = vunpack.c.l.b16 %v443
      %v1308 = vunpack.c.h.b16 %v443
      %v1309 = vunpack.c.l.b16 %v444
      %v1310 = vunpack.c.h.b16 %v444
      %v1311 = vunpack.c.l.b16 %v445
      %v1312 = vunpack.c.h.b16 %v445
      %v1313 = vunpack.c.l.b16 %v446
      %v1314 = vunpack.c.h.b16 %v446
      %v1315 = vunpack.c.l.b16 %v447
      %v1316 = vunpack.c.h.b16 %v447
      %v1317 = vunpack.c.l.b16 %v448
      %v1318 = vunpack.c.h.b16 %v448
      %v1319 = vunpack.c.l.b16 %v449
      %v1320 = vunpack.c.h.b16 %v449
      %v1321 = vunpack.c.l.b16 %v450
      %v1322 = vunpack.c.h.b16 %v450
      %v1323 = vunpack.c.l.b16 %v451
      %v1324 = vunpack.c.h.b16 %v451
      %v1325 = vunpack.c.l.b16 %v452
      %v1326 = vunpack.c.h.b16 %v452
      %v1327 = vunpack.c.l.b16 %v453
      %v1328 = vunpack.c.h.b16 %v453
      %v1329 = vunpack.c.l.b16 %v454
      %v1330 = vunpack.c.h.b16 %v454
      %v1331 = vunpack.c.l.b16 %v455
      %v1332 = vunpack.c.h.b16 %v455
      %v1333 = vunpack.c.l.b16 %v456
      %v1334 = vunpack.c.h.b16 %v456
      %v1335 = vunpack.c.l.b16 %v457
      %v1336 = vunpack.c.h.b16 %v457
      %v1337 = vunpack.c.l.b16 %v458
      %v1338 = vunpack.c.h.b16 %v458
      %v1339 = vunpack.c.l.b16 %v459
      %v1340 = vunpack.c.h.b16 %v459
      %v1341 = vunpack.c.l.b16 %v460
      %v1342 = vunpack.c.h.b16 %v460
      %v1343 = vunpack.c.l.b16 %v461
      %v1344 = vunpack.c.h.b16 %v461
      %v1345 = vunpack.c.l.b16 %v462
      %v1346 = vunpack.c.h.b16 %v462
      %v1347 = vunpack.c.l.b16 %v463
      %v1348 = vunpack.c.h.b16 %v463
      %v1349 = vunpack.c.l.b16 %v464
      %v1350 = vunpack.c.h.b16 %v464
      %v1351 = vunpack.c.l.b16 %v465
      %v1352 = vunpack.c.h.b16 %v465
      %v1353 = vpack.c.b16 %v779, %v777
      %v1354 = vpack.c.b16 %v780, %v778
      %v1355 = vpack.c.b16 %v783, %v781
      %v1356 = vpack.c.b16 %v784, %v782
      %v1357 = vpack.c.b16 %v787, %v785
      %v1358 = vpack.c.b16 %v788, %v786
      %v1359 = vpack.c.b16 %v791, %v789
      %v1360 = vpack.c.b16 %v792, %v790
      %v1361 = vpack.c.b16 %v795, %v793
      %v1362 = vpack.c.b16 %v796, %v794
      %v1363 = vpack.c.b16 %v799, %v797
      %v1364 = vpack.c.b16 %v800, %v798
      %v1365 = vpack.c.b16 %v803, %v801
      %v1366 = vpack.c.b16 %v804, %v802
      %v1367 = vpack.c.b16 %v807, %v805
      %v1368 = vpack.c.b16 %v808, %v806
      %v1369 = vpack.c.b16 %v811, %v809
      %v1370 = vpack.c.b16 %v812, %v810
      %v1371 = vpack.c.b16 %v815, %v813
      %v1372 = vpack.c.b16 %v816, %v814
      %v1373 = vpack.c.b16 %v819, %v817
      %v1374 = vpack.c.b16 %v820, %v818
      %v1375 = vpack.c.b16 %v823, %v821
      %v1376 = vpack.c.b16 %v824, %v822
      %v1377 = vpack.c.b16 %v827, %v825
      %v1378 = vpack.c.b16 %v828, %v826
      %v1379 = vpack.c.b16 %v831, %v829
      %v1380 = vpack.c.b16 %v832, %v830
      %v1381 = vpack.c.b16 %v835, %v833
      %v1382 = vpack.c.b16 %v836, %v834
      %v1383 = vpack.c.b16 %v839, %v837
      %v1384 = vpack.c.b16 %v840, %v838
      %v1385 = vpack.c.b16 %v843, %v841
      %v1386 = vpack.c.b16 %v844, %v842
      %v1387 = vpack.c.b16 %v847, %v845
      %v1388 = vpack.c.b16 %v848, %v846
      %v1389 = vpack.c.b16 %v851, %v849
      %v1390 = vpack.c.b16 %v852, %v850
      %v1391 = vpack.c.b16 %v855, %v853
      %v1392 = vpack.c.b16 %v856, %v854
      %v1393 = vpack.c.b16 %v859, %v857
      %v1394 = vpack.c.b16 %v860, %v858
      %v1395 = vpack.c.b16 %v863, %v861
      %v1396 = vpack.c.b16 %v864, %v862
      %v1397 = vpack.c.b16 %v867, %v865
      %v1398 = vpack.c.b16 %v868, %v866
      %v1399 = vpack.c.b16 %v871, %v869
      %v1400 = vpack.c.b16 %v872, %v870
      %v1401 = vpack.c.b16 %v875, %v873
      %v1402 = vpack.c.b16 %v876, %v874
      %v1403 = vpack.c.b16 %v879, %v877
      %v1404 = vpack.c.b16 %v880, %v878
      %v1405 = vpack.c.b16 %v883, %v881
      %v1406 = vpack.c.b16 %v884, %v882
      %v1407 = vpack.c.b16 %v887, %v885
      %v1408 = vpack.c.b16 %v888, %v886
      %v1409 = vpack.c.b16 %v891, %v889
      %v1410 = vpack.c.b16 %v892, %v890
      %v1411 = vpack.c.b16 %v895, %v893
      %v1412 = vpack.c.b16 %v896, %v894
      %v1413 = vpack.c.b16 %v899, %v897
      %v1414 = vpack.c.b16 %v900, %v898
      %v1415 = vpack.c.b16 %v903, %v901
      %v1416 = vpack.c.b16 %v904, %v902
      %v1417 = vpack.c.b16 %v907, %v905
      %v1418 = vpack.c.b16 %v908, %v906
      %v1419 = vpack.c.b16 %v911, %v909
      %v1420 = vpack.c.b16 %v912, %v910
      %v1421 = vpack.c.b16 %v915, %v913
      %v1422 = vpack.c.b16 %v916, %v914
      %v1423 = vpack.c.b16 %v919, %v917
      %v1424 = vpack.c.b16 %v920, %v918
      %v1425 = vpack.c.b16 %v923, %v921
      %v1426 = vpack.c.b16 %v924, %v922
      %v1427 = vpack.c.b16 %v927, %v925
      %v1428 = vpack.c.b16 %v928, %v926
      %v1429 = vpack.c.b16 %v931, %v929
      %v1430 = vpack.c.b16 %v932, %v930
      %v1431 = vpack.c.b16 %v935, %v933
      %v1432 = vpack.c.b16 %v936, %v934
      %v1433 = vpack.c.b16 %v939, %v937
      %v1434 = vpack.c.b16 %v940, %v938
      %v1435 = vpack.c.b16 %v943, %v941
      %v1436 = vpack.c.b16 %v944, %v942
      %v1437 = vpack.c.b16 %v947, %v945
      %v1438 = vpack.c.b16 %v948, %v946
      %v1439 = vpack.c.b16 %v951, %v949
      %v1440 = vpack.c.b16 %v952, %v950
      %v1441 = vpack.c.b16 %v955, %v953
      %v1442 = vpack.c.b16 %v956, %v954
      %v1443 = vpack.c.b16 %v959, %v957
      %v1444 = vpack.c.b16 %v960, %v958
      %v1445 = vpack.c.b16 %v963, %v961
      %v1446 = vpack.c.b16 %v964, %v962
      %v1447 = vpack.c.b16 %v967, %v965
      %v1448 = vpack.c.b16 %v968, %v966
      %v1449 = vpack.c.b16 %v971, %v969
      %v1450 = vpack.c.b16 %v972, %v970
      %v1451 = vpack.c.b16 %v975, %v973
      %v1452 = vpack.c.b16 %v976, %v974
      %v1453 = vpack.c.b16 %v979, %v977
      %v1454 = vpack.c.b16 %v980, %v978
      %v1455 = vpack.c.b16 %v983, %v981
      %v1456 = vpack.c.b16 %v984, %v982
      %v1457 = vpack.c.b16 %v987, %v985
      %v1458 = vpack.c.b16 %v988, %v986
      %v1459 = vpack.c.b16 %v991, %v989
      %v1460 = vpack.c.b16 %v992, %v990
      %v1461 = vpack.c.b16 %v995, %v993
      %v1462 = vpack.c.b16 %v996, %v994
      %v1463 = vpack.c.b16 %v999, %v997
      %v1464 = vpack.c.b16 %v1000, %v998
      %v1465 = vpack.c.b16 %v1003, %v1001
      %v1466 = vpack.c.b16 %v1004, %v1002
      %v1467 = vpack.c.b16 %v1007, %v1005
      %v1468 = vpack.c.b16 %v1008, %v1006
      %v1469 = vpack.c.b16 %v1011, %v1009
      %v1470 = vpack.c.b16 %v1012, %v1010
      %v1471 = vpack.c.b16 %v1015, %v1013
      %v1472 = vpack.c.b16 %v1016, %v1014
      %v1473 = vpack.c.b16 %v1019, %v1017
      %v1474 = vpack.c.b16 %v1020, %v1018
      %v1475 = vpack.c.b16 %v1023, %v1021
      %v1476 = vpack.c.b16 %v1024, %v1022
      %v1477 = vpack.c.b16 %v1027, %v1025
      %v1478 = vpack.c.b16 %v1028, %v1026
      %v1479 = vpack.c.b16 %v1031, %v1029
      %v1480 = vpack.c.b16 %v1032, %v1030
      %v1481 = vpack.c.b16 %v1035, %v1033
      %v1482 = vpack.c.b16 %v1036, %v1034
      %v1483 = vpack.c.b16 %v1039, %v1037
      %v1484 = vpack.c.b16 %v1040, %v1038
      %v1485 = vpack.c.b16 %v1043, %v1041
      %v1486 = vpack.c.b16 %v1044, %v1042
      %v1487 = vpack.c.b16 %v1047, %v1045
      %v1488 = vpack.c.b16 %v1048, %v1046
      %v1489 = vpack.c.b16 %v1051, %v1049
      %v1490 = vpack.c.b16 %v1052, %v1050
      %v1491 = vpack.c.b16 %v1055, %v1053
      %v1492 = vpack.c.b16 %v1056, %v1054
      %v1493 = vpack.c.b16 %v1059, %v1057
      %v1494 = vpack.c.b16 %v1060, %v1058
      %v1495 = vpack.c.b16 %v1063, %v1061
      %v1496 = vpack.c.b16 %v1064, %v1062
      %v1497 = vpack.c.b16 %v1067, %v1065
      %v1498 = vpack.c.b16 %v1068, %v1066
      %v1499 = vpack.c.b16 %v1071, %v1069
      %v1500 = vpack.c.b16 %v1072, %v1070
      %v1501 = vpack.c.b16 %v1075, %v1073
      %v1502 = vpack.c.b16 %v1076, %v1074
      %v1503 = vpack.c.b16 %v1079, %v1077
      %v1504 = vpack.c.b16 %v1080, %v1078
      %v1505 = vpack.c.b16 %v1083, %v1081
      %v1506 = vpack.c.b16 %v1084, %v1082
      %v1507 = vpack.c.b16 %v1087, %v1085
      %v1508 = vpack.c.b16 %v1088, %v1086
      %v1509 = vpack.c.b16 %v1091, %v1089
      %v1510 = vpack.c.b16 %v1092, %v1090
      %v1511 = vpack.c.b16 %v1095, %v1093
      %v1512 = vpack.c.b16 %v1096, %v1094
      %v1513 = vpack.c.b16 %v1099, %v1097
      %v1514 = vpack.c.b16 %v1100, %v1098
      %v1515 = vpack.c.b16 %v1103, %v1101
      %v1516 = vpack.c.b16 %v1104, %v1102
      %v1517 = vpack.c.b16 %v1107, %v1105
      %v1518 = vpack.c.b16 %v1108, %v1106
      %v1519 = vpack.c.b16 %v1111, %v1109
      %v1520 = vpack.c.b16 %v1112, %v1110
      %v1521 = vpack.c.b16 %v1115, %v1113
      %v1522 = vpack.c.b16 %v1116, %v1114
      %v1523 = vpack.c.b16 %v1119, %v1117
      %v1524 = vpack.c.b16 %v1120, %v1118
      %v1525 = vpack.c.b16 %v1123, %v1121
      %v1526 = vpack.c.b16 %v1124, %v1122
      %v1527 = vpack.c.b16 %v1127, %v1125
      %v1528 = vpack.c.b16 %v1128, %v1126
      %v1529 = vpack.c.b16 %v1131, %v1129
      %v1530 = vpack.c.b16 %v1132, %v1130
      %v1531 = vpack.c.b16 %v1135, %v1133
      %v1532 = vpack.c.b16 %v1136, %v1134
      %v1533 = vpack.c.b16 %v1139, %v1137
      %v1534 = vpack.c.b16 %v1140, %v1138
      %v1535 = vpack.c.b16 %v1143, %v1141
      %v1536 = vpack.c.b16 %v1144, %v1142
      %v1537 = vpack.c.b16 %v1147, %v1145
      %v1538 = vpack.c.b16 %v1148, %v1146
      %v1539 = vpack.c.b16 %v1151, %v1149
      %v1540 = vpack.c.b16 %v1152, %v1150
      %v1541 = vpack.c.b16 %v1155, %v1153
      %v1542 = vpack.c.b16 %v1156, %v1154
      %v1543 = vpack.c.b16 %v1159, %v1157
      %v1544 = vpack.c.b16 %v1160, %v1158
      %v1545 = vpack.c.b16 %v1163, %v1161
      %v1546 = vpack.c.b16 %v1164, %v1162
      %v1547 = vpack.c.b16 %v1167, %v1165
      %v1548 = vpack.c.b16 %v1168, %v1166
      %v1549 = vpack.c.b16 %v1171, %v1169
      %v1550 = vpack.c.b16 %v1172, %v1170
      %v1551 = vpack.c.b16 %v1175, %v1173
      %v1552 = vpack.c.b16 %v1176, %v1174
      %v1553 = vpack.c.b16 %v1179, %v1177
      %v1554 = vpack.c.b16 %v1180, %v1178
      %v1555 = vpack.c.b16 %v1183, %v1181
      %v1556 = vpack.c.b16 %v1184, %v1182
      %v1557 = vpack.c.b16 %v1187, %v1185
      %v1558 = vpack.c.b16 %v1188, %v1186
      %v1559 = vpack.c.b16 %v1191, %v1189
      %v1560 = vpack.c.b16 %v1192, %v1190
      %v1561 = vpack.c.b16 %v1195, %v1193
      %v1562 = vpack.c.b16 %v1196, %v1194
      %v1563 = vpack.c.b16 %v1199, %v1197
      %v1564 = vpack.c.b16 %v1200, %v1198
      %v1565 = vpack.c.b16 %v1203, %v1201
      %v1566 = vpack.c.b16 %v1204, %v1202
      %v1567 = vpack.c.b16 %v1207, %v1205
      %v1568 = vpack.c.b16 %v1208, %v1206
      %v1569 = vpack.c.b16 %v1211, %v1209
      %v1570 = vpack.c.b16 %v1212, %v1210
      %v1571 = vpack.c.b16 %v1215, %v1213
      %v1572 = vpack.c.b16 %v1216, %v1214
      %v1573 = vpack.c.b16 %v1219, %v1217
      %v1574 = vpack.c.b16 %v1220, %v1218
      %v1575 = vpack.c.b16 %v1223, %v1221
      %v1576 = vpack.c.b16 %v1224, %v1222
      %v1577 = vpack.c.b16 %v1227, %v1225
      %v1578 = vpack.c.b16 %v1228, %v1226
      %v1579 = vpack.c.b16 %v1231, %v1229
      %v1580 = vpack.c.b16 %v1232, %v1230
      %v1581 = vpack.c.b16 %v1235, %v1233
      %v1582 = vpack.c.b16 %v1236, %v1234
      %v1583 = vpack.c.b16 %v1239, %v1237
      %v1584 = vpack.c.b16 %v1240, %v1238
      %v1585 = vpack.c.b16 %v1243, %v1241
      %v1586 = vpack.c.b16 %v1244, %v1242
      %v1587 = vpack.c.b16 %v1247, %v1245
      %v1588 = vpack.c.b16 %v1248, %v1246
      %v1589 = vpack.c.b16 %v1251, %v1249
      %v1590 = vpack.c.b16 %v1252, %v1250
      %v1591 = vpack.c.b16 %v1255, %v1253
      %v1592 = vpack.c.b16 %v1256, %v1254
      %v1593 = vpack.c.b16 %v1259, %v1257
      %v1594 = vpack.c.b16 %v1260, %v1258
      %v1595 = vpack.c.b16 %v1263, %v1261
      %v1596 = vpack.c.b16 %v1264, %v1262
      %v1597 = vpack.c.b16 %v1267, %v1265
      %v1598 = vpack.c.b16 %v1268, %v1266
      %v1599 = vpack.c.b16 %v1271, %v1269
      %v1600 = vpack.c.b16 %v1272, %v1270
      %v1601 = vpack.c.b16 %v1275, %v1273
      %v1602 = vpack.c.b16 %v1276, %v1274
      %v1603 = vpack.c.b16 %v1279, %v1277
      %v1604 = vpack.c.b16 %v1280, %v1278
      %v1605 = vpack.c.b16 %v1283, %v1281
      %v1606 = vpack.c.b16 %v1284, %v1282
      %v1607 = vpack.c.b16 %v1287, %v1285
      %v1608 = vpack.c.b16 %v1288, %v1286
      %v1609 = vpack.c.b16 %v1291, %v1289
      %v1610 = vpack.c.b16 %v1292, %v1290
      %v1611 = vpack.c.b16 %v1295, %v1293
      %v1612 = vpack.c.b16 %v1296, %v1294
      %v1613 = vpack.c.b16 %v1299, %v1297
      %v1614 = vpack.c.b16 %v1300, %v1298
      %v1615 = vpack.c.b16 %v1303, %v1301
      %v1616 = vpack.c.b16 %v1304, %v1302
      %v1617 = vpack.c.b16 %v1307, %v1305
      %v1618 = vpack.c.b16 %v1308, %v1306
      %v1619 = vpack.c.b16 %v1311, %v1309
      %v1620 = vpack.c.b16 %v1312, %v1310
      %v1621 = vpack.c.b16 %v1315, %v1313
      %v1622 = vpack.c.b16 %v1316, %v1314
      %v1623 = vpack.c.b16 %v1319, %v1317
      %v1624 = vpack.c.b16 %v1320, %v1318
      %v1625 = vpack.c.b16 %v1323, %v1321
      %v1626 = vpack.c.b16 %v1324, %v1322
      %v1627 = vpack.c.b16 %v1327, %v1325
      %v1628 = vpack.c.b16 %v1328, %v1326
      %v1629 = vpack.c.b16 %v1331, %v1329
      %v1630 = vpack.c.b16 %v1332, %v1330
      %v1631 = vpack.c.b16 %v1335, %v1333
      %v1632 = vpack.c.b16 %v1336, %v1334
      %v1633 = vpack.c.b16 %v1339, %v1337
      %v1634 = vpack.c.b16 %v1340, %v1338
      %v1635 = vpack.c.b16 %v1343, %v1341
      %v1636 = vpack.c.b16 %v1344, %v1342
      %v1637 = vpack.c.b16 %v1347, %v1345
      %v1638 = vpack.c.b16 %v1348, %v1346
      %v1639 = vpack.c.b16 %v1351, %v1349
      %v1640 = vpack.c.b16 %v1352, %v1350
      %v1804 = vunpack.c.l.b16 %v466
      %v1805 = vunpack.c.l.b16 %v467
      %v1806 = vunpack.c.l.b16 %v468
      %v1807 = vunpack.c.l.b16 %v469
      %v1808 = vunpack.c.l.b16 %v470
      %v1809 = vunpack.c.l.b16 %v471
      %v1810 = vunpack.c.l.b16 %v472
      %v1811 = vunpack.c.l.b16 %v473
      %v1812 = vunpack.c.l.b16 %v474
      %v1813 = vunpack.c.l.b16 %v475
      %v1814 = vunpack.c.l.b16 %v476
      %v1815 = vunpack.c.l.b16 %v477
      %v1816 = vunpack.c.l.b16 %v478
      %v1817 = vunpack.c.l.b16 %v479
      %v1818 = vunpack.c.l.b16 %v480
      %v1819 = vunpack.c.l.b16 %v481
      %v1820 = vunpack.c.l.b16 %v482
      %v1821 = vunpack.c.l.b16 %v483
      %v1822 = vunpack.c.l.b16 %v484
      %v1823 = vpack.c.b16 %v1805, %v1804
      %v1824 = vpack.c.b16 %v1807, %v1806
      %v1825 = vpack.c.b16 %v1809, %v1808
      %v1826 = vpack.c.b16 %v1811, %v1810
      %v1827 = vpack.c.b16 %v1813, %v1812
      %v1828 = vpack.c.b16 %v1815, %v1814
      %v1829 = vpack.c.b16 %v1817, %v1816
      %v1830 = vpack.c.b16 %v1819, %v1818
      %v1831 = vpack.c.b16 %v1821, %v1820
      %v1832 = vpack.c.b16 %v1822, %v1822
      %vm1842 = vcmask 154624
      %v1844 = vsel %vm1842, %v1354, 0
      %v1847 = vsel %vm1842, %v1356, 0
      %v1850 = vsel %vm1842, %v1358, 0
      %v1853 = vsel %vm1842, %v1360, 0
      %v1856 = vsel %vm1842, %v1362, 0
      %v1859 = vsel %vm1842, %v1364, 0
      %v1862 = vsel %vm1842, %v1366, 0
      %v1865 = vsel %vm1842, %v1368, 0
      %v1868 = vsel %vm1842, %v1370, 0
      %v1871 = vsel %vm1842, %v1372, 0
      %v1874 = vsel %vm1842, %v1374, 0
      %v1877 = vsel %vm1842, %v1376, 0
      %v1880 = vsel %vm1842, %v1378, 0
      %v1883 = vsel %vm1842, %v1380, 0
      %v1886 = vsel %vm1842, %v1382, 0
      %v1889 = vsel %vm1842, %v1384, 0
      %v1892 = vsel %vm1842, %v1386, 0
      %v1895 = vsel %vm1842, %v1388, 0
      %v1898 = vsel %vm1842, %v1390, 0
      %v1901 = vsel %vm1842, %v1392, 0
      %v1904 = vsel %vm1842, %v1394, 0
      %v1907 = vsel %vm1842, %v1396, 0
      %v1910 = vsel %vm1842, %v1398, 0
      %v1913 = vsel %vm1842, %v1400, 0
      %v1916 = vsel %vm1842, %v1402, 0
      %v1919 = vsel %vm1842, %v1404, 0
      %v1922 = vsel %vm1842, %v1406, 0
      %v1925 = vsel %vm1842, %v1408, 0
      %v1928 = vsel %vm1842, %v1410, 0
      %v1931 = vsel %vm1842, %v1412, 0
      %v1934 = vsel %vm1842, %v1414, 0
      %v1937 = vsel %vm1842, %v1416, 0
      %v1940 = vsel %vm1842, %v1418, 0
      %v1943 = vsel %vm1842, %v1420, 0
      %v1946 = vsel %vm1842, %v1422, 0
      %v1949 = vsel %vm1842, %v1424, 0
      %v1952 = vsel %vm1842, %v1426, 0
      %v1955 = vsel %vm1842, %v1428, 0
      %v1958 = vsel %vm1842, %v1430, 0
      %v1961 = vsel %vm1842, %v1432, 0
      %v1964 = vsel %vm1842, %v1434, 0
      %v1967 = vsel %vm1842, %v1436, 0
      %v1970 = vsel %vm1842, %v1438, 0
      %v1973 = vsel %vm1842, %v1440, 0
      %v1976 = vsel %vm1842, %v1442, 0
      %v1979 = vsel %vm1842, %v1444, 0
      %v1982 = vsel %vm1842, %v1446, 0
      %v1985 = vsel %vm1842, %v1448, 0
      %v1988 = vsel %vm1842, %v1450, 0
      %v1991 = vsel %vm1842, %v1452, 0
      %v1994 = vsel %vm1842, %v1454, 0
      %v1997 = vsel %vm1842, %v1456, 0
      %v2000 = vsel %vm1842, %v1458, 0
      %v2003 = vsel %vm1842, %v1460, 0
      %v2006 = vsel %vm1842, %v1462, 0
      %v2009 = vsel %vm1842, %v1464, 0
      %v2012 = vsel %vm1842, %v1466, 0
      %v2015 = vsel %vm1842, %v1468, 0
      %v2018 = vsel %vm1842, %v1470, 0
      %v2021 = vsel %vm1842, %v1472, 0
      %v2024 = vsel %vm1842, %v1474, 0
      %v2027 = vsel %vm1842, %v1476, 0
      %v2030 = vsel %vm1842, %v1478, 0
      %v2033 = vsel %vm1842, %v1480, 0
      %v2036 = vsel %vm1842, %v1482, 0
      %v2039 = vsel %vm1842, %v1484, 0
      %v2042 = vsel %vm1842, %v1486, 0
      %v2045 = vsel %vm1842, %v1488, 0
      %v2048 = vsel %vm1842, %v1490, 0
      %v2051 = vsel %vm1842, %v1492, 0
      %v2054 = vsel %vm1842, %v1494, 0
      %v2057 = vsel %vm1842, %v1496, 0
      %v2060 = vsel %vm1842, %v1498, 0
      %v2063 = vsel %vm1842, %v1500, 0
      %v2066 = vsel %vm1842, %v1502, 0
      %v2069 = vsel %vm1842, %v1504, 0
      %v2072 = vsel %vm1842, %v1506, 0
      %v2075 = vsel %vm1842, %v1508, 0
      %v2078 = vsel %vm1842, %v1510, 0
      %v2081 = vsel %vm1842, %v1512, 0
      %v2084 = vsel %vm1842, %v1514, 0
      %v2087 = vsel %vm1842, %v1516, 0
      %v2090 = vsel %vm1842, %v1518, 0
      %v2093 = vsel %vm1842, %v1520, 0
      %v2096 = vsel %vm1842, %v1522, 0
      %v2099 = vsel %vm1842, %v1524, 0
      %v2102 = vsel %vm1842, %v1526, 0
      %v2105 = vsel %vm1842, %v1528, 0
      %v2108 = vsel %vm1842, %v1530, 0
      %v2111 = vsel %vm1842, %v1532, 0
      %v2114 = vsel %vm1842, %v1534, 0
      %v2117 = vsel %vm1842, %v1536, 0
      %v2120 = vsel %vm1842, %v1538, 0
      %v2123 = vsel %vm1842, %v1540, 0
      %v2126 = vsel %vm1842, %v1542, 0
      %v2129 = vsel %vm1842, %v1544, 0
      %v2132 = vsel %vm1842, %v1546, 0
      %v2135 = vsel %vm1842, %v1548, 0
      %v2138 = vsel %vm1842, %v1550, 0
      %v2141 = vsel %vm1842, %v1552, 0
      %v2144 = vsel %vm1842, %v1554, 0
      %v2147 = vsel %vm1842, %v1556, 0
      %v2150 = vsel %vm1842, %v1558, 0
      %v2153 = vsel %vm1842, %v1560, 0
      %v2156 = vsel %vm1842, %v1562, 0
      %v2159 = vsel %vm1842, %v1564, 0
      %v2162 = vsel %vm1842, %v1566, 0
      %v2165 = vsel %vm1842, %v1568, 0
      %v2168 = vsel %vm1842, %v1570, 0
      %v2171 = vsel %vm1842, %v1572, 0
      %v2174 = vsel %vm1842, %v1574, 0
      %v2177 = vsel %vm1842, %v1576, 0
      %v2180 = vsel %vm1842, %v1578, 0
      %v2183 = vsel %vm1842, %v1580, 0
      %v2186 = vsel %vm1842, %v1582, 0
      %v2189 = vsel %vm1842, %v1584, 0
      %v2192 = vsel %vm1842, %v1586, 0
      %v2195 = vsel %vm1842, %v1588, 0
      %v2198 = vsel %vm1842, %v1590, 0
      %v2201 = vsel %vm1842, %v1592, 0
      %v2204 = vsel %vm1842, %v1594, 0
      %v2207 = vsel %vm1842, %v1596, 0
      %v2210 = vsel %vm1842, %v1598, 0
      %v2213 = vsel %vm1842, %v1600, 0
      %v2216 = vsel %vm1842, %v1602, 0
      %v2219 = vsel %vm1842, %v1604, 0
      %v2222 = vsel %vm1842, %v1606, 0
      %v2225 = vsel %vm1842, %v1608, 0
      %v2228 = vsel %vm1842, %v1610, 0
      %v2231 = vsel %vm1842, %v1612, 0
      %v2234 = vsel %vm1842, %v1614, 0
      %v2237 = vsel %vm1842, %v1616, 0
      %v2240 = vsel %vm1842, %v1618, 0
      %v2243 = vsel %vm1842, %v1620, 0
      %v2246 = vsel %vm1842, %v1622, 0
      %v2249 = vsel %vm1842, %v1624, 0
      %v2252 = vsel %vm1842, %v1626, 0
      %v2255 = vsel %vm1842, %v1628, 0
      %v2258 = vsel %vm1842, %v1630, 0
      %v2261 = vsel %vm1842, %v1632, 0
      %v2264 = vsel %vm1842, %v1634, 0
      %v2267 = vsel %vm1842, %v1636, 0
      %v2270 = vsel %vm1842, %v1638, 0
      %v2273 = vsel %vm1842, %v1640, 0
      %vm2275 = vcmask 1040384
      %vm2276 = vcmask 1041408
      %v2277 = vsel %vm2275, 4294967295, 65535
      %v2278 = vsel %vm2276, %v2277, 0
      %v2280 = vand.u32 %v1832, %v2278
      %2282 = vmatpush.bf16.msra.mxu0 %v1830
      %2283 = vmatpush.bf16.msra.mxu0 %v1829
      %2284 = vmatpush.bf16.msra.mxu0 %v1828
      %2285 = vmatpush.bf16.msra.mxu0 %v1827
      %2286 = vmatpush.bf16.msra.mxu0 %v1826
      %2287 = vmatpush.bf16.msra.mxu0 %v1825
      %2288 = vmatpush.bf16.msra.mxu0 %v1824
      %2289 = vmatpush.bf16.msra.mxu0 %v1823
      %2290 = vmatmul.bf16.gmra.mxu0 %v1353
      %v2291 = vpop.f32.mrf.mxu0
      %v2292 = vadd.f32 %v487, %v2291
      %v2293 = vpop.f32.mrf.mxu0
      %v2294 = vadd.f32 %v487, %v2293
      %2295 = vmatmul.bf16.gmra.mxu0 %v1355
      %v2296 = vpop.f32.mrf.mxu0
      %v2297 = vadd.f32 %v487, %v2296
      %v2298 = vpop.f32.mrf.mxu0
      %v2299 = vadd.f32 %v487, %v2298
      %2300 = vmatmul.bf16.gmra.mxu0 %v1357
      %v2301 = vpop.f32.mrf.mxu0
      %v2302 = vadd.f32 %v487, %v2301
      %v2303 = vpop.f32.mrf.mxu0
      %v2304 = vadd.f32 %v487, %v2303
      %2305 = vmatmul.bf16.gmra.mxu0 %v1359
      %v2306 = vpop.f32.mrf.mxu0
      %v2307 = vadd.f32 %v487, %v2306
      %v2308 = vpop.f32.mrf.mxu0
      %v2309 = vadd.f32 %v487, %v2308
      %2310 = vmatmul.bf16.gmra.mxu0 %v1361
      %v2311 = vpop.f32.mrf.mxu0
      %v2312 = vadd.f32 %v487, %v2311
      %v2313 = vpop.f32.mrf.mxu0
      %v2314 = vadd.f32 %v487, %v2313
      %2315 = vmatmul.bf16.gmra.mxu0 %v1363
      %v2316 = vpop.f32.mrf.mxu0
      %v2317 = vadd.f32 %v487, %v2316
      %v2318 = vpop.f32.mrf.mxu0
      %v2319 = vadd.f32 %v487, %v2318
      %2320 = vmatmul.bf16.gmra.mxu0 %v1365
      %v2321 = vpop.f32.mrf.mxu0
      %v2322 = vadd.f32 %v487, %v2321
      %v2323 = vpop.f32.mrf.mxu0
      %v2324 = vadd.f32 %v487, %v2323
      %2325 = vmatmul.bf16.gmra.mxu0 %v1367
      %v2326 = vpop.f32.mrf.mxu0
      %v2327 = vadd.f32 %v487, %v2326
      %v2328 = vpop.f32.mrf.mxu0
      %v2329 = vadd.f32 %v487, %v2328
      %2330 = vmatmul.bf16.gmra.mxu0 %v1369
      %v2331 = vpop.f32.mrf.mxu0
      %v2332 = vadd.f32 %v487, %v2331
      %v2333 = vpop.f32.mrf.mxu0
      %v2334 = vadd.f32 %v487, %v2333
      %2335 = vmatmul.bf16.gmra.mxu0 %v1371
      %v2336 = vpop.f32.mrf.mxu0
      %v2337 = vadd.f32 %v487, %v2336
      %v2338 = vpop.f32.mrf.mxu0
      %v2339 = vadd.f32 %v487, %v2338
      %2340 = vmatmul.bf16.gmra.mxu0 %v1373
      %v2341 = vpop.f32.mrf.mxu0
      %v2342 = vadd.f32 %v487, %v2341
      %v2343 = vpop.f32.mrf.mxu0
      %v2344 = vadd.f32 %v487, %v2343
      %2345 = vmatmul.bf16.gmra.mxu0 %v1375
      %v2346 = vpop.f32.mrf.mxu0
      %v2347 = vadd.f32 %v487, %v2346
      %v2348 = vpop.f32.mrf.mxu0
      %v2349 = vadd.f32 %v487, %v2348
      %2350 = vmatmul.bf16.gmra.mxu0 %v1377
      %v2351 = vpop.f32.mrf.mxu0
      %v2352 = vadd.f32 %v487, %v2351
      %v2353 = vpop.f32.mrf.mxu0
      %v2354 = vadd.f32 %v487, %v2353
      %2355 = vmatmul.bf16.gmra.mxu0 %v1379
      %v2356 = vpop.f32.mrf.mxu0
      %v2357 = vadd.f32 %v487, %v2356
      %v2358 = vpop.f32.mrf.mxu0
      %v2359 = vadd.f32 %v487, %v2358
      %2360 = vmatmul.bf16.gmra.mxu0 %v1381
      %v2361 = vpop.f32.mrf.mxu0
      %v2362 = vadd.f32 %v487, %v2361
      %v2363 = vpop.f32.mrf.mxu0
      %v2364 = vadd.f32 %v487, %v2363
      %2365 = vmatmul.bf16.gmra.mxu0 %v1383
      %v2366 = vpop.f32.mrf.mxu0
      %v2367 = vadd.f32 %v487, %v2366
      %v2368 = vpop.f32.mrf.mxu0
      %v2369 = vadd.f32 %v487, %v2368
      %2370 = vmatmul.bf16.gmra.mxu0 %v1385
      %v2371 = vpop.f32.mrf.mxu0
      %v2372 = vadd.f32 %v487, %v2371
      %v2373 = vpop.f32.mrf.mxu0
      %v2374 = vadd.f32 %v487, %v2373
      %2375 = vmatmul.bf16.gmra.mxu0 %v1387
      %v2376 = vpop.f32.mrf.mxu0
      %v2377 = vadd.f32 %v487, %v2376
      %v2378 = vpop.f32.mrf.mxu0
      %v2379 = vadd.f32 %v487, %v2378
      %2380 = vmatmul.bf16.gmra.mxu0 %v1389
      %v2381 = vpop.f32.mrf.mxu0
      %v2382 = vadd.f32 %v487, %v2381
      %v2383 = vpop.f32.mrf.mxu0
      %v2384 = vadd.f32 %v487, %v2383
      %2385 = vmatmul.bf16.gmra.mxu0 %v1391
      %v2386 = vpop.f32.mrf.mxu0
      %v2387 = vadd.f32 %v487, %v2386
      %v2388 = vpop.f32.mrf.mxu0
      %v2389 = vadd.f32 %v487, %v2388
      %2390 = vmatmul.bf16.gmra.mxu0 %v1393
      %v2391 = vpop.f32.mrf.mxu0
      %v2392 = vadd.f32 %v487, %v2391
      %v2393 = vpop.f32.mrf.mxu0
      %v2394 = vadd.f32 %v487, %v2393
      %2395 = vmatmul.bf16.gmra.mxu0 %v1395
      %v2396 = vpop.f32.mrf.mxu0
      %v2397 = vadd.f32 %v487, %v2396
      %v2398 = vpop.f32.mrf.mxu0
      %v2399 = vadd.f32 %v487, %v2398
      %2400 = vmatmul.bf16.gmra.mxu0 %v1397
      %v2401 = vpop.f32.mrf.mxu0
      %v2402 = vadd.f32 %v487, %v2401
      %v2403 = vpop.f32.mrf.mxu0
      %v2404 = vadd.f32 %v487, %v2403
      %2405 = vmatmul.bf16.gmra.mxu0 %v1399
      %v2406 = vpop.f32.mrf.mxu0
      %v2407 = vadd.f32 %v487, %v2406
      %v2408 = vpop.f32.mrf.mxu0
      %v2409 = vadd.f32 %v487, %v2408
      %2410 = vmatmul.bf16.gmra.mxu0 %v1401
      %v2411 = vpop.f32.mrf.mxu0
      %v2412 = vadd.f32 %v487, %v2411
      %v2413 = vpop.f32.mrf.mxu0
      %v2414 = vadd.f32 %v487, %v2413
      %2415 = vmatmul.bf16.gmra.mxu0 %v1403
      %v2416 = vpop.f32.mrf.mxu0
      %v2417 = vadd.f32 %v487, %v2416
      %v2418 = vpop.f32.mrf.mxu0
      %v2419 = vadd.f32 %v487, %v2418
      %2420 = vmatmul.bf16.gmra.mxu0 %v1405
      %v2421 = vpop.f32.mrf.mxu0
      %v2422 = vadd.f32 %v487, %v2421
      %v2423 = vpop.f32.mrf.mxu0
      %v2424 = vadd.f32 %v487, %v2423
      %2425 = vmatmul.bf16.gmra.mxu0 %v1407
      %v2426 = vpop.f32.mrf.mxu0
      %v2427 = vadd.f32 %v487, %v2426
      %v2428 = vpop.f32.mrf.mxu0
      %v2429 = vadd.f32 %v487, %v2428
      %2430 = vmatmul.bf16.gmra.mxu0 %v1409
      %v2431 = vpop.f32.mrf.mxu0
      %v2432 = vadd.f32 %v487, %v2431
      %v2433 = vpop.f32.mrf.mxu0
      %v2434 = vadd.f32 %v487, %v2433
      %2435 = vmatmul.bf16.gmra.mxu0 %v1411
      %v2436 = vpop.f32.mrf.mxu0
      %v2437 = vadd.f32 %v487, %v2436
      %v2438 = vpop.f32.mrf.mxu0
      %v2439 = vadd.f32 %v487, %v2438
      %2440 = vmatmul.bf16.gmra.mxu0 %v1413
      %v2441 = vpop.f32.mrf.mxu0
      %v2442 = vadd.f32 %v487, %v2441
      %v2443 = vpop.f32.mrf.mxu0
      %v2444 = vadd.f32 %v487, %v2443
      %2445 = vmatmul.bf16.gmra.mxu0 %v1415
      %v2446 = vpop.f32.mrf.mxu0
      %v2447 = vadd.f32 %v487, %v2446
      %v2448 = vpop.f32.mrf.mxu0
      %v2449 = vadd.f32 %v487, %v2448
      %2450 = vmatmul.bf16.gmra.mxu0 %v1417
      %v2451 = vpop.f32.mrf.mxu0
      %v2452 = vadd.f32 %v487, %v2451
      %v2453 = vpop.f32.mrf.mxu0
      %v2454 = vadd.f32 %v487, %v2453
      %2455 = vmatmul.bf16.gmra.mxu0 %v1419
      %v2456 = vpop.f32.mrf.mxu0
      %v2457 = vadd.f32 %v487, %v2456
      %v2458 = vpop.f32.mrf.mxu0
      %v2459 = vadd.f32 %v487, %v2458
      %2460 = vmatmul.bf16.gmra.mxu0 %v1421
      %v2461 = vpop.f32.mrf.mxu0
      %v2462 = vadd.f32 %v487, %v2461
      %v2463 = vpop.f32.mrf.mxu0
      %v2464 = vadd.f32 %v487, %v2463
      %2465 = vmatmul.bf16.gmra.mxu0 %v1423
      %v2466 = vpop.f32.mrf.mxu0
      %v2467 = vadd.f32 %v487, %v2466
      %v2468 = vpop.f32.mrf.mxu0
      %v2469 = vadd.f32 %v487, %v2468
      %2470 = vmatmul.bf16.gmra.mxu0 %v1425
      %v2471 = vpop.f32.mrf.mxu0
      %v2472 = vadd.f32 %v487, %v2471
      %v2473 = vpop.f32.mrf.mxu0
      %v2474 = vadd.f32 %v487, %v2473
      %2475 = vmatmul.bf16.gmra.mxu0 %v1427
      %v2476 = vpop.f32.mrf.mxu0
      %v2477 = vadd.f32 %v487, %v2476
      %v2478 = vpop.f32.mrf.mxu0
      %v2479 = vadd.f32 %v487, %v2478
      %2480 = vmatmul.bf16.gmra.mxu0 %v1429
      %v2481 = vpop.f32.mrf.mxu0
      %v2482 = vadd.f32 %v487, %v2481
      %v2483 = vpop.f32.mrf.mxu0
      %v2484 = vadd.f32 %v487, %v2483
      %2485 = vmatmul.bf16.gmra.mxu0 %v1431
      %v2486 = vpop.f32.mrf.mxu0
      %v2487 = vadd.f32 %v487, %v2486
      %v2488 = vpop.f32.mrf.mxu0
      %v2489 = vadd.f32 %v487, %v2488
      %2490 = vmatmul.bf16.gmra.mxu0 %v1433
      %v2491 = vpop.f32.mrf.mxu0
      %v2492 = vadd.f32 %v487, %v2491
      %v2493 = vpop.f32.mrf.mxu0
      %v2494 = vadd.f32 %v487, %v2493
      %2495 = vmatmul.bf16.gmra.mxu0 %v1435
      %v2496 = vpop.f32.mrf.mxu0
      %v2497 = vadd.f32 %v487, %v2496
      %v2498 = vpop.f32.mrf.mxu0
      %v2499 = vadd.f32 %v487, %v2498
      %2500 = vmatmul.bf16.gmra.mxu0 %v1437
      %v2501 = vpop.f32.mrf.mxu0
      %v2502 = vadd.f32 %v487, %v2501
      %v2503 = vpop.f32.mrf.mxu0
      %v2504 = vadd.f32 %v487, %v2503
      %2505 = vmatmul.bf16.gmra.mxu0 %v1439
      %v2506 = vpop.f32.mrf.mxu0
      %v2507 = vadd.f32 %v487, %v2506
      %v2508 = vpop.f32.mrf.mxu0
      %v2509 = vadd.f32 %v487, %v2508
      %2510 = vmatmul.bf16.gmra.mxu0 %v1441
      %v2511 = vpop.f32.mrf.mxu0
      %v2512 = vadd.f32 %v487, %v2511
      %v2513 = vpop.f32.mrf.mxu0
      %v2514 = vadd.f32 %v487, %v2513
      %2515 = vmatmul.bf16.gmra.mxu0 %v1443
      %v2516 = vpop.f32.mrf.mxu0
      %v2517 = vadd.f32 %v487, %v2516
      %v2518 = vpop.f32.mrf.mxu0
      %v2519 = vadd.f32 %v487, %v2518
      %2520 = vmatmul.bf16.gmra.mxu0 %v1445
      %v2521 = vpop.f32.mrf.mxu0
      %v2522 = vadd.f32 %v487, %v2521
      %v2523 = vpop.f32.mrf.mxu0
      %v2524 = vadd.f32 %v487, %v2523
      %2525 = vmatmul.bf16.gmra.mxu0 %v1447
      %v2526 = vpop.f32.mrf.mxu0
      %v2527 = vadd.f32 %v487, %v2526
      %v2528 = vpop.f32.mrf.mxu0
      %v2529 = vadd.f32 %v487, %v2528
      %2530 = vmatmul.bf16.gmra.mxu0 %v1449
      %v2531 = vpop.f32.mrf.mxu0
      %v2532 = vadd.f32 %v487, %v2531
      %v2533 = vpop.f32.mrf.mxu0
      %v2534 = vadd.f32 %v487, %v2533
      %2535 = vmatmul.bf16.gmra.mxu0 %v1451
      %v2536 = vpop.f32.mrf.mxu0
      %v2537 = vadd.f32 %v487, %v2536
      %v2538 = vpop.f32.mrf.mxu0
      %v2539 = vadd.f32 %v487, %v2538
      %2540 = vmatmul.bf16.gmra.mxu0 %v1453
      %v2541 = vpop.f32.mrf.mxu0
      %v2542 = vadd.f32 %v487, %v2541
      %v2543 = vpop.f32.mrf.mxu0
      %v2544 = vadd.f32 %v487, %v2543
      %2545 = vmatmul.bf16.gmra.mxu0 %v1455
      %v2546 = vpop.f32.mrf.mxu0
      %v2547 = vadd.f32 %v487, %v2546
      %v2548 = vpop.f32.mrf.mxu0
      %v2549 = vadd.f32 %v487, %v2548
      %2550 = vmatmul.bf16.gmra.mxu0 %v1457
      %v2551 = vpop.f32.mrf.mxu0
      %v2552 = vadd.f32 %v487, %v2551
      %v2553 = vpop.f32.mrf.mxu0
      %v2554 = vadd.f32 %v487, %v2553
      %2555 = vmatmul.bf16.gmra.mxu0 %v1459
      %v2556 = vpop.f32.mrf.mxu0
      %v2557 = vadd.f32 %v487, %v2556
      %v2558 = vpop.f32.mrf.mxu0
      %v2559 = vadd.f32 %v487, %v2558
      %2560 = vmatmul.bf16.gmra.mxu0 %v1461
      %v2561 = vpop.f32.mrf.mxu0
      %v2562 = vadd.f32 %v487, %v2561
      %v2563 = vpop.f32.mrf.mxu0
      %v2564 = vadd.f32 %v487, %v2563
      %2565 = vmatmul.bf16.gmra.mxu0 %v1463
      %v2566 = vpop.f32.mrf.mxu0
      %v2567 = vadd.f32 %v487, %v2566
      %v2568 = vpop.f32.mrf.mxu0
      %v2569 = vadd.f32 %v487, %v2568
      %2570 = vmatmul.bf16.gmra.mxu0 %v1465
      %v2571 = vpop.f32.mrf.mxu0
      %v2572 = vadd.f32 %v487, %v2571
      %v2573 = vpop.f32.mrf.mxu0
      %v2574 = vadd.f32 %v487, %v2573
      %2575 = vmatmul.bf16.gmra.mxu0 %v1467
      %v2576 = vpop.f32.mrf.mxu0
      %v2577 = vadd.f32 %v487, %v2576
      %v2578 = vpop.f32.mrf.mxu0
      %v2579 = vadd.f32 %v487, %v2578
      %2580 = vmatmul.bf16.gmra.mxu0 %v1469
      %v2581 = vpop.f32.mrf.mxu0
      %v2582 = vadd.f32 %v487, %v2581
      %v2583 = vpop.f32.mrf.mxu0
      %v2584 = vadd.f32 %v487, %v2583
      %2585 = vmatmul.bf16.gmra.mxu0 %v1471
      %v2586 = vpop.f32.mrf.mxu0
      %v2587 = vadd.f32 %v487, %v2586
      %v2588 = vpop.f32.mrf.mxu0
      %v2589 = vadd.f32 %v487, %v2588
      %2590 = vmatmul.bf16.gmra.mxu0 %v1473
      %v2591 = vpop.f32.mrf.mxu0
      %v2592 = vadd.f32 %v487, %v2591
      %v2593 = vpop.f32.mrf.mxu0
      %v2594 = vadd.f32 %v487, %v2593
      %2595 = vmatmul.bf16.gmra.mxu0 %v1475
      %v2596 = vpop.f32.mrf.mxu0
      %v2597 = vadd.f32 %v487, %v2596
      %v2598 = vpop.f32.mrf.mxu0
      %v2599 = vadd.f32 %v487, %v2598
      %2600 = vmatmul.bf16.gmra.mxu0 %v1477
      %v2601 = vpop.f32.mrf.mxu0
      %v2602 = vadd.f32 %v487, %v2601
      %v2603 = vpop.f32.mrf.mxu0
      %v2604 = vadd.f32 %v487, %v2603
      %2605 = vmatmul.bf16.gmra.mxu0 %v1479
      %v2606 = vpop.f32.mrf.mxu0
      %v2607 = vadd.f32 %v487, %v2606
      %v2608 = vpop.f32.mrf.mxu0
      %v2609 = vadd.f32 %v487, %v2608
      %2610 = vmatmul.bf16.gmra.mxu0 %v1481
      %v2611 = vpop.f32.mrf.mxu0
      %v2612 = vadd.f32 %v487, %v2611
      %v2613 = vpop.f32.mrf.mxu0
      %v2614 = vadd.f32 %v487, %v2613
      %2615 = vmatmul.bf16.gmra.mxu0 %v1483
      %v2616 = vpop.f32.mrf.mxu0
      %v2617 = vadd.f32 %v487, %v2616
      %v2618 = vpop.f32.mrf.mxu0
      %v2619 = vadd.f32 %v487, %v2618
      %2620 = vmatmul.bf16.gmra.mxu0 %v1485
      %v2621 = vpop.f32.mrf.mxu0
      %v2622 = vadd.f32 %v487, %v2621
      %v2623 = vpop.f32.mrf.mxu0
      %v2624 = vadd.f32 %v487, %v2623
      %2625 = vmatmul.bf16.gmra.mxu0 %v1487
      %v2626 = vpop.f32.mrf.mxu0
      %v2627 = vadd.f32 %v487, %v2626
      %v2628 = vpop.f32.mrf.mxu0
      %v2629 = vadd.f32 %v487, %v2628
      %2630 = vmatmul.bf16.gmra.mxu0 %v1489
      %v2631 = vpop.f32.mrf.mxu0
      %v2632 = vadd.f32 %v487, %v2631
      %v2633 = vpop.f32.mrf.mxu0
      %v2634 = vadd.f32 %v487, %v2633
      %2635 = vmatmul.bf16.gmra.mxu0 %v1491
      %v2636 = vpop.f32.mrf.mxu0
      %v2637 = vadd.f32 %v487, %v2636
      %v2638 = vpop.f32.mrf.mxu0
      %v2639 = vadd.f32 %v487, %v2638
      %2640 = vmatmul.bf16.gmra.mxu0 %v1493
      %v2641 = vpop.f32.mrf.mxu0
      %v2642 = vadd.f32 %v487, %v2641
      %v2643 = vpop.f32.mrf.mxu0
      %v2644 = vadd.f32 %v487, %v2643
      %2645 = vmatmul.bf16.gmra.mxu0 %v1495
      %v2646 = vpop.f32.mrf.mxu0
      %v2647 = vadd.f32 %v487, %v2646
      %v2648 = vpop.f32.mrf.mxu0
      %v2649 = vadd.f32 %v487, %v2648
      %2650 = vmatmul.bf16.gmra.mxu0 %v1497
      %v2651 = vpop.f32.mrf.mxu0
      %v2652 = vadd.f32 %v487, %v2651
      %v2653 = vpop.f32.mrf.mxu0
      %v2654 = vadd.f32 %v487, %v2653
      %2655 = vmatmul.bf16.gmra.mxu0 %v1499
      %v2656 = vpop.f32.mrf.mxu0
      %v2657 = vadd.f32 %v487, %v2656
      %v2658 = vpop.f32.mrf.mxu0
      %v2659 = vadd.f32 %v487, %v2658
      %2660 = vmatmul.bf16.gmra.mxu0 %v1501
      %v2661 = vpop.f32.mrf.mxu0
      %v2662 = vadd.f32 %v487, %v2661
      %v2663 = vpop.f32.mrf.mxu0
      %v2664 = vadd.f32 %v487, %v2663
      %2665 = vmatmul.bf16.gmra.mxu0 %v1503
      %v2666 = vpop.f32.mrf.mxu0
      %v2667 = vadd.f32 %v487, %v2666
      %v2668 = vpop.f32.mrf.mxu0
      %v2669 = vadd.f32 %v487, %v2668
      %2670 = vmatmul.bf16.gmra.mxu0 %v1505
      %v2671 = vpop.f32.mrf.mxu0
      %v2672 = vadd.f32 %v487, %v2671
      %v2673 = vpop.f32.mrf.mxu0
      %v2674 = vadd.f32 %v487, %v2673
      %2675 = vmatmul.bf16.gmra.mxu0 %v1507
      %v2676 = vpop.f32.mrf.mxu0
      %v2677 = vadd.f32 %v487, %v2676
      %v2678 = vpop.f32.mrf.mxu0
      %v2679 = vadd.f32 %v487, %v2678
      %2680 = vmatmul.bf16.gmra.mxu0 %v1509
      %v2681 = vpop.f32.mrf.mxu0
      %v2682 = vadd.f32 %v487, %v2681
      %v2683 = vpop.f32.mrf.mxu0
      %v2684 = vadd.f32 %v487, %v2683
      %2685 = vmatmul.bf16.gmra.mxu0 %v1511
      %v2686 = vpop.f32.mrf.mxu0
      %v2687 = vadd.f32 %v487, %v2686
      %v2688 = vpop.f32.mrf.mxu0
      %v2689 = vadd.f32 %v487, %v2688
      %2690 = vmatmul.bf16.gmra.mxu0 %v1513
      %v2691 = vpop.f32.mrf.mxu0
      %v2692 = vadd.f32 %v487, %v2691
      %v2693 = vpop.f32.mrf.mxu0
      %v2694 = vadd.f32 %v487, %v2693
      %2695 = vmatmul.bf16.gmra.mxu0 %v1515
      %v2696 = vpop.f32.mrf.mxu0
      %v2697 = vadd.f32 %v487, %v2696
      %v2698 = vpop.f32.mrf.mxu0
      %v2699 = vadd.f32 %v487, %v2698
      %2700 = vmatmul.bf16.gmra.mxu0 %v1517
      %v2701 = vpop.f32.mrf.mxu0
      %v2702 = vadd.f32 %v487, %v2701
      %v2703 = vpop.f32.mrf.mxu0
      %v2704 = vadd.f32 %v487, %v2703
      %2705 = vmatmul.bf16.gmra.mxu0 %v1519
      %v2706 = vpop.f32.mrf.mxu0
      %v2707 = vadd.f32 %v487, %v2706
      %v2708 = vpop.f32.mrf.mxu0
      %v2709 = vadd.f32 %v487, %v2708
      %2710 = vmatmul.bf16.gmra.mxu0 %v1521
      %v2711 = vpop.f32.mrf.mxu0
      %v2712 = vadd.f32 %v487, %v2711
      %v2713 = vpop.f32.mrf.mxu0
      %v2714 = vadd.f32 %v487, %v2713
      %2715 = vmatmul.bf16.gmra.mxu0 %v1523
      %v2716 = vpop.f32.mrf.mxu0
      %v2717 = vadd.f32 %v487, %v2716
      %v2718 = vpop.f32.mrf.mxu0
      %v2719 = vadd.f32 %v487, %v2718
      %2720 = vmatmul.bf16.gmra.mxu0 %v1525
      %v2721 = vpop.f32.mrf.mxu0
      %v2722 = vadd.f32 %v487, %v2721
      %v2723 = vpop.f32.mrf.mxu0
      %v2724 = vadd.f32 %v487, %v2723
      %2725 = vmatmul.bf16.gmra.mxu0 %v1527
      %v2726 = vpop.f32.mrf.mxu0
      %v2727 = vadd.f32 %v487, %v2726
      %v2728 = vpop.f32.mrf.mxu0
      %v2729 = vadd.f32 %v487, %v2728
      %2730 = vmatmul.bf16.gmra.mxu0 %v1529
      %v2731 = vpop.f32.mrf.mxu0
      %v2732 = vadd.f32 %v487, %v2731
      %v2733 = vpop.f32.mrf.mxu0
      %v2734 = vadd.f32 %v487, %v2733
      %2735 = vmatmul.bf16.gmra.mxu0 %v1531
      %v2736 = vpop.f32.mrf.mxu0
      %v2737 = vadd.f32 %v487, %v2736
      %v2738 = vpop.f32.mrf.mxu0
      %v2739 = vadd.f32 %v487, %v2738
      %2740 = vmatmul.bf16.gmra.mxu0 %v1533
      %v2741 = vpop.f32.mrf.mxu0
      %v2742 = vadd.f32 %v487, %v2741
      %v2743 = vpop.f32.mrf.mxu0
      %v2744 = vadd.f32 %v487, %v2743
      %2745 = vmatmul.bf16.gmra.mxu0 %v1535
      %v2746 = vpop.f32.mrf.mxu0
      %v2747 = vadd.f32 %v487, %v2746
      %v2748 = vpop.f32.mrf.mxu0
      %v2749 = vadd.f32 %v487, %v2748
      %2750 = vmatmul.bf16.gmra.mxu0 %v1537
      %v2751 = vpop.f32.mrf.mxu0
      %v2752 = vadd.f32 %v487, %v2751
      %v2753 = vpop.f32.mrf.mxu0
      %v2754 = vadd.f32 %v487, %v2753
      %2755 = vmatmul.bf16.gmra.mxu0 %v1539
      %v2756 = vpop.f32.mrf.mxu0
      %v2757 = vadd.f32 %v487, %v2756
      %v2758 = vpop.f32.mrf.mxu0
      %v2759 = vadd.f32 %v487, %v2758
      %2760 = vmatmul.bf16.gmra.mxu0 %v1541
      %v2761 = vpop.f32.mrf.mxu0
      %v2762 = vadd.f32 %v487, %v2761
      %v2763 = vpop.f32.mrf.mxu0
      %v2764 = vadd.f32 %v487, %v2763
      %2765 = vmatmul.bf16.gmra.mxu0 %v1543
      %v2766 = vpop.f32.mrf.mxu0
      %v2767 = vadd.f32 %v487, %v2766
      %v2768 = vpop.f32.mrf.mxu0
      %v2769 = vadd.f32 %v487, %v2768
      %2770 = vmatmul.bf16.gmra.mxu0 %v1545
      %v2771 = vpop.f32.mrf.mxu0
      %v2772 = vadd.f32 %v487, %v2771
      %v2773 = vpop.f32.mrf.mxu0
      %v2774 = vadd.f32 %v487, %v2773
      %2775 = vmatmul.bf16.gmra.mxu0 %v1547
      %v2776 = vpop.f32.mrf.mxu0
      %v2777 = vadd.f32 %v487, %v2776
      %v2778 = vpop.f32.mrf.mxu0
      %v2779 = vadd.f32 %v487, %v2778
      %2780 = vmatmul.bf16.gmra.mxu0 %v1549
      %v2781 = vpop.f32.mrf.mxu0
      %v2782 = vadd.f32 %v487, %v2781
      %v2783 = vpop.f32.mrf.mxu0
      %v2784 = vadd.f32 %v487, %v2783
      %2785 = vmatmul.bf16.gmra.mxu0 %v1551
      %v2786 = vpop.f32.mrf.mxu0
      %v2787 = vadd.f32 %v487, %v2786
      %v2788 = vpop.f32.mrf.mxu0
      %v2789 = vadd.f32 %v487, %v2788
      %2790 = vmatmul.bf16.gmra.mxu0 %v1553
      %v2791 = vpop.f32.mrf.mxu0
      %v2792 = vadd.f32 %v487, %v2791
      %v2793 = vpop.f32.mrf.mxu0
      %v2794 = vadd.f32 %v487, %v2793
      %2795 = vmatmul.bf16.gmra.mxu0 %v1555
      %v2796 = vpop.f32.mrf.mxu0
      %v2797 = vadd.f32 %v487, %v2796
      %v2798 = vpop.f32.mrf.mxu0
      %v2799 = vadd.f32 %v487, %v2798
      %2800 = vmatmul.bf16.gmra.mxu0 %v1557
      %v2801 = vpop.f32.mrf.mxu0
      %v2802 = vadd.f32 %v487, %v2801
      %v2803 = vpop.f32.mrf.mxu0
      %v2804 = vadd.f32 %v487, %v2803
      %2805 = vmatmul.bf16.gmra.mxu0 %v1559
      %v2806 = vpop.f32.mrf.mxu0
      %v2807 = vadd.f32 %v487, %v2806
      %v2808 = vpop.f32.mrf.mxu0
      %v2809 = vadd.f32 %v487, %v2808
      %2810 = vmatmul.bf16.gmra.mxu0 %v1561
      %v2811 = vpop.f32.mrf.mxu0
      %v2812 = vadd.f32 %v487, %v2811
      %v2813 = vpop.f32.mrf.mxu0
      %v2814 = vadd.f32 %v487, %v2813
      %2815 = vmatmul.bf16.gmra.mxu0 %v1563
      %v2816 = vpop.f32.mrf.mxu0
      %v2817 = vadd.f32 %v487, %v2816
      %v2818 = vpop.f32.mrf.mxu0
      %v2819 = vadd.f32 %v487, %v2818
      %2820 = vmatmul.bf16.gmra.mxu0 %v1565
      %v2821 = vpop.f32.mrf.mxu0
      %v2822 = vadd.f32 %v487, %v2821
      %v2823 = vpop.f32.mrf.mxu0
      %v2824 = vadd.f32 %v487, %v2823
      %2825 = vmatmul.bf16.gmra.mxu0 %v1567
      %v2826 = vpop.f32.mrf.mxu0
      %v2827 = vadd.f32 %v487, %v2826
      %v2828 = vpop.f32.mrf.mxu0
      %v2829 = vadd.f32 %v487, %v2828
      %2830 = vmatmul.bf16.gmra.mxu0 %v1569
      %v2831 = vpop.f32.mrf.mxu0
      %v2832 = vadd.f32 %v487, %v2831
      %v2833 = vpop.f32.mrf.mxu0
      %v2834 = vadd.f32 %v487, %v2833
      %2835 = vmatmul.bf16.gmra.mxu0 %v1571
      %v2836 = vpop.f32.mrf.mxu0
      %v2837 = vadd.f32 %v487, %v2836
      %v2838 = vpop.f32.mrf.mxu0
      %v2839 = vadd.f32 %v487, %v2838
      %2840 = vmatmul.bf16.gmra.mxu0 %v1573
      %v2841 = vpop.f32.mrf.mxu0
      %v2842 = vadd.f32 %v487, %v2841
      %v2843 = vpop.f32.mrf.mxu0
      %v2844 = vadd.f32 %v487, %v2843
      %2845 = vmatmul.bf16.gmra.mxu0 %v1575
      %v2846 = vpop.f32.mrf.mxu0
      %v2847 = vadd.f32 %v487, %v2846
      %v2848 = vpop.f32.mrf.mxu0
      %v2849 = vadd.f32 %v487, %v2848
      %2850 = vmatmul.bf16.gmra.mxu0 %v1577
      %v2851 = vpop.f32.mrf.mxu0
      %v2852 = vadd.f32 %v487, %v2851
      %v2853 = vpop.f32.mrf.mxu0
      %v2854 = vadd.f32 %v487, %v2853
      %2855 = vmatmul.bf16.gmra.mxu0 %v1579
      %v2856 = vpop.f32.mrf.mxu0
      %v2857 = vadd.f32 %v487, %v2856
      %v2858 = vpop.f32.mrf.mxu0
      %v2859 = vadd.f32 %v487, %v2858
      %2860 = vmatmul.bf16.gmra.mxu0 %v1581
      %v2861 = vpop.f32.mrf.mxu0
      %v2862 = vadd.f32 %v487, %v2861
      %v2863 = vpop.f32.mrf.mxu0
      %v2864 = vadd.f32 %v487, %v2863
      %2865 = vmatmul.bf16.gmra.mxu0 %v1583
      %v2866 = vpop.f32.mrf.mxu0
      %v2867 = vadd.f32 %v487, %v2866
      %v2868 = vpop.f32.mrf.mxu0
      %v2869 = vadd.f32 %v487, %v2868
      %2870 = vmatmul.bf16.gmra.mxu0 %v1585
      %v2871 = vpop.f32.mrf.mxu0
      %v2872 = vadd.f32 %v487, %v2871
      %v2873 = vpop.f32.mrf.mxu0
      %v2874 = vadd.f32 %v487, %v2873
      %2875 = vmatmul.bf16.gmra.mxu0 %v1587
      %v2876 = vpop.f32.mrf.mxu0
      %v2877 = vadd.f32 %v487, %v2876
      %v2878 = vpop.f32.mrf.mxu0
      %v2879 = vadd.f32 %v487, %v2878
      %2880 = vmatmul.bf16.gmra.mxu0 %v1589
      %v2881 = vpop.f32.mrf.mxu0
      %v2882 = vadd.f32 %v487, %v2881
      %v2883 = vpop.f32.mrf.mxu0
      %v2884 = vadd.f32 %v487, %v2883
      %2885 = vmatmul.bf16.gmra.mxu0 %v1591
      %v2886 = vpop.f32.mrf.mxu0
      %v2887 = vadd.f32 %v487, %v2886
      %v2888 = vpop.f32.mrf.mxu0
      %v2889 = vadd.f32 %v487, %v2888
      %2890 = vmatmul.bf16.gmra.mxu0 %v1593
      %v2891 = vpop.f32.mrf.mxu0
      %v2892 = vadd.f32 %v487, %v2891
      %v2893 = vpop.f32.mrf.mxu0
      %v2894 = vadd.f32 %v487, %v2893
      %2895 = vmatmul.bf16.gmra.mxu0 %v1595
      %v2896 = vpop.f32.mrf.mxu0
      %v2897 = vadd.f32 %v487, %v2896
      %v2898 = vpop.f32.mrf.mxu0
      %v2899 = vadd.f32 %v487, %v2898
      %2900 = vmatmul.bf16.gmra.mxu0 %v1597
      %v2901 = vpop.f32.mrf.mxu0
      %v2902 = vadd.f32 %v487, %v2901
      %v2903 = vpop.f32.mrf.mxu0
      %v2904 = vadd.f32 %v487, %v2903
      %2905 = vmatmul.bf16.gmra.mxu0 %v1599
      %v2906 = vpop.f32.mrf.mxu0
      %v2907 = vadd.f32 %v487, %v2906
      %v2908 = vpop.f32.mrf.mxu0
      %v2909 = vadd.f32 %v487, %v2908
      %2910 = vmatmul.bf16.gmra.mxu0 %v1601
      %v2911 = vpop.f32.mrf.mxu0
      %v2912 = vadd.f32 %v487, %v2911
      %v2913 = vpop.f32.mrf.mxu0
      %v2914 = vadd.f32 %v487, %v2913
      %2915 = vmatmul.bf16.gmra.mxu0 %v1603
      %v2916 = vpop.f32.mrf.mxu0
      %v2917 = vadd.f32 %v487, %v2916
      %v2918 = vpop.f32.mrf.mxu0
      %v2919 = vadd.f32 %v487, %v2918
      %2920 = vmatmul.bf16.gmra.mxu0 %v1605
      %v2921 = vpop.f32.mrf.mxu0
      %v2922 = vadd.f32 %v487, %v2921
      %v2923 = vpop.f32.mrf.mxu0
      %v2924 = vadd.f32 %v487, %v2923
      %2925 = vmatmul.bf16.gmra.mxu0 %v1607
      %v2926 = vpop.f32.mrf.mxu0
      %v2927 = vadd.f32 %v487, %v2926
      %v2928 = vpop.f32.mrf.mxu0
      %v2929 = vadd.f32 %v487, %v2928
      %2930 = vmatmul.bf16.gmra.mxu0 %v1609
      %v2931 = vpop.f32.mrf.mxu0
      %v2932 = vadd.f32 %v487, %v2931
      %v2933 = vpop.f32.mrf.mxu0
      %v2934 = vadd.f32 %v487, %v2933
      %2935 = vmatmul.bf16.gmra.mxu0 %v1611
      %v2936 = vpop.f32.mrf.mxu0
      %v2937 = vadd.f32 %v487, %v2936
      %v2938 = vpop.f32.mrf.mxu0
      %v2939 = vadd.f32 %v487, %v2938
      %2940 = vmatmul.bf16.gmra.mxu0 %v1613
      %v2941 = vpop.f32.mrf.mxu0
      %v2942 = vadd.f32 %v487, %v2941
      %v2943 = vpop.f32.mrf.mxu0
      %v2944 = vadd.f32 %v487, %v2943
      %2945 = vmatmul.bf16.gmra.mxu0 %v1615
      %v2946 = vpop.f32.mrf.mxu0
      %v2947 = vadd.f32 %v487, %v2946
      %v2948 = vpop.f32.mrf.mxu0
      %v2949 = vadd.f32 %v487, %v2948
      %2950 = vmatmul.bf16.gmra.mxu0 %v1617
      %v2951 = vpop.f32.mrf.mxu0
      %v2952 = vadd.f32 %v487, %v2951
      %v2953 = vpop.f32.mrf.mxu0
      %v2954 = vadd.f32 %v487, %v2953
      %2955 = vmatmul.bf16.gmra.mxu0 %v1619
      %v2956 = vpop.f32.mrf.mxu0
      %v2957 = vadd.f32 %v487, %v2956
      %v2958 = vpop.f32.mrf.mxu0
      %v2959 = vadd.f32 %v487, %v2958
      %2960 = vmatmul.bf16.gmra.mxu0 %v1621
      %v2961 = vpop.f32.mrf.mxu0
      %v2962 = vadd.f32 %v487, %v2961
      %v2963 = vpop.f32.mrf.mxu0
      %v2964 = vadd.f32 %v487, %v2963
      %2965 = vmatmul.bf16.gmra.mxu0 %v1623
      %v2966 = vpop.f32.mrf.mxu0
      %v2967 = vadd.f32 %v487, %v2966
      %v2968 = vpop.f32.mrf.mxu0
      %v2969 = vadd.f32 %v487, %v2968
      %2970 = vmatmul.bf16.gmra.mxu0 %v1625
      %v2971 = vpop.f32.mrf.mxu0
      %v2972 = vadd.f32 %v487, %v2971
      %v2973 = vpop.f32.mrf.mxu0
      %v2974 = vadd.f32 %v487, %v2973
      %2975 = vmatmul.bf16.gmra.mxu0 %v1627
      %v2976 = vpop.f32.mrf.mxu0
      %v2977 = vadd.f32 %v487, %v2976
      %v2978 = vpop.f32.mrf.mxu0
      %v2979 = vadd.f32 %v487, %v2978
      %2980 = vmatmul.bf16.gmra.mxu0 %v1629
      %v2981 = vpop.f32.mrf.mxu0
      %v2982 = vadd.f32 %v487, %v2981
      %v2983 = vpop.f32.mrf.mxu0
      %v2984 = vadd.f32 %v487, %v2983
      %2985 = vmatmul.bf16.gmra.mxu0 %v1631
      %v2986 = vpop.f32.mrf.mxu0
      %v2987 = vadd.f32 %v487, %v2986
      %v2988 = vpop.f32.mrf.mxu0
      %v2989 = vadd.f32 %v487, %v2988
      %2990 = vmatmul.bf16.gmra.mxu0 %v1633
      %v2991 = vpop.f32.mrf.mxu0
      %v2992 = vadd.f32 %v487, %v2991
      %v2993 = vpop.f32.mrf.mxu0
      %v2994 = vadd.f32 %v487, %v2993
      %2995 = vmatmul.bf16.gmra.mxu0 %v1635
      %v2996 = vpop.f32.mrf.mxu0
      %v2997 = vadd.f32 %v487, %v2996
      %v2998 = vpop.f32.mrf.mxu0
      %v2999 = vadd.f32 %v487, %v2998
      %3000 = vmatmul.bf16.gmra.mxu0 %v1637
      %v3001 = vpop.f32.mrf.mxu0
      %v3002 = vadd.f32 %v487, %v3001
      %v3003 = vpop.f32.mrf.mxu0
      %v3004 = vadd.f32 %v487, %v3003
      %3005 = vmatmul.bf16.gmra.mxu0 %v1639
      %v3006 = vpop.f32.mrf.mxu0
      %v3007 = vadd.f32 %v487, %v3006
      %v3008 = vpop.f32.mrf.mxu0
      %v3009 = vadd.f32 %v487, %v3008
      %3010 = vdwg.mxu0
      %3011 = vmatpush.bf16.msra.mxu0 0
      %3012 = vmatpush.bf16.msra.mxu0 0
      %3013 = vmatpush.bf16.msra.mxu0 0
      %3014 = vmatpush.bf16.msra.mxu0 0
      %3015 = vmatpush.bf16.msra.mxu0 0
      %3016 = vmatpush.bf16.msra.mxu0 0
      %3017 = vmatpush.bf16.msra.mxu0 %v2280
      %3018 = vmatpush.bf16.msra.mxu0 %v1831
      %3019 = vmatmul.bf16.gmra.mxu0 %v1844
      %v3020 = vpop.f32.mrf.mxu0
      %v3021 = vadd.f32 %v2292, %v3020
      %v3022 = vpop.f32.mrf.mxu0
      %v3023 = vadd.f32 %v2294, %v3022
      %3024 = vmatmul.bf16.gmra.mxu0 %v1847
      %v3025 = vpop.f32.mrf.mxu0
      %v3026 = vadd.f32 %v2297, %v3025
      %v3027 = vpop.f32.mrf.mxu0
      %v3028 = vadd.f32 %v2299, %v3027
      %3029 = vmatmul.bf16.gmra.mxu0 %v1850
      %v3030 = vpop.f32.mrf.mxu0
      %v3031 = vadd.f32 %v2302, %v3030
      %v3032 = vpop.f32.mrf.mxu0
      %v3033 = vadd.f32 %v2304, %v3032
      %3034 = vmatmul.bf16.gmra.mxu0 %v1853
      %v3035 = vpop.f32.mrf.mxu0
      %v3036 = vadd.f32 %v2307, %v3035
      %v3037 = vpop.f32.mrf.mxu0
      %v3038 = vadd.f32 %v2309, %v3037
      %3039 = vmatmul.bf16.gmra.mxu0 %v1856
      %v3040 = vpop.f32.mrf.mxu0
      %v3041 = vadd.f32 %v2312, %v3040
      %v3042 = vpop.f32.mrf.mxu0
      %v3043 = vadd.f32 %v2314, %v3042
      %3044 = vmatmul.bf16.gmra.mxu0 %v1859
      %v3045 = vpop.f32.mrf.mxu0
      %v3046 = vadd.f32 %v2317, %v3045
      %v3047 = vpop.f32.mrf.mxu0
      %v3048 = vadd.f32 %v2319, %v3047
      %3049 = vmatmul.bf16.gmra.mxu0 %v1862
      %v3050 = vpop.f32.mrf.mxu0
      %v3051 = vadd.f32 %v2322, %v3050
      %v3052 = vpop.f32.mrf.mxu0
      %v3053 = vadd.f32 %v2324, %v3052
      %3054 = vmatmul.bf16.gmra.mxu0 %v1865
      %v3055 = vpop.f32.mrf.mxu0
      %v3056 = vadd.f32 %v2327, %v3055
      %v3057 = vpop.f32.mrf.mxu0
      %v3058 = vadd.f32 %v2329, %v3057
      %3059 = vmatmul.bf16.gmra.mxu0 %v1868
      %v3060 = vpop.f32.mrf.mxu0
      %v3061 = vadd.f32 %v2332, %v3060
      %v3062 = vpop.f32.mrf.mxu0
      %v3063 = vadd.f32 %v2334, %v3062
      %3064 = vmatmul.bf16.gmra.mxu0 %v1871
      %v3065 = vpop.f32.mrf.mxu0
      %v3066 = vadd.f32 %v2337, %v3065
      %v3067 = vpop.f32.mrf.mxu0
      %v3068 = vadd.f32 %v2339, %v3067
      %3069 = vmatmul.bf16.gmra.mxu0 %v1874
      %v3070 = vpop.f32.mrf.mxu0
      %v3071 = vadd.f32 %v2342, %v3070
      %v3072 = vpop.f32.mrf.mxu0
      %v3073 = vadd.f32 %v2344, %v3072
      %3074 = vmatmul.bf16.gmra.mxu0 %v1877
      %v3075 = vpop.f32.mrf.mxu0
      %v3076 = vadd.f32 %v2347, %v3075
      %v3077 = vpop.f32.mrf.mxu0
      %v3078 = vadd.f32 %v2349, %v3077
      %3079 = vmatmul.bf16.gmra.mxu0 %v1880
      %v3080 = vpop.f32.mrf.mxu0
      %v3081 = vadd.f32 %v2352, %v3080
      %v3082 = vpop.f32.mrf.mxu0
      %v3083 = vadd.f32 %v2354, %v3082
      %3084 = vmatmul.bf16.gmra.mxu0 %v1883
      %v3085 = vpop.f32.mrf.mxu0
      %v3086 = vadd.f32 %v2357, %v3085
      %v3087 = vpop.f32.mrf.mxu0
      %v3088 = vadd.f32 %v2359, %v3087
      %3089 = vmatmul.bf16.gmra.mxu0 %v1886
      %v3090 = vpop.f32.mrf.mxu0
      %v3091 = vadd.f32 %v2362, %v3090
      %v3092 = vpop.f32.mrf.mxu0
      %v3093 = vadd.f32 %v2364, %v3092
      %3094 = vmatmul.bf16.gmra.mxu0 %v1889
      %v3095 = vpop.f32.mrf.mxu0
      %v3096 = vadd.f32 %v2367, %v3095
      %v3097 = vpop.f32.mrf.mxu0
      %v3098 = vadd.f32 %v2369, %v3097
      %3099 = vmatmul.bf16.gmra.mxu0 %v1892
      %v3100 = vpop.f32.mrf.mxu0
      %v3101 = vadd.f32 %v2372, %v3100
      %v3102 = vpop.f32.mrf.mxu0
      %v3103 = vadd.f32 %v2374, %v3102
      %3104 = vmatmul.bf16.gmra.mxu0 %v1895
      %v3105 = vpop.f32.mrf.mxu0
      %v3106 = vadd.f32 %v2377, %v3105
      %v3107 = vpop.f32.mrf.mxu0
      %v3108 = vadd.f32 %v2379, %v3107
      %3109 = vmatmul.bf16.gmra.mxu0 %v1898
      %v3110 = vpop.f32.mrf.mxu0
      %v3111 = vadd.f32 %v2382, %v3110
      %v3112 = vpop.f32.mrf.mxu0
      %v3113 = vadd.f32 %v2384, %v3112
      %3114 = vmatmul.bf16.gmra.mxu0 %v1901
      %v3115 = vpop.f32.mrf.mxu0
      %v3116 = vadd.f32 %v2387, %v3115
      %v3117 = vpop.f32.mrf.mxu0
      %v3118 = vadd.f32 %v2389, %v3117
      %3119 = vmatmul.bf16.gmra.mxu0 %v1904
      %v3120 = vpop.f32.mrf.mxu0
      %v3121 = vadd.f32 %v2392, %v3120
      %v3122 = vpop.f32.mrf.mxu0
      %v3123 = vadd.f32 %v2394, %v3122
      %3124 = vmatmul.bf16.gmra.mxu0 %v1907
      %v3125 = vpop.f32.mrf.mxu0
      %v3126 = vadd.f32 %v2397, %v3125
      %v3127 = vpop.f32.mrf.mxu0
      %v3128 = vadd.f32 %v2399, %v3127
      %3129 = vmatmul.bf16.gmra.mxu0 %v1910
      %v3130 = vpop.f32.mrf.mxu0
      %v3131 = vadd.f32 %v2402, %v3130
      %v3132 = vpop.f32.mrf.mxu0
      %v3133 = vadd.f32 %v2404, %v3132
      %3134 = vmatmul.bf16.gmra.mxu0 %v1913
      %v3135 = vpop.f32.mrf.mxu0
      %v3136 = vadd.f32 %v2407, %v3135
      %v3137 = vpop.f32.mrf.mxu0
      %v3138 = vadd.f32 %v2409, %v3137
      %3139 = vmatmul.bf16.gmra.mxu0 %v1916
      %v3140 = vpop.f32.mrf.mxu0
      %v3141 = vadd.f32 %v2412, %v3140
      %v3142 = vpop.f32.mrf.mxu0
      %v3143 = vadd.f32 %v2414, %v3142
      %3144 = vmatmul.bf16.gmra.mxu0 %v1919
      %v3145 = vpop.f32.mrf.mxu0
      %v3146 = vadd.f32 %v2417, %v3145
      %v3147 = vpop.f32.mrf.mxu0
      %v3148 = vadd.f32 %v2419, %v3147
      %3149 = vmatmul.bf16.gmra.mxu0 %v1922
      %v3150 = vpop.f32.mrf.mxu0
      %v3151 = vadd.f32 %v2422, %v3150
      %v3152 = vpop.f32.mrf.mxu0
      %v3153 = vadd.f32 %v2424, %v3152
      %3154 = vmatmul.bf16.gmra.mxu0 %v1925
      %v3155 = vpop.f32.mrf.mxu0
      %v3156 = vadd.f32 %v2427, %v3155
      %v3157 = vpop.f32.mrf.mxu0
      %v3158 = vadd.f32 %v2429, %v3157
      %3159 = vmatmul.bf16.gmra.mxu0 %v1928
      %v3160 = vpop.f32.mrf.mxu0
      %v3161 = vadd.f32 %v2432, %v3160
      %v3162 = vpop.f32.mrf.mxu0
      %v3163 = vadd.f32 %v2434, %v3162
      %3164 = vmatmul.bf16.gmra.mxu0 %v1931
      %v3165 = vpop.f32.mrf.mxu0
      %v3166 = vadd.f32 %v2437, %v3165
      %v3167 = vpop.f32.mrf.mxu0
      %v3168 = vadd.f32 %v2439, %v3167
      %3169 = vmatmul.bf16.gmra.mxu0 %v1934
      %v3170 = vpop.f32.mrf.mxu0
      %v3171 = vadd.f32 %v2442, %v3170
      %v3172 = vpop.f32.mrf.mxu0
      %v3173 = vadd.f32 %v2444, %v3172
      %3174 = vmatmul.bf16.gmra.mxu0 %v1937
      %v3175 = vpop.f32.mrf.mxu0
      %v3176 = vadd.f32 %v2447, %v3175
      %v3177 = vpop.f32.mrf.mxu0
      %v3178 = vadd.f32 %v2449, %v3177
      %3179 = vmatmul.bf16.gmra.mxu0 %v1940
      %v3180 = vpop.f32.mrf.mxu0
      %v3181 = vadd.f32 %v2452, %v3180
      %v3182 = vpop.f32.mrf.mxu0
      %v3183 = vadd.f32 %v2454, %v3182
      %3184 = vmatmul.bf16.gmra.mxu0 %v1943
      %v3185 = vpop.f32.mrf.mxu0
      %v3186 = vadd.f32 %v2457, %v3185
      %v3187 = vpop.f32.mrf.mxu0
      %v3188 = vadd.f32 %v2459, %v3187
      %3189 = vmatmul.bf16.gmra.mxu0 %v1946
      %v3190 = vpop.f32.mrf.mxu0
      %v3191 = vadd.f32 %v2462, %v3190
      %v3192 = vpop.f32.mrf.mxu0
      %v3193 = vadd.f32 %v2464, %v3192
      %3194 = vmatmul.bf16.gmra.mxu0 %v1949
      %v3195 = vpop.f32.mrf.mxu0
      %v3196 = vadd.f32 %v2467, %v3195
      %v3197 = vpop.f32.mrf.mxu0
      %v3198 = vadd.f32 %v2469, %v3197
      %3199 = vmatmul.bf16.gmra.mxu0 %v1952
      %v3200 = vpop.f32.mrf.mxu0
      %v3201 = vadd.f32 %v2472, %v3200
      %v3202 = vpop.f32.mrf.mxu0
      %v3203 = vadd.f32 %v2474, %v3202
      %3204 = vmatmul.bf16.gmra.mxu0 %v1955
      %v3205 = vpop.f32.mrf.mxu0
      %v3206 = vadd.f32 %v2477, %v3205
      %v3207 = vpop.f32.mrf.mxu0
      %v3208 = vadd.f32 %v2479, %v3207
      %3209 = vmatmul.bf16.gmra.mxu0 %v1958
      %v3210 = vpop.f32.mrf.mxu0
      %v3211 = vadd.f32 %v2482, %v3210
      %v3212 = vpop.f32.mrf.mxu0
      %v3213 = vadd.f32 %v2484, %v3212
      %3214 = vmatmul.bf16.gmra.mxu0 %v1961
      %v3215 = vpop.f32.mrf.mxu0
      %v3216 = vadd.f32 %v2487, %v3215
      %v3217 = vpop.f32.mrf.mxu0
      %v3218 = vadd.f32 %v2489, %v3217
      %3219 = vmatmul.bf16.gmra.mxu0 %v1964
      %v3220 = vpop.f32.mrf.mxu0
      %v3221 = vadd.f32 %v2492, %v3220
      %v3222 = vpop.f32.mrf.mxu0
      %v3223 = vadd.f32 %v2494, %v3222
      %3224 = vmatmul.bf16.gmra.mxu0 %v1967
      %v3225 = vpop.f32.mrf.mxu0
      %v3226 = vadd.f32 %v2497, %v3225
      %v3227 = vpop.f32.mrf.mxu0
      %v3228 = vadd.f32 %v2499, %v3227
      %3229 = vmatmul.bf16.gmra.mxu0 %v1970
      %v3230 = vpop.f32.mrf.mxu0
      %v3231 = vadd.f32 %v2502, %v3230
      %v3232 = vpop.f32.mrf.mxu0
      %v3233 = vadd.f32 %v2504, %v3232
      %3234 = vmatmul.bf16.gmra.mxu0 %v1973
      %v3235 = vpop.f32.mrf.mxu0
      %v3236 = vadd.f32 %v2507, %v3235
      %v3237 = vpop.f32.mrf.mxu0
      %v3238 = vadd.f32 %v2509, %v3237
      %3239 = vmatmul.bf16.gmra.mxu0 %v1976
      %v3240 = vpop.f32.mrf.mxu0
      %v3241 = vadd.f32 %v2512, %v3240
      %v3242 = vpop.f32.mrf.mxu0
      %v3243 = vadd.f32 %v2514, %v3242
      %3244 = vmatmul.bf16.gmra.mxu0 %v1979
      %v3245 = vpop.f32.mrf.mxu0
      %v3246 = vadd.f32 %v2517, %v3245
      %v3247 = vpop.f32.mrf.mxu0
      %v3248 = vadd.f32 %v2519, %v3247
      %3249 = vmatmul.bf16.gmra.mxu0 %v1982
      %v3250 = vpop.f32.mrf.mxu0
      %v3251 = vadd.f32 %v2522, %v3250
      %v3252 = vpop.f32.mrf.mxu0
      %v3253 = vadd.f32 %v2524, %v3252
      %3254 = vmatmul.bf16.gmra.mxu0 %v1985
      %v3255 = vpop.f32.mrf.mxu0
      %v3256 = vadd.f32 %v2527, %v3255
      %v3257 = vpop.f32.mrf.mxu0
      %v3258 = vadd.f32 %v2529, %v3257
      %3259 = vmatmul.bf16.gmra.mxu0 %v1988
      %v3260 = vpop.f32.mrf.mxu0
      %v3261 = vadd.f32 %v2532, %v3260
      %v3262 = vpop.f32.mrf.mxu0
      %v3263 = vadd.f32 %v2534, %v3262
      %3264 = vmatmul.bf16.gmra.mxu0 %v1991
      %v3265 = vpop.f32.mrf.mxu0
      %v3266 = vadd.f32 %v2537, %v3265
      %v3267 = vpop.f32.mrf.mxu0
      %v3268 = vadd.f32 %v2539, %v3267
      %3269 = vmatmul.bf16.gmra.mxu0 %v1994
      %v3270 = vpop.f32.mrf.mxu0
      %v3271 = vadd.f32 %v2542, %v3270
      %v3272 = vpop.f32.mrf.mxu0
      %v3273 = vadd.f32 %v2544, %v3272
      %3274 = vmatmul.bf16.gmra.mxu0 %v1997
      %v3275 = vpop.f32.mrf.mxu0
      %v3276 = vadd.f32 %v2547, %v3275
      %v3277 = vpop.f32.mrf.mxu0
      %v3278 = vadd.f32 %v2549, %v3277
      %3279 = vmatmul.bf16.gmra.mxu0 %v2000
      %v3280 = vpop.f32.mrf.mxu0
      %v3281 = vadd.f32 %v2552, %v3280
      %v3282 = vpop.f32.mrf.mxu0
      %v3283 = vadd.f32 %v2554, %v3282
      %3284 = vmatmul.bf16.gmra.mxu0 %v2003
      %v3285 = vpop.f32.mrf.mxu0
      %v3286 = vadd.f32 %v2557, %v3285
      %v3287 = vpop.f32.mrf.mxu0
      %v3288 = vadd.f32 %v2559, %v3287
      %3289 = vmatmul.bf16.gmra.mxu0 %v2006
      %v3290 = vpop.f32.mrf.mxu0
      %v3291 = vadd.f32 %v2562, %v3290
      %v3292 = vpop.f32.mrf.mxu0
      %v3293 = vadd.f32 %v2564, %v3292
      %3294 = vmatmul.bf16.gmra.mxu0 %v2009
      %v3295 = vpop.f32.mrf.mxu0
      %v3296 = vadd.f32 %v2567, %v3295
      %v3297 = vpop.f32.mrf.mxu0
      %v3298 = vadd.f32 %v2569, %v3297
      %3299 = vmatmul.bf16.gmra.mxu0 %v2012
      %v3300 = vpop.f32.mrf.mxu0
      %v3301 = vadd.f32 %v2572, %v3300
      %v3302 = vpop.f32.mrf.mxu0
      %v3303 = vadd.f32 %v2574, %v3302
      %3304 = vmatmul.bf16.gmra.mxu0 %v2015
      %v3305 = vpop.f32.mrf.mxu0
      %v3306 = vadd.f32 %v2577, %v3305
      %v3307 = vpop.f32.mrf.mxu0
      %v3308 = vadd.f32 %v2579, %v3307
      %3309 = vmatmul.bf16.gmra.mxu0 %v2018
      %v3310 = vpop.f32.mrf.mxu0
      %v3311 = vadd.f32 %v2582, %v3310
      %v3312 = vpop.f32.mrf.mxu0
      %v3313 = vadd.f32 %v2584, %v3312
      %3314 = vmatmul.bf16.gmra.mxu0 %v2021
      %v3315 = vpop.f32.mrf.mxu0
      %v3316 = vadd.f32 %v2587, %v3315
      %v3317 = vpop.f32.mrf.mxu0
      %v3318 = vadd.f32 %v2589, %v3317
      %3319 = vmatmul.bf16.gmra.mxu0 %v2024
      %v3320 = vpop.f32.mrf.mxu0
      %v3321 = vadd.f32 %v2592, %v3320
      %v3322 = vpop.f32.mrf.mxu0
      %v3323 = vadd.f32 %v2594, %v3322
      %3324 = vmatmul.bf16.gmra.mxu0 %v2027
      %v3325 = vpop.f32.mrf.mxu0
      %v3326 = vadd.f32 %v2597, %v3325
      %v3327 = vpop.f32.mrf.mxu0
      %v3328 = vadd.f32 %v2599, %v3327
      %3329 = vmatmul.bf16.gmra.mxu0 %v2030
      %v3330 = vpop.f32.mrf.mxu0
      %v3331 = vadd.f32 %v2602, %v3330
      %v3332 = vpop.f32.mrf.mxu0
      %v3333 = vadd.f32 %v2604, %v3332
      %3334 = vmatmul.bf16.gmra.mxu0 %v2033
      %v3335 = vpop.f32.mrf.mxu0
      %v3336 = vadd.f32 %v2607, %v3335
      %v3337 = vpop.f32.mrf.mxu0
      %v3338 = vadd.f32 %v2609, %v3337
      %3339 = vmatmul.bf16.gmra.mxu0 %v2036
      %v3340 = vpop.f32.mrf.mxu0
      %v3341 = vadd.f32 %v2612, %v3340
      %v3342 = vpop.f32.mrf.mxu0
      %v3343 = vadd.f32 %v2614, %v3342
      %3344 = vmatmul.bf16.gmra.mxu0 %v2039
      %v3345 = vpop.f32.mrf.mxu0
      %v3346 = vadd.f32 %v2617, %v3345
      %v3347 = vpop.f32.mrf.mxu0
      %v3348 = vadd.f32 %v2619, %v3347
      %3349 = vmatmul.bf16.gmra.mxu0 %v2042
      %v3350 = vpop.f32.mrf.mxu0
      %v3351 = vadd.f32 %v2622, %v3350
      %v3352 = vpop.f32.mrf.mxu0
      %v3353 = vadd.f32 %v2624, %v3352
      %3354 = vmatmul.bf16.gmra.mxu0 %v2045
      %v3355 = vpop.f32.mrf.mxu0
      %v3356 = vadd.f32 %v2627, %v3355
      %v3357 = vpop.f32.mrf.mxu0
      %v3358 = vadd.f32 %v2629, %v3357
      %3359 = vmatmul.bf16.gmra.mxu0 %v2048
      %v3360 = vpop.f32.mrf.mxu0
      %v3361 = vadd.f32 %v2632, %v3360
      %v3362 = vpop.f32.mrf.mxu0
      %v3363 = vadd.f32 %v2634, %v3362
      %3364 = vmatmul.bf16.gmra.mxu0 %v2051
      %v3365 = vpop.f32.mrf.mxu0
      %v3366 = vadd.f32 %v2637, %v3365
      %v3367 = vpop.f32.mrf.mxu0
      %v3368 = vadd.f32 %v2639, %v3367
      %3369 = vmatmul.bf16.gmra.mxu0 %v2054
      %v3370 = vpop.f32.mrf.mxu0
      %v3371 = vadd.f32 %v2642, %v3370
      %v3372 = vpop.f32.mrf.mxu0
      %v3373 = vadd.f32 %v2644, %v3372
      %3374 = vmatmul.bf16.gmra.mxu0 %v2057
      %v3375 = vpop.f32.mrf.mxu0
      %v3376 = vadd.f32 %v2647, %v3375
      %v3377 = vpop.f32.mrf.mxu0
      %v3378 = vadd.f32 %v2649, %v3377
      %3379 = vmatmul.bf16.gmra.mxu0 %v2060
      %v3380 = vpop.f32.mrf.mxu0
      %v3381 = vadd.f32 %v2652, %v3380
      %v3382 = vpop.f32.mrf.mxu0
      %v3383 = vadd.f32 %v2654, %v3382
      %3384 = vmatmul.bf16.gmra.mxu0 %v2063
      %v3385 = vpop.f32.mrf.mxu0
      %v3386 = vadd.f32 %v2657, %v3385
      %v3387 = vpop.f32.mrf.mxu0
      %v3388 = vadd.f32 %v2659, %v3387
      %3389 = vmatmul.bf16.gmra.mxu0 %v2066
      %v3390 = vpop.f32.mrf.mxu0
      %v3391 = vadd.f32 %v2662, %v3390
      %v3392 = vpop.f32.mrf.mxu0
      %v3393 = vadd.f32 %v2664, %v3392
      %3394 = vmatmul.bf16.gmra.mxu0 %v2069
      %v3395 = vpop.f32.mrf.mxu0
      %v3396 = vadd.f32 %v2667, %v3395
      %v3397 = vpop.f32.mrf.mxu0
      %v3398 = vadd.f32 %v2669, %v3397
      %3399 = vmatmul.bf16.gmra.mxu0 %v2072
      %v3400 = vpop.f32.mrf.mxu0
      %v3401 = vadd.f32 %v2672, %v3400
      %v3402 = vpop.f32.mrf.mxu0
      %v3403 = vadd.f32 %v2674, %v3402
      %3404 = vmatmul.bf16.gmra.mxu0 %v2075
      %v3405 = vpop.f32.mrf.mxu0
      %v3406 = vadd.f32 %v2677, %v3405
      %v3407 = vpop.f32.mrf.mxu0
      %v3408 = vadd.f32 %v2679, %v3407
      %3409 = vmatmul.bf16.gmra.mxu0 %v2078
      %v3410 = vpop.f32.mrf.mxu0
      %v3411 = vadd.f32 %v2682, %v3410
      %v3412 = vpop.f32.mrf.mxu0
      %v3413 = vadd.f32 %v2684, %v3412
      %3414 = vmatmul.bf16.gmra.mxu0 %v2081
      %v3415 = vpop.f32.mrf.mxu0
      %v3416 = vadd.f32 %v2687, %v3415
      %v3417 = vpop.f32.mrf.mxu0
      %v3418 = vadd.f32 %v2689, %v3417
      %3419 = vmatmul.bf16.gmra.mxu0 %v2084
      %v3420 = vpop.f32.mrf.mxu0
      %v3421 = vadd.f32 %v2692, %v3420
      %v3422 = vpop.f32.mrf.mxu0
      %v3423 = vadd.f32 %v2694, %v3422
      %3424 = vmatmul.bf16.gmra.mxu0 %v2087
      %v3425 = vpop.f32.mrf.mxu0
      %v3426 = vadd.f32 %v2697, %v3425
      %v3427 = vpop.f32.mrf.mxu0
      %v3428 = vadd.f32 %v2699, %v3427
      %3429 = vmatmul.bf16.gmra.mxu0 %v2090
      %v3430 = vpop.f32.mrf.mxu0
      %v3431 = vadd.f32 %v2702, %v3430
      %v3432 = vpop.f32.mrf.mxu0
      %v3433 = vadd.f32 %v2704, %v3432
      %3434 = vmatmul.bf16.gmra.mxu0 %v2093
      %v3435 = vpop.f32.mrf.mxu0
      %v3436 = vadd.f32 %v2707, %v3435
      %v3437 = vpop.f32.mrf.mxu0
      %v3438 = vadd.f32 %v2709, %v3437
      %3439 = vmatmul.bf16.gmra.mxu0 %v2096
      %v3440 = vpop.f32.mrf.mxu0
      %v3441 = vadd.f32 %v2712, %v3440
      %v3442 = vpop.f32.mrf.mxu0
      %v3443 = vadd.f32 %v2714, %v3442
      %3444 = vmatmul.bf16.gmra.mxu0 %v2099
      %v3445 = vpop.f32.mrf.mxu0
      %v3446 = vadd.f32 %v2717, %v3445
      %v3447 = vpop.f32.mrf.mxu0
      %v3448 = vadd.f32 %v2719, %v3447
      %3449 = vmatmul.bf16.gmra.mxu0 %v2102
      %v3450 = vpop.f32.mrf.mxu0
      %v3451 = vadd.f32 %v2722, %v3450
      %v3452 = vpop.f32.mrf.mxu0
      %v3453 = vadd.f32 %v2724, %v3452
      %3454 = vmatmul.bf16.gmra.mxu0 %v2105
      %v3455 = vpop.f32.mrf.mxu0
      %v3456 = vadd.f32 %v2727, %v3455
      %v3457 = vpop.f32.mrf.mxu0
      %v3458 = vadd.f32 %v2729, %v3457
      %3459 = vmatmul.bf16.gmra.mxu0 %v2108
      %v3460 = vpop.f32.mrf.mxu0
      %v3461 = vadd.f32 %v2732, %v3460
      %v3462 = vpop.f32.mrf.mxu0
      %v3463 = vadd.f32 %v2734, %v3462
      %3464 = vmatmul.bf16.gmra.mxu0 %v2111
      %v3465 = vpop.f32.mrf.mxu0
      %v3466 = vadd.f32 %v2737, %v3465
      %v3467 = vpop.f32.mrf.mxu0
      %v3468 = vadd.f32 %v2739, %v3467
      %3469 = vmatmul.bf16.gmra.mxu0 %v2114
      %v3470 = vpop.f32.mrf.mxu0
      %v3471 = vadd.f32 %v2742, %v3470
      %v3472 = vpop.f32.mrf.mxu0
      %v3473 = vadd.f32 %v2744, %v3472
      %3474 = vmatmul.bf16.gmra.mxu0 %v2117
      %v3475 = vpop.f32.mrf.mxu0
      %v3476 = vadd.f32 %v2747, %v3475
      %v3477 = vpop.f32.mrf.mxu0
      %v3478 = vadd.f32 %v2749, %v3477
      %3479 = vmatmul.bf16.gmra.mxu0 %v2120
      %v3480 = vpop.f32.mrf.mxu0
      %v3481 = vadd.f32 %v2752, %v3480
      %v3482 = vpop.f32.mrf.mxu0
      %v3483 = vadd.f32 %v2754, %v3482
      %3484 = vmatmul.bf16.gmra.mxu0 %v2123
      %v3485 = vpop.f32.mrf.mxu0
      %v3486 = vadd.f32 %v2757, %v3485
      %v3487 = vpop.f32.mrf.mxu0
      %v3488 = vadd.f32 %v2759, %v3487
      %3489 = vmatmul.bf16.gmra.mxu0 %v2126
      %v3490 = vpop.f32.mrf.mxu0
      %v3491 = vadd.f32 %v2762, %v3490
      %v3492 = vpop.f32.mrf.mxu0
      %v3493 = vadd.f32 %v2764, %v3492
      %3494 = vmatmul.bf16.gmra.mxu0 %v2129
      %v3495 = vpop.f32.mrf.mxu0
      %v3496 = vadd.f32 %v2767, %v3495
      %v3497 = vpop.f32.mrf.mxu0
      %v3498 = vadd.f32 %v2769, %v3497
      %3499 = vmatmul.bf16.gmra.mxu0 %v2132
      %v3500 = vpop.f32.mrf.mxu0
      %v3501 = vadd.f32 %v2772, %v3500
      %v3502 = vpop.f32.mrf.mxu0
      %v3503 = vadd.f32 %v2774, %v3502
      %3504 = vmatmul.bf16.gmra.mxu0 %v2135
      %v3505 = vpop.f32.mrf.mxu0
      %v3506 = vadd.f32 %v2777, %v3505
      %v3507 = vpop.f32.mrf.mxu0
      %v3508 = vadd.f32 %v2779, %v3507
      %3509 = vmatmul.bf16.gmra.mxu0 %v2138
      %v3510 = vpop.f32.mrf.mxu0
      %v3511 = vadd.f32 %v2782, %v3510
      %v3512 = vpop.f32.mrf.mxu0
      %v3513 = vadd.f32 %v2784, %v3512
      %3514 = vmatmul.bf16.gmra.mxu0 %v2141
      %v3515 = vpop.f32.mrf.mxu0
      %v3516 = vadd.f32 %v2787, %v3515
      %v3517 = vpop.f32.mrf.mxu0
      %v3518 = vadd.f32 %v2789, %v3517
      %3519 = vmatmul.bf16.gmra.mxu0 %v2144
      %v3520 = vpop.f32.mrf.mxu0
      %v3521 = vadd.f32 %v2792, %v3520
      %v3522 = vpop.f32.mrf.mxu0
      %v3523 = vadd.f32 %v2794, %v3522
      %3524 = vmatmul.bf16.gmra.mxu0 %v2147
      %v3525 = vpop.f32.mrf.mxu0
      %v3526 = vadd.f32 %v2797, %v3525
      %v3527 = vpop.f32.mrf.mxu0
      %v3528 = vadd.f32 %v2799, %v3527
      %3529 = vmatmul.bf16.gmra.mxu0 %v2150
      %v3530 = vpop.f32.mrf.mxu0
      %v3531 = vadd.f32 %v2802, %v3530
      %v3532 = vpop.f32.mrf.mxu0
      %v3533 = vadd.f32 %v2804, %v3532
      %3534 = vmatmul.bf16.gmra.mxu0 %v2153
      %v3535 = vpop.f32.mrf.mxu0
      %v3536 = vadd.f32 %v2807, %v3535
      %v3537 = vpop.f32.mrf.mxu0
      %v3538 = vadd.f32 %v2809, %v3537
      %3539 = vmatmul.bf16.gmra.mxu0 %v2156
      %v3540 = vpop.f32.mrf.mxu0
      %v3541 = vadd.f32 %v2812, %v3540
      %v3542 = vpop.f32.mrf.mxu0
      %v3543 = vadd.f32 %v2814, %v3542
      %3544 = vmatmul.bf16.gmra.mxu0 %v2159
      %v3545 = vpop.f32.mrf.mxu0
      %v3546 = vadd.f32 %v2817, %v3545
      %v3547 = vpop.f32.mrf.mxu0
      %v3548 = vadd.f32 %v2819, %v3547
      %3549 = vmatmul.bf16.gmra.mxu0 %v2162
      %v3550 = vpop.f32.mrf.mxu0
      %v3551 = vadd.f32 %v2822, %v3550
      %v3552 = vpop.f32.mrf.mxu0
      %v3553 = vadd.f32 %v2824, %v3552
      %3554 = vmatmul.bf16.gmra.mxu0 %v2165
      %v3555 = vpop.f32.mrf.mxu0
      %v3556 = vadd.f32 %v2827, %v3555
      %v3557 = vpop.f32.mrf.mxu0
      %v3558 = vadd.f32 %v2829, %v3557
      %3559 = vmatmul.bf16.gmra.mxu0 %v2168
      %v3560 = vpop.f32.mrf.mxu0
      %v3561 = vadd.f32 %v2832, %v3560
      %v3562 = vpop.f32.mrf.mxu0
      %v3563 = vadd.f32 %v2834, %v3562
      %3564 = vmatmul.bf16.gmra.mxu0 %v2171
      %v3565 = vpop.f32.mrf.mxu0
      %v3566 = vadd.f32 %v2837, %v3565
      %v3567 = vpop.f32.mrf.mxu0
      %v3568 = vadd.f32 %v2839, %v3567
      %3569 = vmatmul.bf16.gmra.mxu0 %v2174
      %v3570 = vpop.f32.mrf.mxu0
      %v3571 = vadd.f32 %v2842, %v3570
      %v3572 = vpop.f32.mrf.mxu0
      %v3573 = vadd.f32 %v2844, %v3572
      %3574 = vmatmul.bf16.gmra.mxu0 %v2177
      %v3575 = vpop.f32.mrf.mxu0
      %v3576 = vadd.f32 %v2847, %v3575
      %v3577 = vpop.f32.mrf.mxu0
      %v3578 = vadd.f32 %v2849, %v3577
      %3579 = vmatmul.bf16.gmra.mxu0 %v2180
      %v3580 = vpop.f32.mrf.mxu0
      %v3581 = vadd.f32 %v2852, %v3580
      %v3582 = vpop.f32.mrf.mxu0
      %v3583 = vadd.f32 %v2854, %v3582
      %3584 = vmatmul.bf16.gmra.mxu0 %v2183
      %v3585 = vpop.f32.mrf.mxu0
      %v3586 = vadd.f32 %v2857, %v3585
      %v3587 = vpop.f32.mrf.mxu0
      %v3588 = vadd.f32 %v2859, %v3587
      %3589 = vmatmul.bf16.gmra.mxu0 %v2186
      %v3590 = vpop.f32.mrf.mxu0
      %v3591 = vadd.f32 %v2862, %v3590
      %v3592 = vpop.f32.mrf.mxu0
      %v3593 = vadd.f32 %v2864, %v3592
      %3594 = vmatmul.bf16.gmra.mxu0 %v2189
      %v3595 = vpop.f32.mrf.mxu0
      %v3596 = vadd.f32 %v2867, %v3595
      %v3597 = vpop.f32.mrf.mxu0
      %v3598 = vadd.f32 %v2869, %v3597
      %3599 = vmatmul.bf16.gmra.mxu0 %v2192
      %v3600 = vpop.f32.mrf.mxu0
      %v3601 = vadd.f32 %v2872, %v3600
      %v3602 = vpop.f32.mrf.mxu0
      %v3603 = vadd.f32 %v2874, %v3602
      %3604 = vmatmul.bf16.gmra.mxu0 %v2195
      %v3605 = vpop.f32.mrf.mxu0
      %v3606 = vadd.f32 %v2877, %v3605
      %v3607 = vpop.f32.mrf.mxu0
      %v3608 = vadd.f32 %v2879, %v3607
      %3609 = vmatmul.bf16.gmra.mxu0 %v2198
      %v3610 = vpop.f32.mrf.mxu0
      %v3611 = vadd.f32 %v2882, %v3610
      %v3612 = vpop.f32.mrf.mxu0
      %v3613 = vadd.f32 %v2884, %v3612
      %3614 = vmatmul.bf16.gmra.mxu0 %v2201
      %v3615 = vpop.f32.mrf.mxu0
      %v3616 = vadd.f32 %v2887, %v3615
      %v3617 = vpop.f32.mrf.mxu0
      %v3618 = vadd.f32 %v2889, %v3617
      %3619 = vmatmul.bf16.gmra.mxu0 %v2204
      %v3620 = vpop.f32.mrf.mxu0
      %v3621 = vadd.f32 %v2892, %v3620
      %v3622 = vpop.f32.mrf.mxu0
      %v3623 = vadd.f32 %v2894, %v3622
      %3624 = vmatmul.bf16.gmra.mxu0 %v2207
      %v3625 = vpop.f32.mrf.mxu0
      %v3626 = vadd.f32 %v2897, %v3625
      %v3627 = vpop.f32.mrf.mxu0
      %v3628 = vadd.f32 %v2899, %v3627
      %3629 = vmatmul.bf16.gmra.mxu0 %v2210
      %v3630 = vpop.f32.mrf.mxu0
      %v3631 = vadd.f32 %v2902, %v3630
      %v3632 = vpop.f32.mrf.mxu0
      %v3633 = vadd.f32 %v2904, %v3632
      %3634 = vmatmul.bf16.gmra.mxu0 %v2213
      %v3635 = vpop.f32.mrf.mxu0
      %v3636 = vadd.f32 %v2907, %v3635
      %v3637 = vpop.f32.mrf.mxu0
      %v3638 = vadd.f32 %v2909, %v3637
      %3639 = vmatmul.bf16.gmra.mxu0 %v2216
      %v3640 = vpop.f32.mrf.mxu0
      %v3641 = vadd.f32 %v2912, %v3640
      %v3642 = vpop.f32.mrf.mxu0
      %v3643 = vadd.f32 %v2914, %v3642
      %3644 = vmatmul.bf16.gmra.mxu0 %v2219
      %v3645 = vpop.f32.mrf.mxu0
      %v3646 = vadd.f32 %v2917, %v3645
      %v3647 = vpop.f32.mrf.mxu0
      %v3648 = vadd.f32 %v2919, %v3647
      %3649 = vmatmul.bf16.gmra.mxu0 %v2222
      %v3650 = vpop.f32.mrf.mxu0
      %v3651 = vadd.f32 %v2922, %v3650
      %v3652 = vpop.f32.mrf.mxu0
      %v3653 = vadd.f32 %v2924, %v3652
      %3654 = vmatmul.bf16.gmra.mxu0 %v2225
      %v3655 = vpop.f32.mrf.mxu0
      %v3656 = vadd.f32 %v2927, %v3655
      %v3657 = vpop.f32.mrf.mxu0
      %v3658 = vadd.f32 %v2929, %v3657
      %3659 = vmatmul.bf16.gmra.mxu0 %v2228
      %v3660 = vpop.f32.mrf.mxu0
      %v3661 = vadd.f32 %v2932, %v3660
      %v3662 = vpop.f32.mrf.mxu0
      %v3663 = vadd.f32 %v2934, %v3662
      %3664 = vmatmul.bf16.gmra.mxu0 %v2231
      %v3665 = vpop.f32.mrf.mxu0
      %v3666 = vadd.f32 %v2937, %v3665
      %v3667 = vpop.f32.mrf.mxu0
      %v3668 = vadd.f32 %v2939, %v3667
      %3669 = vmatmul.bf16.gmra.mxu0 %v2234
      %v3670 = vpop.f32.mrf.mxu0
      %v3671 = vadd.f32 %v2942, %v3670
      %v3672 = vpop.f32.mrf.mxu0
      %v3673 = vadd.f32 %v2944, %v3672
      %3674 = vmatmul.bf16.gmra.mxu0 %v2237
      %v3675 = vpop.f32.mrf.mxu0
      %v3676 = vadd.f32 %v2947, %v3675
      %v3677 = vpop.f32.mrf.mxu0
      %v3678 = vadd.f32 %v2949, %v3677
      %3679 = vmatmul.bf16.gmra.mxu0 %v2240
      %v3680 = vpop.f32.mrf.mxu0
      %v3681 = vadd.f32 %v2952, %v3680
      %v3682 = vpop.f32.mrf.mxu0
      %v3683 = vadd.f32 %v2954, %v3682
      %3684 = vmatmul.bf16.gmra.mxu0 %v2243
      %v3685 = vpop.f32.mrf.mxu0
      %v3686 = vadd.f32 %v2957, %v3685
      %v3687 = vpop.f32.mrf.mxu0
      %v3688 = vadd.f32 %v2959, %v3687
      %3689 = vmatmul.bf16.gmra.mxu0 %v2246
      %v3690 = vpop.f32.mrf.mxu0
      %v3691 = vadd.f32 %v2962, %v3690
      %v3692 = vpop.f32.mrf.mxu0
      %v3693 = vadd.f32 %v2964, %v3692
      %3694 = vmatmul.bf16.gmra.mxu0 %v2249
      %v3695 = vpop.f32.mrf.mxu0
      %v3696 = vadd.f32 %v2967, %v3695
      %v3697 = vpop.f32.mrf.mxu0
      %v3698 = vadd.f32 %v2969, %v3697
      %3699 = vmatmul.bf16.gmra.mxu0 %v2252
      %v3700 = vpop.f32.mrf.mxu0
      %v3701 = vadd.f32 %v2972, %v3700
      %v3702 = vpop.f32.mrf.mxu0
      %v3703 = vadd.f32 %v2974, %v3702
      %3704 = vmatmul.bf16.gmra.mxu0 %v2255
      %v3705 = vpop.f32.mrf.mxu0
      %v3706 = vadd.f32 %v2977, %v3705
      %v3707 = vpop.f32.mrf.mxu0
      %v3708 = vadd.f32 %v2979, %v3707
      %3709 = vmatmul.bf16.gmra.mxu0 %v2258
      %v3710 = vpop.f32.mrf.mxu0
      %v3711 = vadd.f32 %v2982, %v3710
      %v3712 = vpop.f32.mrf.mxu0
      %v3713 = vadd.f32 %v2984, %v3712
      %3714 = vmatmul.bf16.gmra.mxu0 %v2261
      %v3715 = vpop.f32.mrf.mxu0
      %v3716 = vadd.f32 %v2987, %v3715
      %v3717 = vpop.f32.mrf.mxu0
      %v3718 = vadd.f32 %v2989, %v3717
      %3719 = vmatmul.bf16.gmra.mxu0 %v2264
      %v3720 = vpop.f32.mrf.mxu0
      %v3721 = vadd.f32 %v2992, %v3720
      %v3722 = vpop.f32.mrf.mxu0
      %v3723 = vadd.f32 %v2994, %v3722
      %3724 = vmatmul.bf16.gmra.mxu0 %v2267
      %v3725 = vpop.f32.mrf.mxu0
      %v3726 = vadd.f32 %v2997, %v3725
      %v3727 = vpop.f32.mrf.mxu0
      %v3728 = vadd.f32 %v2999, %v3727
      %3729 = vmatmul.bf16.gmra.mxu0 %v2270
      %v3730 = vpop.f32.mrf.mxu0
      %v3731 = vadd.f32 %v3002, %v3730
      %v3732 = vpop.f32.mrf.mxu0
      %v3733 = vadd.f32 %v3004, %v3732
      %3734 = vmatmul.bf16.gmra.mxu0 %v2273
      %v3735 = vpop.f32.mrf.mxu0
      %v3736 = vadd.f32 %v3007, %v3735
      %v3737 = vpop.f32.mrf.mxu0
      %v3738 = vadd.f32 %v3009, %v3737
      %3739 = vdwg.mxu0
      %v3740 = vmax.f32 %v3021, 0.0
      %v3741 = vmax.f32 %v3023, 0.0
      %v3742 = vmax.f32 %v3026, 0.0
      %v3743 = vmax.f32 %v3028, 0.0
      %v3744 = vmax.f32 %v3031, 0.0
      %v3745 = vmax.f32 %v3033, 0.0
      %v3746 = vmax.f32 %v3036, 0.0
      %v3747 = vmax.f32 %v3038, 0.0
      %v3748 = vmax.f32 %v3041, 0.0
      %v3749 = vmax.f32 %v3043, 0.0
      %v3750 = vmax.f32 %v3046, 0.0
      %v3751 = vmax.f32 %v3048, 0.0
      %v3752 = vmax.f32 %v3051, 0.0
      %v3753 = vmax.f32 %v3053, 0.0
      %v3754 = vmax.f32 %v3056, 0.0
      %v3755 = vmax.f32 %v3058, 0.0
      %v3756 = vmax.f32 %v3061, 0.0
      %v3757 = vmax.f32 %v3063, 0.0
      %v3758 = vmax.f32 %v3066, 0.0
      %v3759 = vmax.f32 %v3068, 0.0
      %v3760 = vmax.f32 %v3071, 0.0
      %v3761 = vmax.f32 %v3073, 0.0
      %v3762 = vmax.f32 %v3076, 0.0
      %v3763 = vmax.f32 %v3078, 0.0
      %v3764 = vmax.f32 %v3081, 0.0
      %v3765 = vmax.f32 %v3083, 0.0
      %v3766 = vmax.f32 %v3086, 0.0
      %v3767 = vmax.f32 %v3088, 0.0
      %v3768 = vmax.f32 %v3091, 0.0
      %v3769 = vmax.f32 %v3093, 0.0
      %v3770 = vmax.f32 %v3096, 0.0
      %v3771 = vmax.f32 %v3098, 0.0
      %v3772 = vmax.f32 %v3101, 0.0
      %v3773 = vmax.f32 %v3103, 0.0
      %v3774 = vmax.f32 %v3106, 0.0
      %v3775 = vmax.f32 %v3108, 0.0
      %v3776 = vmax.f32 %v3111, 0.0
      %v3777 = vmax.f32 %v3113, 0.0
      %v3778 = vmax.f32 %v3116, 0.0
      %v3779 = vmax.f32 %v3118, 0.0
      %v3780 = vmax.f32 %v3121, 0.0
      %v3781 = vmax.f32 %v3123, 0.0
      %v3782 = vmax.f32 %v3126, 0.0
      %v3783 = vmax.f32 %v3128, 0.0
      %v3784 = vmax.f32 %v3131, 0.0
      %v3785 = vmax.f32 %v3133, 0.0
      %v3786 = vmax.f32 %v3136, 0.0
      %v3787 = vmax.f32 %v3138, 0.0
      %v3788 = vmax.f32 %v3141, 0.0
      %v3789 = vmax.f32 %v3143, 0.0
      %v3790 = vmax.f32 %v3146, 0.0
      %v3791 = vmax.f32 %v3148, 0.0
      %v3792 = vmax.f32 %v3151, 0.0
      %v3793 = vmax.f32 %v3153, 0.0
      %v3794 = vmax.f32 %v3156, 0.0
      %v3795 = vmax.f32 %v3158, 0.0
      %v3796 = vmax.f32 %v3161, 0.0
      %v3797 = vmax.f32 %v3163, 0.0
      %v3798 = vmax.f32 %v3166, 0.0
      %v3799 = vmax.f32 %v3168, 0.0
      %v3800 = vmax.f32 %v3171, 0.0
      %v3801 = vmax.f32 %v3173, 0.0
      %v3802 = vmax.f32 %v3176, 0.0
      %v3803 = vmax.f32 %v3178, 0.0
      %v3804 = vmax.f32 %v3181, 0.0
      %v3805 = vmax.f32 %v3183, 0.0
      %v3806 = vmax.f32 %v3186, 0.0
      %v3807 = vmax.f32 %v3188, 0.0
      %v3808 = vmax.f32 %v3191, 0.0
      %v3809 = vmax.f32 %v3193, 0.0
      %v3810 = vmax.f32 %v3196, 0.0
      %v3811 = vmax.f32 %v3198, 0.0
      %v3812 = vmax.f32 %v3201, 0.0
      %v3813 = vmax.f32 %v3203, 0.0
      %v3814 = vmax.f32 %v3206, 0.0
      %v3815 = vmax.f32 %v3208, 0.0
      %v3816 = vmax.f32 %v3211, 0.0
      %v3817 = vmax.f32 %v3213, 0.0
      %v3818 = vmax.f32 %v3216, 0.0
      %v3819 = vmax.f32 %v3218, 0.0
      %v3820 = vmax.f32 %v3221, 0.0
      %v3821 = vmax.f32 %v3223, 0.0
      %v3822 = vmax.f32 %v3226, 0.0
      %v3823 = vmax.f32 %v3228, 0.0
      %v3824 = vmax.f32 %v3231, 0.0
      %v3825 = vmax.f32 %v3233, 0.0
      %v3826 = vmax.f32 %v3236, 0.0
      %v3827 = vmax.f32 %v3238, 0.0
      %v3828 = vmax.f32 %v3241, 0.0
      %v3829 = vmax.f32 %v3243, 0.0
      %v3830 = vmax.f32 %v3246, 0.0
      %v3831 = vmax.f32 %v3248, 0.0
      %v3832 = vmax.f32 %v3251, 0.0
      %v3833 = vmax.f32 %v3253, 0.0
      %v3834 = vmax.f32 %v3256, 0.0
      %v3835 = vmax.f32 %v3258, 0.0
      %v3836 = vmax.f32 %v3261, 0.0
      %v3837 = vmax.f32 %v3263, 0.0
      %v3838 = vmax.f32 %v3266, 0.0
      %v3839 = vmax.f32 %v3268, 0.0
      %v3840 = vmax.f32 %v3271, 0.0
      %v3841 = vmax.f32 %v3273, 0.0
      %v3842 = vmax.f32 %v3276, 0.0
      %v3843 = vmax.f32 %v3278, 0.0
      %v3844 = vmax.f32 %v3281, 0.0
      %v3845 = vmax.f32 %v3283, 0.0
      %v3846 = vmax.f32 %v3286, 0.0
      %v3847 = vmax.f32 %v3288, 0.0
      %v3848 = vmax.f32 %v3291, 0.0
      %v3849 = vmax.f32 %v3293, 0.0
      %v3850 = vmax.f32 %v3296, 0.0
      %v3851 = vmax.f32 %v3298, 0.0
      %v3852 = vmax.f32 %v3301, 0.0
      %v3853 = vmax.f32 %v3303, 0.0
      %v3854 = vmax.f32 %v3306, 0.0
      %v3855 = vmax.f32 %v3308, 0.0
      %v3856 = vmax.f32 %v3311, 0.0
      %v3857 = vmax.f32 %v3313, 0.0
      %v3858 = vmax.f32 %v3316, 0.0
      %v3859 = vmax.f32 %v3318, 0.0
      %v3860 = vmax.f32 %v3321, 0.0
      %v3861 = vmax.f32 %v3323, 0.0
      %v3862 = vmax.f32 %v3326, 0.0
      %v3863 = vmax.f32 %v3328, 0.0
      %v3864 = vmax.f32 %v3331, 0.0
      %v3865 = vmax.f32 %v3333, 0.0
      %v3866 = vmax.f32 %v3336, 0.0
      %v3867 = vmax.f32 %v3338, 0.0
      %v3868 = vmax.f32 %v3341, 0.0
      %v3869 = vmax.f32 %v3343, 0.0
      %v3870 = vmax.f32 %v3346, 0.0
      %v3871 = vmax.f32 %v3348, 0.0
      %v3872 = vmax.f32 %v3351, 0.0
      %v3873 = vmax.f32 %v3353, 0.0
      %v3874 = vmax.f32 %v3356, 0.0
      %v3875 = vmax.f32 %v3358, 0.0
      %v3876 = vmax.f32 %v3361, 0.0
      %v3877 = vmax.f32 %v3363, 0.0
      %v3878 = vmax.f32 %v3366, 0.0
      %v3879 = vmax.f32 %v3368, 0.0
      %v3880 = vmax.f32 %v3371, 0.0
      %v3881 = vmax.f32 %v3373, 0.0
      %v3882 = vmax.f32 %v3376, 0.0
      %v3883 = vmax.f32 %v3378, 0.0
      %v3884 = vmax.f32 %v3381, 0.0
      %v3885 = vmax.f32 %v3383, 0.0
      %v3886 = vmax.f32 %v3386, 0.0
      %v3887 = vmax.f32 %v3388, 0.0
      %v3888 = vmax.f32 %v3391, 0.0
      %v3889 = vmax.f32 %v3393, 0.0
      %v3890 = vmax.f32 %v3396, 0.0
      %v3891 = vmax.f32 %v3398, 0.0
      %v3892 = vmax.f32 %v3401, 0.0
      %v3893 = vmax.f32 %v3403, 0.0
      %v3894 = vmax.f32 %v3406, 0.0
      %v3895 = vmax.f32 %v3408, 0.0
      %v3896 = vmax.f32 %v3411, 0.0
      %v3897 = vmax.f32 %v3413, 0.0
      %v3898 = vmax.f32 %v3416, 0.0
      %v3899 = vmax.f32 %v3418, 0.0
      %v3900 = vmax.f32 %v3421, 0.0
      %v3901 = vmax.f32 %v3423, 0.0
      %v3902 = vmax.f32 %v3426, 0.0
      %v3903 = vmax.f32 %v3428, 0.0
      %v3904 = vmax.f32 %v3431, 0.0
      %v3905 = vmax.f32 %v3433, 0.0
      %v3906 = vmax.f32 %v3436, 0.0
      %v3907 = vmax.f32 %v3438, 0.0
      %v3908 = vmax.f32 %v3441, 0.0
      %v3909 = vmax.f32 %v3443, 0.0
      %v3910 = vmax.f32 %v3446, 0.0
      %v3911 = vmax.f32 %v3448, 0.0
      %v3912 = vmax.f32 %v3451, 0.0
      %v3913 = vmax.f32 %v3453, 0.0
      %v3914 = vmax.f32 %v3456, 0.0
      %v3915 = vmax.f32 %v3458, 0.0
      %v3916 = vmax.f32 %v3461, 0.0
      %v3917 = vmax.f32 %v3463, 0.0
      %v3918 = vmax.f32 %v3466, 0.0
      %v3919 = vmax.f32 %v3468, 0.0
      %v3920 = vmax.f32 %v3471, 0.0
      %v3921 = vmax.f32 %v3473, 0.0
      %v3922 = vmax.f32 %v3476, 0.0
      %v3923 = vmax.f32 %v3478, 0.0
      %v3924 = vmax.f32 %v3481, 0.0
      %v3925 = vmax.f32 %v3483, 0.0
      %v3926 = vmax.f32 %v3486, 0.0
      %v3927 = vmax.f32 %v3488, 0.0
      %v3928 = vmax.f32 %v3491, 0.0
      %v3929 = vmax.f32 %v3493, 0.0
      %v3930 = vmax.f32 %v3496, 0.0
      %v3931 = vmax.f32 %v3498, 0.0
      %v3932 = vmax.f32 %v3501, 0.0
      %v3933 = vmax.f32 %v3503, 0.0
      %v3934 = vmax.f32 %v3506, 0.0
      %v3935 = vmax.f32 %v3508, 0.0
      %v3936 = vmax.f32 %v3511, 0.0
      %v3937 = vmax.f32 %v3513, 0.0
      %v3938 = vmax.f32 %v3516, 0.0
      %v3939 = vmax.f32 %v3518, 0.0
      %v3940 = vmax.f32 %v3521, 0.0
      %v3941 = vmax.f32 %v3523, 0.0
      %v3942 = vmax.f32 %v3526, 0.0
      %v3943 = vmax.f32 %v3528, 0.0
      %v3944 = vmax.f32 %v3531, 0.0
      %v3945 = vmax.f32 %v3533, 0.0
      %v3946 = vmax.f32 %v3536, 0.0
      %v3947 = vmax.f32 %v3538, 0.0
      %v3948 = vmax.f32 %v3541, 0.0
      %v3949 = vmax.f32 %v3543, 0.0
      %v3950 = vmax.f32 %v3546, 0.0
      %v3951 = vmax.f32 %v3548, 0.0
      %v3952 = vmax.f32 %v3551, 0.0
      %v3953 = vmax.f32 %v3553, 0.0
      %v3954 = vmax.f32 %v3556, 0.0
      %v3955 = vmax.f32 %v3558, 0.0
      %v3956 = vmax.f32 %v3561, 0.0
      %v3957 = vmax.f32 %v3563, 0.0
      %v3958 = vmax.f32 %v3566, 0.0
      %v3959 = vmax.f32 %v3568, 0.0
      %v3960 = vmax.f32 %v3571, 0.0
      %v3961 = vmax.f32 %v3573, 0.0
      %v3962 = vmax.f32 %v3576, 0.0
      %v3963 = vmax.f32 %v3578, 0.0
      %v3964 = vmax.f32 %v3581, 0.0
      %v3965 = vmax.f32 %v3583, 0.0
      %v3966 = vmax.f32 %v3586, 0.0
      %v3967 = vmax.f32 %v3588, 0.0
      %v3968 = vmax.f32 %v3591, 0.0
      %v3969 = vmax.f32 %v3593, 0.0
      %v3970 = vmax.f32 %v3596, 0.0
      %v3971 = vmax.f32 %v3598, 0.0
      %v3972 = vmax.f32 %v3601, 0.0
      %v3973 = vmax.f32 %v3603, 0.0
      %v3974 = vmax.f32 %v3606, 0.0
      %v3975 = vmax.f32 %v3608, 0.0
      %v3976 = vmax.f32 %v3611, 0.0
      %v3977 = vmax.f32 %v3613, 0.0
      %v3978 = vmax.f32 %v3616, 0.0
      %v3979 = vmax.f32 %v3618, 0.0
      %v3980 = vmax.f32 %v3621, 0.0
      %v3981 = vmax.f32 %v3623, 0.0
      %v3982 = vmax.f32 %v3626, 0.0
      %v3983 = vmax.f32 %v3628, 0.0
      %v3984 = vmax.f32 %v3631, 0.0
      %v3985 = vmax.f32 %v3633, 0.0
      %v3986 = vmax.f32 %v3636, 0.0
      %v3987 = vmax.f32 %v3638, 0.0
      %v3988 = vmax.f32 %v3641, 0.0
      %v3989 = vmax.f32 %v3643, 0.0
      %v3990 = vmax.f32 %v3646, 0.0
      %v3991 = vmax.f32 %v3648, 0.0
      %v3992 = vmax.f32 %v3651, 0.0
      %v3993 = vmax.f32 %v3653, 0.0
      %v3994 = vmax.f32 %v3656, 0.0
      %v3995 = vmax.f32 %v3658, 0.0
      %v3996 = vmax.f32 %v3661, 0.0
      %v3997 = vmax.f32 %v3663, 0.0
      %v3998 = vmax.f32 %v3666, 0.0
      %v3999 = vmax.f32 %v3668, 0.0
      %v4000 = vmax.f32 %v3671, 0.0
      %v4001 = vmax.f32 %v3673, 0.0
      %v4002 = vmax.f32 %v3676, 0.0
      %v4003 = vmax.f32 %v3678, 0.0
      %v4004 = vmax.f32 %v3681, 0.0
      %v4005 = vmax.f32 %v3683, 0.0
      %v4006 = vmax.f32 %v3686, 0.0
      %v4007 = vmax.f32 %v3688, 0.0
      %v4008 = vmax.f32 %v3691, 0.0
      %v4009 = vmax.f32 %v3693, 0.0
      %v4010 = vmax.f32 %v3696, 0.0
      %v4011 = vmax.f32 %v3698, 0.0
      %v4012 = vmax.f32 %v3701, 0.0
      %v4013 = vmax.f32 %v3703, 0.0
      %v4014 = vmax.f32 %v3706, 0.0
      %v4015 = vmax.f32 %v3708, 0.0
      %v4016 = vmax.f32 %v3711, 0.0
      %v4017 = vmax.f32 %v3713, 0.0
      %v4018 = vmax.f32 %v3716, 0.0
      %v4019 = vmax.f32 %v3718, 0.0
      %v4020 = vmax.f32 %v3721, 0.0
      %v4021 = vmax.f32 %v3723, 0.0
      %v4022 = vmax.f32 %v3726, 0.0
      %v4023 = vmax.f32 %v3728, 0.0
      %v4024 = vmax.f32 %v3731, 0.0
      %v4025 = vmax.f32 %v3733, 0.0
      %v4026 = vmax.f32 %v3736, 0.0
      %v4027 = vmax.f32 %v3738, 0.0
      %v4028 = vpack.c.bf16 %v3740, %v3740
      %v4029 = vpack.c.bf16 %v3741, %v3741
      %v4030 = vpack.c.bf16 %v3742, %v3742
      %v4031 = vpack.c.bf16 %v3743, %v3743
      %v4032 = vpack.c.bf16 %v3744, %v3744
      %v4033 = vpack.c.bf16 %v3745, %v3745
      %v4034 = vpack.c.bf16 %v3746, %v3746
      %v4035 = vpack.c.bf16 %v3747, %v3747
      %v4036 = vpack.c.bf16 %v3748, %v3748
      %v4037 = vpack.c.bf16 %v3749, %v3749
      %v4038 = vpack.c.bf16 %v3750, %v3750
      %v4039 = vpack.c.bf16 %v3751, %v3751
      %v4040 = vpack.c.bf16 %v3752, %v3752
      %v4041 = vpack.c.bf16 %v3753, %v3753
      %v4042 = vpack.c.bf16 %v3754, %v3754
      %v4043 = vpack.c.bf16 %v3755, %v3755
      %v4044 = vpack.c.bf16 %v3756, %v3756
      %v4045 = vpack.c.bf16 %v3757, %v3757
      %v4046 = vpack.c.bf16 %v3758, %v3758
      %v4047 = vpack.c.bf16 %v3759, %v3759
      %v4048 = vpack.c.bf16 %v3760, %v3760
      %v4049 = vpack.c.bf16 %v3761, %v3761
      %v4050 = vpack.c.bf16 %v3762, %v3762
      %v4051 = vpack.c.bf16 %v3763, %v3763
      %v4052 = vpack.c.bf16 %v3764, %v3764
      %v4053 = vpack.c.bf16 %v3765, %v3765
      %v4054 = vpack.c.bf16 %v3766, %v3766
      %v4055 = vpack.c.bf16 %v3767, %v3767
      %v4056 = vpack.c.bf16 %v3768, %v3768
      %v4057 = vpack.c.bf16 %v3769, %v3769
      %v4058 = vpack.c.bf16 %v3770, %v3770
      %v4059 = vpack.c.bf16 %v3771, %v3771
      %v4060 = vpack.c.bf16 %v3772, %v3772
      %v4061 = vpack.c.bf16 %v3773, %v3773
      %v4062 = vpack.c.bf16 %v3774, %v3774
      %v4063 = vpack.c.bf16 %v3775, %v3775
      %v4064 = vpack.c.bf16 %v3776, %v3776
      %v4065 = vpack.c.bf16 %v3777, %v3777
      %v4066 = vpack.c.bf16 %v3778, %v3778
      %v4067 = vpack.c.bf16 %v3779, %v3779
      %v4068 = vpack.c.bf16 %v3780, %v3780
      %v4069 = vpack.c.bf16 %v3781, %v3781
      %v4070 = vpack.c.bf16 %v3782, %v3782
      %v4071 = vpack.c.bf16 %v3783, %v3783
      %v4072 = vpack.c.bf16 %v3784, %v3784
      %v4073 = vpack.c.bf16 %v3785, %v3785
      %v4074 = vpack.c.bf16 %v3786, %v3786
      %v4075 = vpack.c.bf16 %v3787, %v3787
      %v4076 = vpack.c.bf16 %v3788, %v3788
      %v4077 = vpack.c.bf16 %v3789, %v3789
      %v4078 = vpack.c.bf16 %v3790, %v3790
      %v4079 = vpack.c.bf16 %v3791, %v3791
      %v4080 = vpack.c.bf16 %v3792, %v3792
      %v4081 = vpack.c.bf16 %v3793, %v3793
      %v4082 = vpack.c.bf16 %v3794, %v3794
      %v4083 = vpack.c.bf16 %v3795, %v3795
      %v4084 = vpack.c.bf16 %v3796, %v3796
      %v4085 = vpack.c.bf16 %v3797, %v3797
      %v4086 = vpack.c.bf16 %v3798, %v3798
      %v4087 = vpack.c.bf16 %v3799, %v3799
      %v4088 = vpack.c.bf16 %v3800, %v3800
      %v4089 = vpack.c.bf16 %v3801, %v3801
      %v4090 = vpack.c.bf16 %v3802, %v3802
      %v4091 = vpack.c.bf16 %v3803, %v3803
      %v4092 = vpack.c.bf16 %v3804, %v3804
      %v4093 = vpack.c.bf16 %v3805, %v3805
      %v4094 = vpack.c.bf16 %v3806, %v3806
      %v4095 = vpack.c.bf16 %v3807, %v3807
      %v4096 = vpack.c.bf16 %v3808, %v3808
      %v4097 = vpack.c.bf16 %v3809, %v3809
      %v4098 = vpack.c.bf16 %v3810, %v3810
      %v4099 = vpack.c.bf16 %v3811, %v3811
      %v4100 = vpack.c.bf16 %v3812, %v3812
      %v4101 = vpack.c.bf16 %v3813, %v3813
      %v4102 = vpack.c.bf16 %v3814, %v3814
      %v4103 = vpack.c.bf16 %v3815, %v3815
      %v4104 = vpack.c.bf16 %v3816, %v3816
      %v4105 = vpack.c.bf16 %v3817, %v3817
      %v4106 = vpack.c.bf16 %v3818, %v3818
      %v4107 = vpack.c.bf16 %v3819, %v3819
      %v4108 = vpack.c.bf16 %v3820, %v3820
      %v4109 = vpack.c.bf16 %v3821, %v3821
      %v4110 = vpack.c.bf16 %v3822, %v3822
      %v4111 = vpack.c.bf16 %v3823, %v3823
      %v4112 = vpack.c.bf16 %v3824, %v3824
      %v4113 = vpack.c.bf16 %v3825, %v3825
      %v4114 = vpack.c.bf16 %v3826, %v3826
      %v4115 = vpack.c.bf16 %v3827, %v3827
      %v4116 = vpack.c.bf16 %v3828, %v3828
      %v4117 = vpack.c.bf16 %v3829, %v3829
      %v4118 = vpack.c.bf16 %v3830, %v3830
      %v4119 = vpack.c.bf16 %v3831, %v3831
      %v4120 = vpack.c.bf16 %v3832, %v3832
      %v4121 = vpack.c.bf16 %v3833, %v3833
      %v4122 = vpack.c.bf16 %v3834, %v3834
      %v4123 = vpack.c.bf16 %v3835, %v3835
      %v4124 = vpack.c.bf16 %v3836, %v3836
      %v4125 = vpack.c.bf16 %v3837, %v3837
      %v4126 = vpack.c.bf16 %v3838, %v3838
      %v4127 = vpack.c.bf16 %v3839, %v3839
      %v4128 = vpack.c.bf16 %v3840, %v3840
      %v4129 = vpack.c.bf16 %v3841, %v3841
      %v4130 = vpack.c.bf16 %v3842, %v3842
      %v4131 = vpack.c.bf16 %v3843, %v3843
      %v4132 = vpack.c.bf16 %v3844, %v3844
      %v4133 = vpack.c.bf16 %v3845, %v3845
      %v4134 = vpack.c.bf16 %v3846, %v3846
      %v4135 = vpack.c.bf16 %v3847, %v3847
      %v4136 = vpack.c.bf16 %v3848, %v3848
      %v4137 = vpack.c.bf16 %v3849, %v3849
      %v4138 = vpack.c.bf16 %v3850, %v3850
      %v4139 = vpack.c.bf16 %v3851, %v3851
      %v4140 = vpack.c.bf16 %v3852, %v3852
      %v4141 = vpack.c.bf16 %v3853, %v3853
      %v4142 = vpack.c.bf16 %v3854, %v3854
      %v4143 = vpack.c.bf16 %v3855, %v3855
      %v4144 = vpack.c.bf16 %v3856, %v3856
      %v4145 = vpack.c.bf16 %v3857, %v3857
      %v4146 = vpack.c.bf16 %v3858, %v3858
      %v4147 = vpack.c.bf16 %v3859, %v3859
      %v4148 = vpack.c.bf16 %v3860, %v3860
      %v4149 = vpack.c.bf16 %v3861, %v3861
      %v4150 = vpack.c.bf16 %v3862, %v3862
      %v4151 = vpack.c.bf16 %v3863, %v3863
      %v4152 = vpack.c.bf16 %v3864, %v3864
      %v4153 = vpack.c.bf16 %v3865, %v3865
      %v4154 = vpack.c.bf16 %v3866, %v3866
      %v4155 = vpack.c.bf16 %v3867, %v3867
      %v4156 = vpack.c.bf16 %v3868, %v3868
      %v4157 = vpack.c.bf16 %v3869, %v3869
      %v4158 = vpack.c.bf16 %v3870, %v3870
      %v4159 = vpack.c.bf16 %v3871, %v3871
      %v4160 = vpack.c.bf16 %v3872, %v3872
      %v4161 = vpack.c.bf16 %v3873, %v3873
      %v4162 = vpack.c.bf16 %v3874, %v3874
      %v4163 = vpack.c.bf16 %v3875, %v3875
      %v4164 = vpack.c.bf16 %v3876, %v3876
      %v4165 = vpack.c.bf16 %v3877, %v3877
      %v4166 = vpack.c.bf16 %v3878, %v3878
      %v4167 = vpack.c.bf16 %v3879, %v3879
      %v4168 = vpack.c.bf16 %v3880, %v3880
      %v4169 = vpack.c.bf16 %v3881, %v3881
      %v4170 = vpack.c.bf16 %v3882, %v3882
      %v4171 = vpack.c.bf16 %v3883, %v3883
      %v4172 = vpack.c.bf16 %v3884, %v3884
      %v4173 = vpack.c.bf16 %v3885, %v3885
      %v4174 = vpack.c.bf16 %v3886, %v3886
      %v4175 = vpack.c.bf16 %v3887, %v3887
      %v4176 = vpack.c.bf16 %v3888, %v3888
      %v4177 = vpack.c.bf16 %v3889, %v3889
      %v4178 = vpack.c.bf16 %v3890, %v3890
      %v4179 = vpack.c.bf16 %v3891, %v3891
      %v4180 = vpack.c.bf16 %v3892, %v3892
      %v4181 = vpack.c.bf16 %v3893, %v3893
      %v4182 = vpack.c.bf16 %v3894, %v3894
      %v4183 = vpack.c.bf16 %v3895, %v3895
      %v4184 = vpack.c.bf16 %v3896, %v3896
      %v4185 = vpack.c.bf16 %v3897, %v3897
      %v4186 = vpack.c.bf16 %v3898, %v3898
      %v4187 = vpack.c.bf16 %v3899, %v3899
      %v4188 = vpack.c.bf16 %v3900, %v3900
      %v4189 = vpack.c.bf16 %v3901, %v3901
      %v4190 = vpack.c.bf16 %v3902, %v3902
      %v4191 = vpack.c.bf16 %v3903, %v3903
      %v4192 = vpack.c.bf16 %v3904, %v3904
      %v4193 = vpack.c.bf16 %v3905, %v3905
      %v4194 = vpack.c.bf16 %v3906, %v3906
      %v4195 = vpack.c.bf16 %v3907, %v3907
      %v4196 = vpack.c.bf16 %v3908, %v3908
      %v4197 = vpack.c.bf16 %v3909, %v3909
      %v4198 = vpack.c.bf16 %v3910, %v3910
      %v4199 = vpack.c.bf16 %v3911, %v3911
      %v4200 = vpack.c.bf16 %v3912, %v3912
      %v4201 = vpack.c.bf16 %v3913, %v3913
      %v4202 = vpack.c.bf16 %v3914, %v3914
      %v4203 = vpack.c.bf16 %v3915, %v3915
      %v4204 = vpack.c.bf16 %v3916, %v3916
      %v4205 = vpack.c.bf16 %v3917, %v3917
      %v4206 = vpack.c.bf16 %v3918, %v3918
      %v4207 = vpack.c.bf16 %v3919, %v3919
      %v4208 = vpack.c.bf16 %v3920, %v3920
      %v4209 = vpack.c.bf16 %v3921, %v3921
      %v4210 = vpack.c.bf16 %v3922, %v3922
      %v4211 = vpack.c.bf16 %v3923, %v3923
      %v4212 = vpack.c.bf16 %v3924, %v3924
      %v4213 = vpack.c.bf16 %v3925, %v3925
      %v4214 = vpack.c.bf16 %v3926, %v3926
      %v4215 = vpack.c.bf16 %v3927, %v3927
      %v4216 = vpack.c.bf16 %v3928, %v3928
      %v4217 = vpack.c.bf16 %v3929, %v3929
      %v4218 = vpack.c.bf16 %v3930, %v3930
      %v4219 = vpack.c.bf16 %v3931, %v3931
      %v4220 = vpack.c.bf16 %v3932, %v3932
      %v4221 = vpack.c.bf16 %v3933, %v3933
      %v4222 = vpack.c.bf16 %v3934, %v3934
      %v4223 = vpack.c.bf16 %v3935, %v3935
      %v4224 = vpack.c.bf16 %v3936, %v3936
      %v4225 = vpack.c.bf16 %v3937, %v3937
      %v4226 = vpack.c.bf16 %v3938, %v3938
      %v4227 = vpack.c.bf16 %v3939, %v3939
      %v4228 = vpack.c.bf16 %v3940, %v3940
      %v4229 = vpack.c.bf16 %v3941, %v3941
      %v4230 = vpack.c.bf16 %v3942, %v3942
      %v4231 = vpack.c.bf16 %v3943, %v3943
      %v4232 = vpack.c.bf16 %v3944, %v3944
      %v4233 = vpack.c.bf16 %v3945, %v3945
      %v4234 = vpack.c.bf16 %v3946, %v3946
      %v4235 = vpack.c.bf16 %v3947, %v3947
      %v4236 = vpack.c.bf16 %v3948, %v3948
      %v4237 = vpack.c.bf16 %v3949, %v3949
      %v4238 = vpack.c.bf16 %v3950, %v3950
      %v4239 = vpack.c.bf16 %v3951, %v3951
      %v4240 = vpack.c.bf16 %v3952, %v3952
      %v4241 = vpack.c.bf16 %v3953, %v3953
      %v4242 = vpack.c.bf16 %v3954, %v3954
      %v4243 = vpack.c.bf16 %v3955, %v3955
      %v4244 = vpack.c.bf16 %v3956, %v3956
      %v4245 = vpack.c.bf16 %v3957, %v3957
      %v4246 = vpack.c.bf16 %v3958, %v3958
      %v4247 = vpack.c.bf16 %v3959, %v3959
      %v4248 = vpack.c.bf16 %v3960, %v3960
      %v4249 = vpack.c.bf16 %v3961, %v3961
      %v4250 = vpack.c.bf16 %v3962, %v3962
      %v4251 = vpack.c.bf16 %v3963, %v3963
      %v4252 = vpack.c.bf16 %v3964, %v3964
      %v4253 = vpack.c.bf16 %v3965, %v3965
      %v4254 = vpack.c.bf16 %v3966, %v3966
      %v4255 = vpack.c.bf16 %v3967, %v3967
      %v4256 = vpack.c.bf16 %v3968, %v3968
      %v4257 = vpack.c.bf16 %v3969, %v3969
      %v4258 = vpack.c.bf16 %v3970, %v3970
      %v4259 = vpack.c.bf16 %v3971, %v3971
      %v4260 = vpack.c.bf16 %v3972, %v3972
      %v4261 = vpack.c.bf16 %v3973, %v3973
      %v4262 = vpack.c.bf16 %v3974, %v3974
      %v4263 = vpack.c.bf16 %v3975, %v3975
      %v4264 = vpack.c.bf16 %v3976, %v3976
      %v4265 = vpack.c.bf16 %v3977, %v3977
      %v4266 = vpack.c.bf16 %v3978, %v3978
      %v4267 = vpack.c.bf16 %v3979, %v3979
      %v4268 = vpack.c.bf16 %v3980, %v3980
      %v4269 = vpack.c.bf16 %v3981, %v3981
      %v4270 = vpack.c.bf16 %v3982, %v3982
      %v4271 = vpack.c.bf16 %v3983, %v3983
      %v4272 = vpack.c.bf16 %v3984, %v3984
      %v4273 = vpack.c.bf16 %v3985, %v3985
      %v4274 = vpack.c.bf16 %v3986, %v3986
      %v4275 = vpack.c.bf16 %v3987, %v3987
      %v4276 = vpack.c.bf16 %v3988, %v3988
      %v4277 = vpack.c.bf16 %v3989, %v3989
      %v4278 = vpack.c.bf16 %v3990, %v3990
      %v4279 = vpack.c.bf16 %v3991, %v3991
      %v4280 = vpack.c.bf16 %v3992, %v3992
      %v4281 = vpack.c.bf16 %v3993, %v3993
      %v4282 = vpack.c.bf16 %v3994, %v3994
      %v4283 = vpack.c.bf16 %v3995, %v3995
      %v4284 = vpack.c.bf16 %v3996, %v3996
      %v4285 = vpack.c.bf16 %v3997, %v3997
      %v4286 = vpack.c.bf16 %v3998, %v3998
      %v4287 = vpack.c.bf16 %v3999, %v3999
      %v4288 = vpack.c.bf16 %v4000, %v4000
      %v4289 = vpack.c.bf16 %v4001, %v4001
      %v4290 = vpack.c.bf16 %v4002, %v4002
      %v4291 = vpack.c.bf16 %v4003, %v4003
      %v4292 = vpack.c.bf16 %v4004, %v4004
      %v4293 = vpack.c.bf16 %v4005, %v4005
      %v4294 = vpack.c.bf16 %v4006, %v4006
      %v4295 = vpack.c.bf16 %v4007, %v4007
      %v4296 = vpack.c.bf16 %v4008, %v4008
      %v4297 = vpack.c.bf16 %v4009, %v4009
      %v4298 = vpack.c.bf16 %v4010, %v4010
      %v4299 = vpack.c.bf16 %v4011, %v4011
      %v4300 = vpack.c.bf16 %v4012, %v4012
      %v4301 = vpack.c.bf16 %v4013, %v4013
      %v4302 = vpack.c.bf16 %v4014, %v4014
      %v4303 = vpack.c.bf16 %v4015, %v4015
      %v4304 = vpack.c.bf16 %v4016, %v4016
      %v4305 = vpack.c.bf16 %v4017, %v4017
      %v4306 = vpack.c.bf16 %v4018, %v4018
      %v4307 = vpack.c.bf16 %v4019, %v4019
      %v4308 = vpack.c.bf16 %v4020, %v4020
      %v4309 = vpack.c.bf16 %v4021, %v4021
      %v4310 = vpack.c.bf16 %v4022, %v4022
      %v4311 = vpack.c.bf16 %v4023, %v4023
      %v4312 = vpack.c.bf16 %v4024, %v4024
      %v4313 = vpack.c.bf16 %v4025, %v4025
      %v4314 = vpack.c.bf16 %v4026, %v4026
      %v4315 = vpack.c.bf16 %v4027, %v4027
      %vm4316 = vcmask 125952
      %4317 = vst.msk [vmem:[%s175] sm:$0xf] %vm4316, %v4028
      %4318 = vst.msk [vmem:[%s175 + $0x4] sm:$0xf] %vm4316, %v4029
      %4319 = vst.msk [vmem:[%s175 + $0x8] sm:$0xf] %vm4316, %v4030
      %4320 = vst.msk [vmem:[%s175 + $0xc] sm:$0xf] %vm4316, %v4031
      %4321 = vst.msk [vmem:[%s175 + $0x10] sm:$0xf] %vm4316, %v4032
      %4322 = vst.msk [vmem:[%s175 + $0x14] sm:$0xf] %vm4316, %v4033
      %4323 = vst.msk [vmem:[%s175 + $0x18] sm:$0xf] %vm4316, %v4034
      %4324 = vst.msk [vmem:[%s175 + $0x1c] sm:$0xf] %vm4316, %v4035
      %4325 = vst.msk [vmem:[%s175 + $0x20] sm:$0xf] %vm4316, %v4036
      %4326 = vst.msk [vmem:[%s175 + $0x24] sm:$0xf] %vm4316, %v4037
      %4327 = vst.msk [vmem:[%s175 + $0x28] sm:$0xf] %vm4316, %v4038
      %4328 = vst.msk [vmem:[%s175 + $0x2c] sm:$0xf] %vm4316, %v4039
      %4329 = vst.msk [vmem:[%s175 + $0x30] sm:$0xf] %vm4316, %v4040
      %4330 = vst.msk [vmem:[%s175 + $0x34] sm:$0xf] %vm4316, %v4041
      %4331 = vst.msk [vmem:[%s175 + $0x38] sm:$0xf] %vm4316, %v4042
      %4332 = vst.msk [vmem:[%s175 + $0x3c] sm:$0xf] %vm4316, %v4043
      %4333 = vst.msk [vmem:[%s175 + $0x40] sm:$0xf] %vm4316, %v4044
      %4334 = vst.msk [vmem:[%s175 + $0x44] sm:$0xf] %vm4316, %v4045
      %4335 = vst.msk [vmem:[%s175 + $0x48] sm:$0xf] %vm4316, %v4046
      %4336 = vst.msk [vmem:[%s175 + $0x4c] sm:$0xf] %vm4316, %v4047
      %4337 = vst.msk [vmem:[%s175 + $0x50] sm:$0xf] %vm4316, %v4048
      %4338 = vst.msk [vmem:[%s175 + $0x54] sm:$0xf] %vm4316, %v4049
      %4339 = vst.msk [vmem:[%s175 + $0x58] sm:$0xf] %vm4316, %v4050
      %4340 = vst.msk [vmem:[%s175 + $0x5c] sm:$0xf] %vm4316, %v4051
      %4341 = vst.msk [vmem:[%s175 + $0x60] sm:$0xf] %vm4316, %v4052
      %4342 = vst.msk [vmem:[%s175 + $0x64] sm:$0xf] %vm4316, %v4053
      %4343 = vst.msk [vmem:[%s175 + $0x68] sm:$0xf] %vm4316, %v4054
      %4344 = vst.msk [vmem:[%s175 + $0x6c] sm:$0xf] %vm4316, %v4055
      %4345 = vst.msk [vmem:[%s175 + $0x70] sm:$0xf] %vm4316, %v4056
      %4346 = vst.msk [vmem:[%s175 + $0x74] sm:$0xf] %vm4316, %v4057
      %4347 = vst.msk [vmem:[%s175 + $0x78] sm:$0xf] %vm4316, %v4058
      %4348 = vst.msk [vmem:[%s175 + $0x7c] sm:$0xf] %vm4316, %v4059
      %4349 = vst.msk [vmem:[%s175 + $0x80] sm:$0xf] %vm4316, %v4060
      %4350 = vst.msk [vmem:[%s175 + $0x84] sm:$0xf] %vm4316, %v4061
      %4351 = vst.msk [vmem:[%s175 + $0x88] sm:$0xf] %vm4316, %v4062
      %4352 = vst.msk [vmem:[%s175 + $0x8c] sm:$0xf] %vm4316, %v4063
      %4353 = vst.msk [vmem:[%s175 + $0x90] sm:$0xf] %vm4316, %v4064
      %4354 = vst.msk [vmem:[%s175 + $0x94] sm:$0xf] %vm4316, %v4065
      %4355 = vst.msk [vmem:[%s175 + $0x98] sm:$0xf] %vm4316, %v4066
      %4356 = vst.msk [vmem:[%s175 + $0x9c] sm:$0xf] %vm4316, %v4067
      %4357 = vst.msk [vmem:[%s175 + $0xa0] sm:$0xf] %vm4316, %v4068
      %4358 = vst.msk [vmem:[%s175 + $0xa4] sm:$0xf] %vm4316, %v4069
      %4359 = vst.msk [vmem:[%s175 + $0xa8] sm:$0xf] %vm4316, %v4070
      %4360 = vst.msk [vmem:[%s175 + $0xac] sm:$0xf] %vm4316, %v4071
      %4361 = vst.msk [vmem:[%s175 + $0xb0] sm:$0xf] %vm4316, %v4072
      %4362 = vst.msk [vmem:[%s175 + $0xb4] sm:$0xf] %vm4316, %v4073
      %4363 = vst.msk [vmem:[%s175 + $0xb8] sm:$0xf] %vm4316, %v4074
      %4364 = vst.msk [vmem:[%s175 + $0xbc] sm:$0xf] %vm4316, %v4075
      %4365 = vst.msk [vmem:[%s175 + $0xc0] sm:$0xf] %vm4316, %v4076
      %4366 = vst.msk [vmem:[%s175 + $0xc4] sm:$0xf] %vm4316, %v4077
      %4367 = vst.msk [vmem:[%s175 + $0xc8] sm:$0xf] %vm4316, %v4078
      %4368 = vst.msk [vmem:[%s175 + $0xcc] sm:$0xf] %vm4316, %v4079
      %4369 = vst.msk [vmem:[%s175 + $0xd0] sm:$0xf] %vm4316, %v4080
      %4370 = vst.msk [vmem:[%s175 + $0xd4] sm:$0xf] %vm4316, %v4081
      %4371 = vst.msk [vmem:[%s175 + $0xd8] sm:$0xf] %vm4316, %v4082
      %4372 = vst.msk [vmem:[%s175 + $0xdc] sm:$0xf] %vm4316, %v4083
      %4373 = vst.msk [vmem:[%s175 + $0xe0] sm:$0xf] %vm4316, %v4084
      %4374 = vst.msk [vmem:[%s175 + $0xe4] sm:$0xf] %vm4316, %v4085
      %4375 = vst.msk [vmem:[%s175 + $0xe8] sm:$0xf] %vm4316, %v4086
      %4376 = vst.msk [vmem:[%s175 + $0xec] sm:$0xf] %vm4316, %v4087
      %4377 = vst.msk [vmem:[%s175 + $0xf0] sm:$0xf] %vm4316, %v4088
      %4378 = vst.msk [vmem:[%s175 + $0xf4] sm:$0xf] %vm4316, %v4089
      %4379 = vst.msk [vmem:[%s175 + $0xf8] sm:$0xf] %vm4316, %v4090
      %4380 = vst.msk [vmem:[%s175 + $0xfc] sm:$0xf] %vm4316, %v4091
      %4381 = vst.msk [vmem:[%s175 + $0x100] sm:$0xf] %vm4316, %v4092
      %4382 = vst.msk [vmem:[%s175 + $0x104] sm:$0xf] %vm4316, %v4093
      %4383 = vst.msk [vmem:[%s175 + $0x108] sm:$0xf] %vm4316, %v4094
      %4384 = vst.msk [vmem:[%s175 + $0x10c] sm:$0xf] %vm4316, %v4095
      %4385 = vst.msk [vmem:[%s175 + $0x110] sm:$0xf] %vm4316, %v4096
      %4386 = vst.msk [vmem:[%s175 + $0x114] sm:$0xf] %vm4316, %v4097
      %4387 = vst.msk [vmem:[%s175 + $0x118] sm:$0xf] %vm4316, %v4098
      %4388 = vst.msk [vmem:[%s175 + $0x11c] sm:$0xf] %vm4316, %v4099
      %4389 = vst.msk [vmem:[%s175 + $0x120] sm:$0xf] %vm4316, %v4100
      %4390 = vst.msk [vmem:[%s175 + $0x124] sm:$0xf] %vm4316, %v4101
      %4391 = vst.msk [vmem:[%s175 + $0x128] sm:$0xf] %vm4316, %v4102
      %4392 = vst.msk [vmem:[%s175 + $0x12c] sm:$0xf] %vm4316, %v4103
      %4393 = vst.msk [vmem:[%s175 + $0x130] sm:$0xf] %vm4316, %v4104
      %4394 = vst.msk [vmem:[%s175 + $0x134] sm:$0xf] %vm4316, %v4105
      %4395 = vst.msk [vmem:[%s175 + $0x138] sm:$0xf] %vm4316, %v4106
      %4396 = vst.msk [vmem:[%s175 + $0x13c] sm:$0xf] %vm4316, %v4107
      %4397 = vst.msk [vmem:[%s175 + $0x140] sm:$0xf] %vm4316, %v4108
      %4398 = vst.msk [vmem:[%s175 + $0x144] sm:$0xf] %vm4316, %v4109
      %4399 = vst.msk [vmem:[%s175 + $0x148] sm:$0xf] %vm4316, %v4110
      %4400 = vst.msk [vmem:[%s175 + $0x14c] sm:$0xf] %vm4316, %v4111
      %4401 = vst.msk [vmem:[%s175 + $0x150] sm:$0xf] %vm4316, %v4112
      %4402 = vst.msk [vmem:[%s175 + $0x154] sm:$0xf] %vm4316, %v4113
      %4403 = vst.msk [vmem:[%s175 + $0x158] sm:$0xf] %vm4316, %v4114
      %4404 = vst.msk [vmem:[%s175 + $0x15c] sm:$0xf] %vm4316, %v4115
      %4405 = vst.msk [vmem:[%s175 + $0x160] sm:$0xf] %vm4316, %v4116
      %4406 = vst.msk [vmem:[%s175 + $0x164] sm:$0xf] %vm4316, %v4117
      %4407 = vst.msk [vmem:[%s175 + $0x168] sm:$0xf] %vm4316, %v4118
      %4408 = vst.msk [vmem:[%s175 + $0x16c] sm:$0xf] %vm4316, %v4119
      %4409 = vst.msk [vmem:[%s175 + $0x170] sm:$0xf] %vm4316, %v4120
      %4410 = vst.msk [vmem:[%s175 + $0x174] sm:$0xf] %vm4316, %v4121
      %4411 = vst.msk [vmem:[%s175 + $0x178] sm:$0xf] %vm4316, %v4122
      %4412 = vst.msk [vmem:[%s175 + $0x17c] sm:$0xf] %vm4316, %v4123
      %4413 = vst.msk [vmem:[%s175 + $0x180] sm:$0xf] %vm4316, %v4124
      %4414 = vst.msk [vmem:[%s175 + $0x184] sm:$0xf] %vm4316, %v4125
      %4415 = vst.msk [vmem:[%s175 + $0x188] sm:$0xf] %vm4316, %v4126
      %4416 = vst.msk [vmem:[%s175 + $0x18c] sm:$0xf] %vm4316, %v4127
      %4417 = vst.msk [vmem:[%s175 + $0x190] sm:$0xf] %vm4316, %v4128
      %4418 = vst.msk [vmem:[%s175 + $0x194] sm:$0xf] %vm4316, %v4129
      %4419 = vst.msk [vmem:[%s175 + $0x198] sm:$0xf] %vm4316, %v4130
      %4420 = vst.msk [vmem:[%s175 + $0x19c] sm:$0xf] %vm4316, %v4131
      %4421 = vst.msk [vmem:[%s175 + $0x1a0] sm:$0xf] %vm4316, %v4132
      %4422 = vst.msk [vmem:[%s175 + $0x1a4] sm:$0xf] %vm4316, %v4133
      %4423 = vst.msk [vmem:[%s175 + $0x1a8] sm:$0xf] %vm4316, %v4134
      %4424 = vst.msk [vmem:[%s175 + $0x1ac] sm:$0xf] %vm4316, %v4135
      %4425 = vst.msk [vmem:[%s175 + $0x1b0] sm:$0xf] %vm4316, %v4136
      %4426 = vst.msk [vmem:[%s175 + $0x1b4] sm:$0xf] %vm4316, %v4137
      %4427 = vst.msk [vmem:[%s175 + $0x1b8] sm:$0xf] %vm4316, %v4138
      %4428 = vst.msk [vmem:[%s175 + $0x1bc] sm:$0xf] %vm4316, %v4139
      %4429 = vst.msk [vmem:[%s175 + $0x1c0] sm:$0xf] %vm4316, %v4140
      %4430 = vst.msk [vmem:[%s175 + $0x1c4] sm:$0xf] %vm4316, %v4141
      %4431 = vst.msk [vmem:[%s175 + $0x1c8] sm:$0xf] %vm4316, %v4142
      %4432 = vst.msk [vmem:[%s175 + $0x1cc] sm:$0xf] %vm4316, %v4143
      %4433 = vst.msk [vmem:[%s175 + $0x1d0] sm:$0xf] %vm4316, %v4144
      %4434 = vst.msk [vmem:[%s175 + $0x1d4] sm:$0xf] %vm4316, %v4145
      %4435 = vst.msk [vmem:[%s175 + $0x1d8] sm:$0xf] %vm4316, %v4146
      %4436 = vst.msk [vmem:[%s175 + $0x1dc] sm:$0xf] %vm4316, %v4147
      %4437 = vst.msk [vmem:[%s175 + $0x1e0] sm:$0xf] %vm4316, %v4148
      %4438 = vst.msk [vmem:[%s175 + $0x1e4] sm:$0xf] %vm4316, %v4149
      %4439 = vst.msk [vmem:[%s175 + $0x1e8] sm:$0xf] %vm4316, %v4150
      %4440 = vst.msk [vmem:[%s175 + $0x1ec] sm:$0xf] %vm4316, %v4151
      %4441 = vst.msk [vmem:[%s175 + $0x1f0] sm:$0xf] %vm4316, %v4152
      %4442 = vst.msk [vmem:[%s175 + $0x1f4] sm:$0xf] %vm4316, %v4153
      %4443 = vst.msk [vmem:[%s175 + $0x1f8] sm:$0xf] %vm4316, %v4154
      %4444 = vst.msk [vmem:[%s175 + $0x1fc] sm:$0xf] %vm4316, %v4155
      %4445 = vst.msk [vmem:[%s175 + $0x200] sm:$0xf] %vm4316, %v4156
      %4446 = vst.msk [vmem:[%s175 + $0x204] sm:$0xf] %vm4316, %v4157
      %4447 = vst.msk [vmem:[%s175 + $0x208] sm:$0xf] %vm4316, %v4158
      %4448 = vst.msk [vmem:[%s175 + $0x20c] sm:$0xf] %vm4316, %v4159
      %4449 = vst.msk [vmem:[%s175 + $0x210] sm:$0xf] %vm4316, %v4160
      %4450 = vst.msk [vmem:[%s175 + $0x214] sm:$0xf] %vm4316, %v4161
      %4451 = vst.msk [vmem:[%s175 + $0x218] sm:$0xf] %vm4316, %v4162
      %4452 = vst.msk [vmem:[%s175 + $0x21c] sm:$0xf] %vm4316, %v4163
      %4453 = vst.msk [vmem:[%s175 + $0x220] sm:$0xf] %vm4316, %v4164
      %4454 = vst.msk [vmem:[%s175 + $0x224] sm:$0xf] %vm4316, %v4165
      %4455 = vst.msk [vmem:[%s175 + $0x228] sm:$0xf] %vm4316, %v4166
      %4456 = vst.msk [vmem:[%s175 + $0x22c] sm:$0xf] %vm4316, %v4167
      %4457 = vst.msk [vmem:[%s175 + $0x230] sm:$0xf] %vm4316, %v4168
      %4458 = vst.msk [vmem:[%s175 + $0x234] sm:$0xf] %vm4316, %v4169
      %4459 = vst.msk [vmem:[%s175 + $0x238] sm:$0xf] %vm4316, %v4170
      %4460 = vst.msk [vmem:[%s175 + $0x23c] sm:$0xf] %vm4316, %v4171
      %4461 = vst.msk [vmem:[%s175 + $0x240] sm:$0xf] %vm4316, %v4172
      %4462 = vst.msk [vmem:[%s175 + $0x244] sm:$0xf] %vm4316, %v4173
      %4463 = vst.msk [vmem:[%s175 + $0x248] sm:$0xf] %vm4316, %v4174
      %4464 = vst.msk [vmem:[%s175 + $0x24c] sm:$0xf] %vm4316, %v4175
      %4465 = vst.msk [vmem:[%s175 + $0x250] sm:$0xf] %vm4316, %v4176
      %4466 = vst.msk [vmem:[%s175 + $0x254] sm:$0xf] %vm4316, %v4177
      %4467 = vst.msk [vmem:[%s175 + $0x258] sm:$0xf] %vm4316, %v4178
      %4468 = vst.msk [vmem:[%s175 + $0x25c] sm:$0xf] %vm4316, %v4179
      %4469 = vst.msk [vmem:[%s175 + $0x260] sm:$0xf] %vm4316, %v4180
      %4470 = vst.msk [vmem:[%s175 + $0x264] sm:$0xf] %vm4316, %v4181
      %4471 = vst.msk [vmem:[%s175 + $0x268] sm:$0xf] %vm4316, %v4182
      %4472 = vst.msk [vmem:[%s175 + $0x26c] sm:$0xf] %vm4316, %v4183
      %4473 = vst.msk [vmem:[%s175 + $0x270] sm:$0xf] %vm4316, %v4184
      %4474 = vst.msk [vmem:[%s175 + $0x274] sm:$0xf] %vm4316, %v4185
      %4475 = vst.msk [vmem:[%s175 + $0x278] sm:$0xf] %vm4316, %v4186
      %4476 = vst.msk [vmem:[%s175 + $0x27c] sm:$0xf] %vm4316, %v4187
      %4477 = vst.msk [vmem:[%s175 + $0x280] sm:$0xf] %vm4316, %v4188
      %4478 = vst.msk [vmem:[%s175 + $0x284] sm:$0xf] %vm4316, %v4189
      %4479 = vst.msk [vmem:[%s175 + $0x288] sm:$0xf] %vm4316, %v4190
      %4480 = vst.msk [vmem:[%s175 + $0x28c] sm:$0xf] %vm4316, %v4191
      %4481 = vst.msk [vmem:[%s175 + $0x290] sm:$0xf] %vm4316, %v4192
      %4482 = vst.msk [vmem:[%s175 + $0x294] sm:$0xf] %vm4316, %v4193
      %4483 = vst.msk [vmem:[%s175 + $0x298] sm:$0xf] %vm4316, %v4194
      %4484 = vst.msk [vmem:[%s175 + $0x29c] sm:$0xf] %vm4316, %v4195
      %4485 = vst.msk [vmem:[%s175 + $0x2a0] sm:$0xf] %vm4316, %v4196
      %4486 = vst.msk [vmem:[%s175 + $0x2a4] sm:$0xf] %vm4316, %v4197
      %4487 = vst.msk [vmem:[%s175 + $0x2a8] sm:$0xf] %vm4316, %v4198
      %4488 = vst.msk [vmem:[%s175 + $0x2ac] sm:$0xf] %vm4316, %v4199
      %4489 = vst.msk [vmem:[%s175 + $0x2b0] sm:$0xf] %vm4316, %v4200
      %4490 = vst.msk [vmem:[%s175 + $0x2b4] sm:$0xf] %vm4316, %v4201
      %4491 = vst.msk [vmem:[%s175 + $0x2b8] sm:$0xf] %vm4316, %v4202
      %4492 = vst.msk [vmem:[%s175 + $0x2bc] sm:$0xf] %vm4316, %v4203
      %4493 = vst.msk [vmem:[%s175 + $0x2c0] sm:$0xf] %vm4316, %v4204
      %4494 = vst.msk [vmem:[%s175 + $0x2c4] sm:$0xf] %vm4316, %v4205
      %4495 = vst.msk [vmem:[%s175 + $0x2c8] sm:$0xf] %vm4316, %v4206
      %4496 = vst.msk [vmem:[%s175 + $0x2cc] sm:$0xf] %vm4316, %v4207
      %4497 = vst.msk [vmem:[%s175 + $0x2d0] sm:$0xf] %vm4316, %v4208
      %4498 = vst.msk [vmem:[%s175 + $0x2d4] sm:$0xf] %vm4316, %v4209
      %4499 = vst.msk [vmem:[%s175 + $0x2d8] sm:$0xf] %vm4316, %v4210
      %4500 = vst.msk [vmem:[%s175 + $0x2dc] sm:$0xf] %vm4316, %v4211
      %4501 = vst.msk [vmem:[%s175 + $0x2e0] sm:$0xf] %vm4316, %v4212
      %4502 = vst.msk [vmem:[%s175 + $0x2e4] sm:$0xf] %vm4316, %v4213
      %4503 = vst.msk [vmem:[%s175 + $0x2e8] sm:$0xf] %vm4316, %v4214
      %4504 = vst.msk [vmem:[%s175 + $0x2ec] sm:$0xf] %vm4316, %v4215
      %4505 = vst.msk [vmem:[%s175 + $0x2f0] sm:$0xf] %vm4316, %v4216
      %4506 = vst.msk [vmem:[%s175 + $0x2f4] sm:$0xf] %vm4316, %v4217
      %4507 = vst.msk [vmem:[%s175 + $0x2f8] sm:$0xf] %vm4316, %v4218
      %4508 = vst.msk [vmem:[%s175 + $0x2fc] sm:$0xf] %vm4316, %v4219
      %4509 = vst.msk [vmem:[%s175 + $0x300] sm:$0xf] %vm4316, %v4220
      %4510 = vst.msk [vmem:[%s175 + $0x304] sm:$0xf] %vm4316, %v4221
      %4511 = vst.msk [vmem:[%s175 + $0x308] sm:$0xf] %vm4316, %v4222
      %4512 = vst.msk [vmem:[%s175 + $0x30c] sm:$0xf] %vm4316, %v4223
      %4513 = vst.msk [vmem:[%s175 + $0x310] sm:$0xf] %vm4316, %v4224
      %4514 = vst.msk [vmem:[%s175 + $0x314] sm:$0xf] %vm4316, %v4225
      %4515 = vst.msk [vmem:[%s175 + $0x318] sm:$0xf] %vm4316, %v4226
      %4516 = vst.msk [vmem:[%s175 + $0x31c] sm:$0xf] %vm4316, %v4227
      %4517 = vst.msk [vmem:[%s175 + $0x320] sm:$0xf] %vm4316, %v4228
      %4518 = vst.msk [vmem:[%s175 + $0x324] sm:$0xf] %vm4316, %v4229
      %4519 = vst.msk [vmem:[%s175 + $0x328] sm:$0xf] %vm4316, %v4230
      %4520 = vst.msk [vmem:[%s175 + $0x32c] sm:$0xf] %vm4316, %v4231
      %4521 = vst.msk [vmem:[%s175 + $0x330] sm:$0xf] %vm4316, %v4232
      %4522 = vst.msk [vmem:[%s175 + $0x334] sm:$0xf] %vm4316, %v4233
      %4523 = vst.msk [vmem:[%s175 + $0x338] sm:$0xf] %vm4316, %v4234
      %4524 = vst.msk [vmem:[%s175 + $0x33c] sm:$0xf] %vm4316, %v4235
      %4525 = vst.msk [vmem:[%s175 + $0x340] sm:$0xf] %vm4316, %v4236
      %4526 = vst.msk [vmem:[%s175 + $0x344] sm:$0xf] %vm4316, %v4237
      %4527 = vst.msk [vmem:[%s175 + $0x348] sm:$0xf] %vm4316, %v4238
      %4528 = vst.msk [vmem:[%s175 + $0x34c] sm:$0xf] %vm4316, %v4239
      %4529 = vst.msk [vmem:[%s175 + $0x350] sm:$0xf] %vm4316, %v4240
      %4530 = vst.msk [vmem:[%s175 + $0x354] sm:$0xf] %vm4316, %v4241
      %4531 = vst.msk [vmem:[%s175 + $0x358] sm:$0xf] %vm4316, %v4242
      %4532 = vst.msk [vmem:[%s175 + $0x35c] sm:$0xf] %vm4316, %v4243
      %4533 = vst.msk [vmem:[%s175 + $0x360] sm:$0xf] %vm4316, %v4244
      %4534 = vst.msk [vmem:[%s175 + $0x364] sm:$0xf] %vm4316, %v4245
      %4535 = vst.msk [vmem:[%s175 + $0x368] sm:$0xf] %vm4316, %v4246
      %4536 = vst.msk [vmem:[%s175 + $0x36c] sm:$0xf] %vm4316, %v4247
      %4537 = vst.msk [vmem:[%s175 + $0x370] sm:$0xf] %vm4316, %v4248
      %4538 = vst.msk [vmem:[%s175 + $0x374] sm:$0xf] %vm4316, %v4249
      %4539 = vst.msk [vmem:[%s175 + $0x378] sm:$0xf] %vm4316, %v4250
      %4540 = vst.msk [vmem:[%s175 + $0x37c] sm:$0xf] %vm4316, %v4251
      %4541 = vst.msk [vmem:[%s175 + $0x380] sm:$0xf] %vm4316, %v4252
      %4542 = vst.msk [vmem:[%s175 + $0x384] sm:$0xf] %vm4316, %v4253
      %4543 = vst.msk [vmem:[%s175 + $0x388] sm:$0xf] %vm4316, %v4254
      %4544 = vst.msk [vmem:[%s175 + $0x38c] sm:$0xf] %vm4316, %v4255
      %4545 = vst.msk [vmem:[%s175 + $0x390] sm:$0xf] %vm4316, %v4256
      %4546 = vst.msk [vmem:[%s175 + $0x394] sm:$0xf] %vm4316, %v4257
      %4547 = vst.msk [vmem:[%s175 + $0x398] sm:$0xf] %vm4316, %v4258
      %4548 = vst.msk [vmem:[%s175 + $0x39c] sm:$0xf] %vm4316, %v4259
      %4549 = vst.msk [vmem:[%s175 + $0x3a0] sm:$0xf] %vm4316, %v4260
      %4550 = vst.msk [vmem:[%s175 + $0x3a4] sm:$0xf] %vm4316, %v4261
      %4551 = vst.msk [vmem:[%s175 + $0x3a8] sm:$0xf] %vm4316, %v4262
      %4552 = vst.msk [vmem:[%s175 + $0x3ac] sm:$0xf] %vm4316, %v4263
      %4553 = vst.msk [vmem:[%s175 + $0x3b0] sm:$0xf] %vm4316, %v4264
      %4554 = vst.msk [vmem:[%s175 + $0x3b4] sm:$0xf] %vm4316, %v4265
      %4555 = vst.msk [vmem:[%s175 + $0x3b8] sm:$0xf] %vm4316, %v4266
      %4556 = vst.msk [vmem:[%s175 + $0x3bc] sm:$0xf] %vm4316, %v4267
      %4557 = vst.msk [vmem:[%s175 + $0x3c0] sm:$0xf] %vm4316, %v4268
      %4558 = vst.msk [vmem:[%s175 + $0x3c4] sm:$0xf] %vm4316, %v4269
      %4559 = vst.msk [vmem:[%s175 + $0x3c8] sm:$0xf] %vm4316, %v4270
      %4560 = vst.msk [vmem:[%s175 + $0x3cc] sm:$0xf] %vm4316, %v4271
      %4561 = vst.msk [vmem:[%s175 + $0x3d0] sm:$0xf] %vm4316, %v4272
      %4562 = vst.msk [vmem:[%s175 + $0x3d4] sm:$0xf] %vm4316, %v4273
      %4563 = vst.msk [vmem:[%s175 + $0x3d8] sm:$0xf] %vm4316, %v4274
      %4564 = vst.msk [vmem:[%s175 + $0x3dc] sm:$0xf] %vm4316, %v4275
      %4565 = vst.msk [vmem:[%s175 + $0x3e0] sm:$0xf] %vm4316, %v4276
      %4566 = vst.msk [vmem:[%s175 + $0x3e4] sm:$0xf] %vm4316, %v4277
      %4567 = vst.msk [vmem:[%s175 + $0x3e8] sm:$0xf] %vm4316, %v4278
      %4568 = vst.msk [vmem:[%s175 + $0x3ec] sm:$0xf] %vm4316, %v4279
      %4569 = vst.msk [vmem:[%s175 + $0x3f0] sm:$0xf] %vm4316, %v4280
      %4570 = vst.msk [vmem:[%s175 + $0x3f4] sm:$0xf] %vm4316, %v4281
      %4571 = vst.msk [vmem:[%s175 + $0x3f8] sm:$0xf] %vm4316, %v4282
      %4572 = vst.msk [vmem:[%s175 + $0x3fc] sm:$0xf] %vm4316, %v4283
      %4573 = vst.msk [vmem:[%s175 + $0x400] sm:$0xf] %vm4316, %v4284
      %4574 = vst.msk [vmem:[%s175 + $0x404] sm:$0xf] %vm4316, %v4285
      %4575 = vst.msk [vmem:[%s175 + $0x408] sm:$0xf] %vm4316, %v4286
      %4576 = vst.msk [vmem:[%s175 + $0x40c] sm:$0xf] %vm4316, %v4287
      %4577 = vst.msk [vmem:[%s175 + $0x410] sm:$0xf] %vm4316, %v4288
      %4578 = vst.msk [vmem:[%s175 + $0x414] sm:$0xf] %vm4316, %v4289
      %4579 = vst.msk [vmem:[%s175 + $0x418] sm:$0xf] %vm4316, %v4290
      %4580 = vst.msk [vmem:[%s175 + $0x41c] sm:$0xf] %vm4316, %v4291
      %4581 = vst.msk [vmem:[%s175 + $0x420] sm:$0xf] %vm4316, %v4292
      %4582 = vst.msk [vmem:[%s175 + $0x424] sm:$0xf] %vm4316, %v4293
      %4583 = vst.msk [vmem:[%s175 + $0x428] sm:$0xf] %vm4316, %v4294
      %4584 = vst.msk [vmem:[%s175 + $0x42c] sm:$0xf] %vm4316, %v4295
      %4585 = vst.msk [vmem:[%s175 + $0x430] sm:$0xf] %vm4316, %v4296
      %4586 = vst.msk [vmem:[%s175 + $0x434] sm:$0xf] %vm4316, %v4297
      %4587 = vst.msk [vmem:[%s175 + $0x438] sm:$0xf] %vm4316, %v4298
      %4588 = vst.msk [vmem:[%s175 + $0x43c] sm:$0xf] %vm4316, %v4299
      %4589 = vst.msk [vmem:[%s175 + $0x440] sm:$0xf] %vm4316, %v4300
      %4590 = vst.msk [vmem:[%s175 + $0x444] sm:$0xf] %vm4316, %v4301
      %4591 = vst.msk [vmem:[%s175 + $0x448] sm:$0xf] %vm4316, %v4302
      %4592 = vst.msk [vmem:[%s175 + $0x44c] sm:$0xf] %vm4316, %v4303
      %4593 = vst.msk [vmem:[%s175 + $0x450] sm:$0xf] %vm4316, %v4304
      %4594 = vst.msk [vmem:[%s175 + $0x454] sm:$0xf] %vm4316, %v4305
      %4595 = vst.msk [vmem:[%s175 + $0x458] sm:$0xf] %vm4316, %v4306
      %4596 = vst.msk [vmem:[%s175 + $0x45c] sm:$0xf] %vm4316, %v4307
      %4597 = vst.msk [vmem:[%s175 + $0x460] sm:$0xf] %vm4316, %v4308
      %4598 = vst.msk [vmem:[%s175 + $0x464] sm:$0xf] %vm4316, %v4309
      %4599 = vst.msk [vmem:[%s175 + $0x468] sm:$0xf] %vm4316, %v4310
      %4600 = vst.msk [vmem:[%s175 + $0x46c] sm:$0xf] %vm4316, %v4311
      %4601 = vst.msk [vmem:[%s175 + $0x470] sm:$0xf] %vm4316, %v4312
      %4602 = vst.msk [vmem:[%s175 + $0x474] sm:$0xf] %vm4316, %v4313
      %4603 = vst.msk [vmem:[%s175 + $0x478] sm:$0xf] %vm4316, %v4314
      %4604 = vst.msk [vmem:[%s175 + $0x47c] sm:$0xf] %vm4316, %v4315
      %s4605 = smul.u32 288, %s14
      %p4606 = scmp.lt.s32.totalorder %s4605, 575
      %s4607 = scalar_select %p4606, %s4605, 575
      %s4608 = smul.addr %s4607, 4
      %s4609 = scalar_lea.vmem %s3, %s4608
      // Predicated region
      $region33: #{tpu_custom_call.1} parent=31 // pred_check
        %p4610 = pneg %p100
      $region34: #{tpu_custom_call.1} parent=31 // pred_check_branch
        %4612 = sbr.rel (%p4610) target = $region36
      $region35: #{tpu_custom_call.1} parent=31 // pred_region
        %s4613 = smul.u32 288, %s14
      $region36: #{tpu_custom_call.1} parent=31 // pred_fallthru
        _
    $region32: #{tpu_custom_call.1} parent=5 // pred_fallthru
      _
    %p4614 = scmp.le.s32.totalorder 2, %s9
    // Predicated region
    $region37: #{tpu_custom_call.1} parent=5 // pred_check
      %p4615 = pneg %p4614
    $region38: #{tpu_custom_call.1} parent=5 // pred_check_branch
      %4617 = sbr.rel (%p4615) target = $region40
    $region39: #{tpu_custom_call.1} parent=5 // pred_region
      %s4618 = ssub.s32 %s9, 2
      // Predicated region
      $region41: #{tpu_custom_call.1} parent=39 // pred_check
        %p4619 = pneg %p106
      $region42: #{tpu_custom_call.1} parent=39 // pred_check_branch
        %4621 = sbr.rel (%p4619) target = $region44
      $region43: #{tpu_custom_call.1} parent=39 // pred_region
        %s4622 = smul.u32 288, %s15
        %p4623 = scmp.lt.s32.totalorder %s4622, 575
        %s4624 = scalar_select %p4623, %s4622, 575
        %s4625 = smul.addr %s4624, 4
        %s4626 = scalar_lea.vmem %s3, %s4625
      $region44: #{tpu_custom_call.1} parent=39 // pred_fallthru
        _
    $region40: #{tpu_custom_call.1} parent=5 // pred_fallthru
      _
  $region6: #{tpu_custom_call.1} parent=0 // loop_footer
    %s13 = sadd.s32 1, %s9
  $region7: #{tpu_custom_call.1} parent=0 // loop_footer_branch
    %8 = sbr.rel target = $region3
  $region8: #{tpu_custom_call.1} parent=0 // loop_exit
    _

</llo_original>
